<compile_context>
chip_gen: v7x
topology: tpu7x:2x2x1
jax: 0.10.0
libtpu: 0.0.40
codegen_flags: <defaults>
</compile_context>

<pallas_src>
import math
from functools import partial

import jax
import jax.numpy as jnp
from jax.experimental import pallas as pl
from jax.experimental.pallas import tpu as pltpu

# ----------------------------- KAN / spline setup -----------------------------

GRID_G = 3                      # number of grid intervals (pykan `grid`)
SPLINE_K = 3                    # spline order (pykan `k`)
NUM_BASIS = GRID_G + SPLINE_K   # 6 cubic basis functions
N_FUNCS = NUM_BASIS + 1         # + the silu "base" branch
GRID_LO, GRID_HI = -1.0, 1.0

_H = (GRID_HI - GRID_LO) / GRID_G                    # knot spacing (uniform!)
KNOT_T0 = GRID_LO - SPLINE_K * _H                    # first extended knot (= -3)
INV_H = 1.0 / _H                                     # = 1.5
N_INTERVALS = GRID_G + 2 * SPLINE_K                  # 9 degree-0 intervals

# Extended knot vector (Cox-de Boor reference only).
KNOTS = [GRID_LO + (i - SPLINE_K) * _H for i in range(GRID_G + 2 * SPLINE_K + 1)]

LANE = 128


def _round_up(n, m):
    return (n + m - 1) // m * m


def _bspline_bases_ref(x):
    """Cox-de Boor recursion (pykan B_batch semantics). Reference only."""
    t = KNOTS
    n0 = len(t) - 1
    bases = [((x >= t[i]) & (x < t[i + 1])).astype(jnp.float32) for i in range(n0)]
    for p in range(1, SPLINE_K + 1):
        new = []
        for i in range(n0 - p):
            left = (x - t[i]) / (t[i + p] - t[i]) * bases[i]
            right = (t[i + p + 1] - x) / (t[i + p + 1] - t[i + 1]) * bases[i + 1]
            new.append(left + right)
        bases = new
    assert len(bases) == NUM_BASIS
    return bases


# --------------------------- TPU-generation heuristics -------------------------

def _device_kind():
    try:
        return jax.devices()[0].device_kind.lower()
    except Exception:
        return ""


def _has_bf16_vpu():
    """v6e / v7x have a bf16 VALU; v2-v5 do not (keep f32 there)."""
    kind = _device_kind()
    if not kind or "tpu" not in kind:
        return False
    return not any(tag in kind for tag in ("v2", "v3", "v4", "v5"))


def _tpu_flavor():
    """(#TensorCores fed by a 'parallel' grid axis, scoped VMEM limit bytes)."""
    kind = _device_kind()
    two_core = any(tag in kind for tag in ("7x", "v4", "v5p"))   # megacore parts
    # v7x has only 64 MiB VMEM per core -> keep the scoped window conservative;
    # v5e/v6e (128 MiB) can take a bigger one.
    vmem = (32 if "7" in kind else 64) * 1024 * 1024
    return (2 if two_core else 1), vmem


# ------------------------------- Pallas kernel --------------------------------

def _kan_rows_kernel(x_ref, w_ref, b_ref, o_ref, *, use_bf16_vpu):
    """One row tile:  o = sum_f f(x) @ W_f + bias   (7 accumulated MXU dots).

    x_ref : (TR, D)              im2col patch rows (f32)
    w_ref : (N_FUNCS*DP, CP)     packed weights, bf16 (pad rows are zero)
    b_ref : (1, CP)              output bias (f32, Cout padded to CP)
    o_ref : (TR, CP)             f32 output tile (lane-dense, CP multiple of 128)
    """
    x = x_ref[...]                                   # (TR, D) f32
    tr, d = x.shape
    dp = w_ref.shape[0] // N_FUNCS                   # per-function block width

    # Widen to the lane-aligned block width; pad lanes hit zero weight rows,
    # so their values only need to be finite (zeros -> all contributions 0).
    if dp > d:
        xp = jnp.concatenate([x, jnp.zeros((tr, dp - d), jnp.float32)], axis=-1)
    else:
        xp = x

    # ---- base branch: silu (1 VPU mul + EUP sigmoid), f32, bf16 into the MXU.
    base = (xp * jax.nn.sigmoid(xp)).astype(jnp.bfloat16)
    acc = jnp.dot(base, w_ref[0:dp, :], preferred_element_type=jnp.float32)

    # ---- spline branch: uniform-knot closed-form cubic B-splines.
    # For x in [t_j, t_{j+1}) with local u:  B_j = p0, B_{j-1} = p1, B_{j-2} = p2,
    # B_{j-3} = p3, all others 0; j outside [0, 8] (x outside [-3, 3)) -> 0,
    # matching the half-open Cox-de Boor reference.
    # Interval classification stays in f32 (exact); polynomial + select math may
    # run in bf16 on parts with a bf16 VPU.
    u_all = (xp - KNOT_T0) * INV_H
    j = jnp.floor(u_all)                             # f32 interval id
    cdt = jnp.bfloat16 if use_bf16_vpu else jnp.float32
    u = (u_all - j).astype(cdt)

    u2 = u * u
    u3 = u2 * u
    q = 1.0 - u
    c6 = 1.0 / 6.0
    p0 = u3 * c6                                             # B_j
    p1 = ((u * (-0.5) + 0.5) * u + 0.5) * u + c6             # (-3u^3+3u^2+3u+1)/6
    p3 = (q * q) * q * c6                                    # B_{j-3}
    p2 = 1.0 - p0 - p1 - p3                                  # partition of unity
    zero = jnp.zeros_like(p0)

    # Shared interval masks: computed ONCE, reused by every basis (9 compares).
    eq = [j == float(k) for k in range(N_INTERVALS)]

    for m in range(NUM_BASIS):
        bm = jnp.where(eq[m], p0,
             jnp.where(eq[m + 1], p1,
             jnp.where(eq[m + 2], p2,
             jnp.where(eq[m + 3], p3, zero))))
        off = (m + 1) * dp
        acc = acc + jnp.dot(bm.astype(jnp.bfloat16), w_ref[off:off + dp, :],
                            preferred_element_type=jnp.float32)

    o_ref[...] = acc + b_ref[...]


def _pick_tile_rows(R, n_cores, max_tile=1024):
    """Single core: one big tile.  Megacore: an EVEN number of grid steps >= 2."""
    r8 = _round_up(max(R, 8), 8)
    if n_cores <= 1:
        return min(max_tile, r8)
    steps = max(2, 2 * pl.cdiv(R, 2 * max_tile))       # even step count
    tile = _round_up(pl.cdiv(R, steps), 8)
    return max(8, min(max_tile, tile))


def kan_dense_pallas(patches, w_cat, bias_pad, *, use_bf16_vpu=None):
    """Apply the fused KAN layer to every row of `patches` (R, D) -> (R, CP)."""
    R, D = patches.shape
    KD, CP = w_cat.shape
    assert KD % N_FUNCS == 0 and CP % LANE == 0

    if use_bf16_vpu is None:
        use_bf16_vpu = _has_bf16_vpu()
    n_cores, vmem_limit = _tpu_flavor()
    tile_rows = _pick_tile_rows(R, n_cores)
    grid = (pl.cdiv(R, tile_rows),)          # boundary tile is clipped by Pallas

    def _const_map(i):
        return (0, 0)

    def _resident_spec(shape):
        # Grid-invariant operands: fetched once -> single-buffer them so the
        # default double-buffer copy does not eat VMEM at production sizes.
        try:
            return pl.BlockSpec(shape, _const_map, pipeline_mode=pl.Buffered(1))
        except Exception:                      # older jax without pipeline_mode
            return pl.BlockSpec(shape, _const_map)

    return pl.pallas_call(
        partial(_kan_rows_kernel, use_bf16_vpu=use_bf16_vpu),
        out_shape=jax.ShapeDtypeStruct((R, CP), jnp.float32),
        grid_spec=pltpu.PrefetchScalarGridSpec(
            num_scalar_prefetch=0,
            grid=grid,
            in_specs=[
                pl.BlockSpec((tile_rows, D), lambda i: (i, 0)),
                _resident_spec((KD, CP)),
                _resident_spec((1, CP)),
            ],
            out_specs=pl.BlockSpec((tile_rows, CP), lambda i: (i, 0)),
        ),
        compiler_params=pltpu.CompilerParams(
            dimension_semantics=("parallel",),
            vmem_limit_bytes=vmem_limit,
        ),
    )(patches, w_cat, bias_pad)


# ------------------------------ kanConv2d wrapper ------------------------------

def _im2col(x, K):
    """NCHW valid-conv patches, flattened in PyTorch (C, ki, kj) order."""
    B, C, H, W = x.shape
    OH, OW = H - K + 1, W - K + 1
    cols = jnp.stack(
        [x[:, :, ki:ki + OH, kj:kj + OW] for ki in range(K) for kj in range(K)],
        axis=-1,
    )                                                   # (B, C, OH, OW, K*K)
    cols = jnp.transpose(cols, (0, 2, 3, 1, 4))         # (B, OH, OW, C, K*K)
    return cols.reshape(B * OH * OW, C * K * K), (B, OH, OW)


def _pack_weights(w_base, w_sp, bias):
    """Pack [base | spline_0..5] weights into one lane-padded bf16 matrix."""
    D, Cout = w_base.shape
    DP = _round_up(D, LANE)
    CP = _round_up(Cout, LANE)
    w_cat = jnp.zeros((N_FUNCS * DP, CP), jnp.float32)
    w_cat = w_cat.at[:D, :Cout].set(w_base)
    for m in range(NUM_BASIS):
        off = (m + 1) * DP
        w_cat = w_cat.at[off:off + D, :Cout].set(w_sp[m])
    b_pad = jnp.zeros((1, CP), jnp.float32).at[:, :Cout].set(bias)
    return w_cat.astype(jnp.bfloat16), b_pad


def kan_conv2d(x, params, kernel_size):
    """Forward pass of kanConv2d. x: (B, Cin, H, W) f32 -> (B, Cout, OH, OW)."""
    w_base, w_sp, bias = params
    Cout = w_base.shape[1]
    patches, (B, OH, OW) = _im2col(x, kernel_size)
    w_cat, b_pad = _pack_weights(w_base, w_sp, bias)
    # Kept f32 to match the PyTorch module's output dtype; the slice/reshape/
    # transpose below fuses into a single XLA copy.
    rows = kan_dense_pallas(patches, w_cat, b_pad)[:, :Cout]   # (R, Cout)
    out = rows.reshape(B, OH, OW, Cout)
    return jnp.transpose(out, (0, 3, 1, 2))                    # NCHW, like torch


def init_kan_conv2d_params(key, in_channels, out_channels, kernel_size):
    D = in_channels * kernel_size * kernel_size
    k1, k2, k3 = jax.random.split(key, 3)
    # scale_base (base-branch weight), deterministic synthetic init.
    w_base = (jax.random.normal(k1, (D, out_channels), jnp.float32) * 0.1
              + 1.0 / math.sqrt(D))
    # spline coefficients folded with scale_sp, laid out (M, D, Cout).
    w_sp = jax.random.normal(k2, (NUM_BASIS, D, out_channels), jnp.float32) * 0.1
    bias = jax.random.normal(k3, (1, out_channels), jnp.float32) * 0.1
    return w_base, w_sp, bias


# --------------------------------- reference -----------------------------------

def kan_conv2d_ref(x, params, kernel_size):
    """Pure-JAX f32 reference (Cox-de Boor bases, unfused matmuls)."""
    w_base, w_sp, bias = params
    patches, (B, OH, OW) = _im2col(x, kernel_size)
    base = patches * jax.nn.sigmoid(patches)
    out = base @ w_base
    bases = jnp.stack(_bspline_bases_ref(patches), axis=-1)    # (R, D, M)
    out = out + jnp.einsum("rdm,mdo->ro", bases, w_sp)
    out = out + bias
    Cout = out.shape[-1]
    return jnp.transpose(out.reshape(B, OH, OW, Cout), (0, 3, 1, 2))


# ----------------------------------- main --------------------------------------

if __name__ == "__main__":
    B, Cin, H, W = 2, 4, 16, 16
    Cout, K = 8, 3

    key = jax.random.PRNGKey(0)
    kx, kp = jax.random.split(key)
    x = jax.random.normal(kx, (B, Cin, H, W), jnp.float32)
    params = init_kan_conv2d_params(kp, Cin, Cout, K)

    fwd = jax.jit(partial(kan_conv2d, kernel_size=K))
    y = jax.block_until_ready(fwd(x, params))

    y_ref = kan_conv2d_ref(x, params, K)
    assert y.shape == (B, Cout, H - K + 1, W - K + 1)
    # bf16 MXU operands (and bf16 spline polynomials on v6e/v7x) with f32
    # accumulation -> slightly looser tolerance than the pure-f32 reference.
    assert jnp.allclose(y, y_ref, rtol=2e-2, atol=2e-2), "mismatch vs reference"

    # Targeted test: inputs exactly on knots and outside the [-3, 3) support,
    # where a spline-interval indexing bug would show up.
    special = jnp.array([-1.0, -1.0 / 3.0, 1.0 / 3.0, 1.0, -3.0, 3.0,
                         -3.5, 3.5, 0.0, 2.0 / 3.0, -2.0 / 3.0, 5.0], jnp.float32)
    n_el = B * Cin * H * W
    reps = (n_el + special.size - 1) // special.size
    x_knots = jnp.tile(special, reps)[:n_el].reshape(B, Cin, H, W)
    y2 = jax.block_until_ready(fwd(x_knots, params))
    y2_ref = kan_conv2d_ref(x_knots, params, K)
    assert jnp.allclose(y2, y2_ref, rtol=2e-2, atol=2e-2), "mismatch at knots"

    print("KERNEL_OK")
</pallas_src>

<mosaic_0001>
module attributes {stable_mosaic.version = 11 : i64} {
  func.func @_kan_rows_kernel(%arg0: i32, %arg1: memref<392x36xf32, #tpu.memory_space<vmem>>, %arg2: memref<896x128xbf16, #tpu.memory_space<vmem>>, %arg3: memref<1x128xf32, #tpu.memory_space<vmem>>, %arg4: memref<392x128xf32, #tpu.memory_space<vmem>>) attributes {dimension_semantics = [#tpu.dimension_semantics<parallel>], iteration_bounds = array<i64: 1>, scalar_prefetch = 0 : i64, scratch_operands = 0 : i64, tpu.core_type = #tpu.core_type<tc>, window_params = [{transform_indices = @transform_0, window_bounds = array<i64: 392, 36>}, {pipeline_mode = #tpu.pipeline_mode<synchronous>, transform_indices = @transform_1, window_bounds = array<i64: 896, 128>}, {pipeline_mode = #tpu.pipeline_mode<synchronous>, transform_indices = @transform_2, window_bounds = array<i64: 1, 128>}, {transform_indices = @transform_3, window_bounds = array<i64: 392, 128>}]} {
    %c0 = arith.constant 0 : index
    %c0_0 = arith.constant 0 : index
    %0 = vector.load %arg1[%c0, %c0_0] : memref<392x36xf32, #tpu.memory_space<vmem>>, vector<392x36xf32>
    %cst = arith.constant 0.000000e+00 : f32
    %1 = vector.broadcast %cst : f32 to vector<392x92xf32>
    %2 = tpu.concatenate %0, %1 in 1 : vector<392x36xf32>, vector<392x92xf32> -> vector<392x128xf32>
    %3 = arith.negf %2 : vector<392x128xf32>
    %4 = math.exp %3 : vector<392x128xf32>
    %cst_1 = arith.constant 1.000000e+00 : f32
    %5 = vector.broadcast %cst_1 : f32 to vector<392x128xf32>
    %6 = arith.addf %5, %4 : vector<392x128xf32>
    %7 = arith.divf %5, %6 : vector<392x128xf32>
    %8 = arith.mulf %2, %7 : vector<392x128xf32>
    %9 = arith.truncf %8 : vector<392x128xf32> to vector<392x128xbf16>
    %c0_2 = arith.constant 0 : index
    %c0_3 = arith.constant 0 : index
    %10 = vector.load %arg2[%c0_2, %c0_3] : memref<896x128xbf16, #tpu.memory_space<vmem>>, vector<128x128xbf16>
    %cst_4 = arith.constant dense<0.000000e+00> : vector<392x128xf32>
    %11 = tpu.matmul %9, %10, %cst_4 {dimension_numbers = #tpu.dot_dimension_numbers<[1], [0], [0], [1], [0, 0, 1, 1], [], []>} : vector<392x128xbf16>, vector<128x128xbf16>, vector<392x128xf32> -> vector<392x128xf32>
    %cst_5 = arith.constant -3.000000e+00 : f32
    %12 = vector.broadcast %cst_5 : f32 to vector<392x128xf32>
    %13 = arith.subf %2, %12 : vector<392x128xf32>
    %cst_6 = arith.constant 1.500000e+00 : f32
    %14 = vector.broadcast %cst_6 : f32 to vector<392x128xf32>
    %15 = arith.mulf %13, %14 : vector<392x128xf32>
    %16 = math.floor %15 : vector<392x128xf32>
    %17 = arith.subf %15, %16 : vector<392x128xf32>
    %18 = arith.mulf %17, %17 : vector<392x128xf32>
    %19 = arith.mulf %18, %17 : vector<392x128xf32>
    %cst_7 = arith.constant 1.000000e+00 : f32
    %20 = vector.broadcast %cst_7 : f32 to vector<392x128xf32>
    %21 = arith.subf %20, %17 : vector<392x128xf32>
    %cst_8 = arith.constant 0.166666672 : f32
    %22 = vector.broadcast %cst_8 : f32 to vector<392x128xf32>
    %23 = arith.mulf %19, %22 : vector<392x128xf32>
    %cst_9 = arith.constant -5.000000e-01 : f32
    %24 = vector.broadcast %cst_9 : f32 to vector<392x128xf32>
    %25 = arith.mulf %17, %24 : vector<392x128xf32>
    %cst_10 = arith.constant 5.000000e-01 : f32
    %26 = vector.broadcast %cst_10 : f32 to vector<392x128xf32>
    %27 = arith.addf %25, %26 : vector<392x128xf32>
    %28 = arith.mulf %27, %17 : vector<392x128xf32>
    %cst_11 = arith.constant 5.000000e-01 : f32
    %29 = vector.broadcast %cst_11 : f32 to vector<392x128xf32>
    %30 = arith.addf %28, %29 : vector<392x128xf32>
    %31 = arith.mulf %30, %17 : vector<392x128xf32>
    %cst_12 = arith.constant 0.166666672 : f32
    %32 = vector.broadcast %cst_12 : f32 to vector<392x128xf32>
    %33 = arith.addf %31, %32 : vector<392x128xf32>
    %34 = arith.mulf %21, %21 : vector<392x128xf32>
    %35 = arith.mulf %34, %21 : vector<392x128xf32>
    %cst_13 = arith.constant 0.166666672 : f32
    %36 = vector.broadcast %cst_13 : f32 to vector<392x128xf32>
    %37 = arith.mulf %35, %36 : vector<392x128xf32>
    %cst_14 = arith.constant 1.000000e+00 : f32
    %38 = vector.broadcast %cst_14 : f32 to vector<392x128xf32>
    %39 = arith.subf %38, %23 : vector<392x128xf32>
    %40 = arith.subf %39, %33 : vector<392x128xf32>
    %41 = arith.subf %40, %37 : vector<392x128xf32>
    %cst_15 = arith.constant 0.000000e+00 : f32
    %42 = vector.broadcast %cst_15 : f32 to vector<392x128xf32>
    %cst_16 = arith.constant 0.000000e+00 : f32
    %43 = vector.broadcast %cst_16 : f32 to vector<392x128xf32>
    %44 = arith.cmpf oeq, %16, %43 : vector<392x128xf32>
    %cst_17 = arith.constant 1.000000e+00 : f32
    %45 = vector.broadcast %cst_17 : f32 to vector<392x128xf32>
    %46 = arith.cmpf oeq, %16, %45 : vector<392x128xf32>
    %cst_18 = arith.constant 2.000000e+00 : f32
    %47 = vector.broadcast %cst_18 : f32 to vector<392x128xf32>
    %48 = arith.cmpf oeq, %16, %47 : vector<392x128xf32>
    %cst_19 = arith.constant 3.000000e+00 : f32
    %49 = vector.broadcast %cst_19 : f32 to vector<392x128xf32>
    %50 = arith.cmpf oeq, %16, %49 : vector<392x128xf32>
    %cst_20 = arith.constant 4.000000e+00 : f32
    %51 = vector.broadcast %cst_20 : f32 to vector<392x128xf32>
    %52 = arith.cmpf oeq, %16, %51 : vector<392x128xf32>
    %cst_21 = arith.constant 5.000000e+00 : f32
    %53 = vector.broadcast %cst_21 : f32 to vector<392x128xf32>
    %54 = arith.cmpf oeq, %16, %53 : vector<392x128xf32>
    %cst_22 = arith.constant 6.000000e+00 : f32
    %55 = vector.broadcast %cst_22 : f32 to vector<392x128xf32>
    %56 = arith.cmpf oeq, %16, %55 : vector<392x128xf32>
    %cst_23 = arith.constant 7.000000e+00 : f32
    %57 = vector.broadcast %cst_23 : f32 to vector<392x128xf32>
    %58 = arith.cmpf oeq, %16, %57 : vector<392x128xf32>
    %cst_24 = arith.constant 8.000000e+00 : f32
    %59 = vector.broadcast %cst_24 : f32 to vector<392x128xf32>
    %60 = arith.cmpf oeq, %16, %59 : vector<392x128xf32>
    %61 = arith.select %50, %37, %42 : vector<392x128xi1>, vector<392x128xf32>
    %62 = arith.select %48, %41, %61 : vector<392x128xi1>, vector<392x128xf32>
    %63 = arith.select %46, %33, %62 : vector<392x128xi1>, vector<392x128xf32>
    %64 = arith.select %44, %23, %63 : vector<392x128xi1>, vector<392x128xf32>
    %65 = arith.truncf %64 : vector<392x128xf32> to vector<392x128xbf16>
    %c128 = arith.constant 128 : index
    %c0_25 = arith.constant 0 : index
    %66 = vector.load %arg2[%c128, %c0_25] : memref<896x128xbf16, #tpu.memory_space<vmem>>, vector<128x128xbf16>
    %cst_26 = arith.constant dense<0.000000e+00> : vector<392x128xf32>
    %67 = tpu.matmul %65, %66, %cst_26 {dimension_numbers = #tpu.dot_dimension_numbers<[1], [0], [0], [1], [0, 0, 1, 1], [], []>} : vector<392x128xbf16>, vector<128x128xbf16>, vector<392x128xf32> -> vector<392x128xf32>
    %68 = arith.addf %11, %67 : vector<392x128xf32>
    %69 = arith.select %52, %37, %42 : vector<392x128xi1>, vector<392x128xf32>
    %70 = arith.select %50, %41, %69 : vector<392x128xi1>, vector<392x128xf32>
    %71 = arith.select %48, %33, %70 : vector<392x128xi1>, vector<392x128xf32>
    %72 = arith.select %46, %23, %71 : vector<392x128xi1>, vector<392x128xf32>
    %73 = arith.truncf %72 : vector<392x128xf32> to vector<392x128xbf16>
    %c256 = arith.constant 256 : index
    %c0_27 = arith.constant 0 : index
    %74 = vector.load %arg2[%c256, %c0_27] : memref<896x128xbf16, #tpu.memory_space<vmem>>, vector<128x128xbf16>
    %cst_28 = arith.constant dense<0.000000e+00> : vector<392x128xf32>
    %75 = tpu.matmul %73, %74, %cst_28 {dimension_numbers = #tpu.dot_dimension_numbers<[1], [0], [0], [1], [0, 0, 1, 1], [], []>} : vector<392x128xbf16>, vector<128x128xbf16>, vector<392x128xf32> -> vector<392x128xf32>
    %76 = arith.addf %68, %75 : vector<392x128xf32>
    %77 = arith.select %54, %37, %42 : vector<392x128xi1>, vector<392x128xf32>
    %78 = arith.select %52, %41, %77 : vector<392x128xi1>, vector<392x128xf32>
    %79 = arith.select %50, %33, %78 : vector<392x128xi1>, vector<392x128xf32>
    %80 = arith.select %48, %23, %79 : vector<392x128xi1>, vector<392x128xf32>
    %81 = arith.truncf %80 : vector<392x128xf32> to vector<392x128xbf16>
    %c384 = arith.constant 384 : index
    %c0_29 = arith.constant 0 : index
    %82 = vector.load %arg2[%c384, %c0_29] : memref<896x128xbf16, #tpu.memory_space<vmem>>, vector<128x128xbf16>
    %cst_30 = arith.constant dense<0.000000e+00> : vector<392x128xf32>
    %83 = tpu.matmul %81, %82, %cst_30 {dimension_numbers = #tpu.dot_dimension_numbers<[1], [0], [0], [1], [0, 0, 1, 1], [], []>} : vector<392x128xbf16>, vector<128x128xbf16>, vector<392x128xf32> -> vector<392x128xf32>
    %84 = arith.addf %76, %83 : vector<392x128xf32>
    %85 = arith.select %56, %37, %42 : vector<392x128xi1>, vector<392x128xf32>
    %86 = arith.select %54, %41, %85 : vector<392x128xi1>, vector<392x128xf32>
    %87 = arith.select %52, %33, %86 : vector<392x128xi1>, vector<392x128xf32>
    %88 = arith.select %50, %23, %87 : vector<392x128xi1>, vector<392x128xf32>
    %89 = arith.truncf %88 : vector<392x128xf32> to vector<392x128xbf16>
    %c512 = arith.constant 512 : index
    %c0_31 = arith.constant 0 : index
    %90 = vector.load %arg2[%c512, %c0_31] : memref<896x128xbf16, #tpu.memory_space<vmem>>, vector<128x128xbf16>
    %cst_32 = arith.constant dense<0.000000e+00> : vector<392x128xf32>
    %91 = tpu.matmul %89, %90, %cst_32 {dimension_numbers = #tpu.dot_dimension_numbers<[1], [0], [0], [1], [0, 0, 1, 1], [], []>} : vector<392x128xbf16>, vector<128x128xbf16>, vector<392x128xf32> -> vector<392x128xf32>
    %92 = arith.addf %84, %91 : vector<392x128xf32>
    %93 = arith.select %58, %37, %42 : vector<392x128xi1>, vector<392x128xf32>
    %94 = arith.select %56, %41, %93 : vector<392x128xi1>, vector<392x128xf32>
    %95 = arith.select %54, %33, %94 : vector<392x128xi1>, vector<392x128xf32>
    %96 = arith.select %52, %23, %95 : vector<392x128xi1>, vector<392x128xf32>
    %97 = arith.truncf %96 : vector<392x128xf32> to vector<392x128xbf16>
    %c640 = arith.constant 640 : index
    %c0_33 = arith.constant 0 : index
    %98 = vector.load %arg2[%c640, %c0_33] : memref<896x128xbf16, #tpu.memory_space<vmem>>, vector<128x128xbf16>
    %cst_34 = arith.constant dense<0.000000e+00> : vector<392x128xf32>
    %99 = tpu.matmul %97, %98, %cst_34 {dimension_numbers = #tpu.dot_dimension_numbers<[1], [0], [0], [1], [0, 0, 1, 1], [], []>} : vector<392x128xbf16>, vector<128x128xbf16>, vector<392x128xf32> -> vector<392x128xf32>
    %100 = arith.addf %92, %99 : vector<392x128xf32>
    %101 = arith.select %60, %37, %42 : vector<392x128xi1>, vector<392x128xf32>
    %102 = arith.select %58, %41, %101 : vector<392x128xi1>, vector<392x128xf32>
    %103 = arith.select %56, %33, %102 : vector<392x128xi1>, vector<392x128xf32>
    %104 = arith.select %54, %23, %103 : vector<392x128xi1>, vector<392x128xf32>
    %105 = arith.truncf %104 : vector<392x128xf32> to vector<392x128xbf16>
    %c768 = arith.constant 768 : index
    %c0_35 = arith.constant 0 : index
    %106 = vector.load %arg2[%c768, %c0_35] : memref<896x128xbf16, #tpu.memory_space<vmem>>, vector<128x128xbf16>
    %cst_36 = arith.constant dense<0.000000e+00> : vector<392x128xf32>
    %107 = tpu.matmul %105, %106, %cst_36 {dimension_numbers = #tpu.dot_dimension_numbers<[1], [0], [0], [1], [0, 0, 1, 1], [], []>} : vector<392x128xbf16>, vector<128x128xbf16>, vector<392x128xf32> -> vector<392x128xf32>
    %108 = arith.addf %100, %107 : vector<392x128xf32>
    %c0_37 = arith.constant 0 : index
    %c0_38 = arith.constant 0 : index
    %109 = vector.load %arg3[%c0_37, %c0_38] : memref<1x128xf32, #tpu.memory_space<vmem>>, vector<1x128xf32>
    %110 = vector.broadcast %109 : vector<1x128xf32> to vector<392x128xf32>
    %111 = arith.addf %108, %110 : vector<392x128xf32>
    %c0_39 = arith.constant 0 : index
    %c0_40 = arith.constant 0 : index
    %112 = vector.load %arg4[%c0_39, %c0_40] : memref<392x128xf32, #tpu.memory_space<vmem>>, vector<392x128xf32>
    tpu.vector_store %arg4[%c0_39, %c0_40], %111 {strides = array<i32>} : memref<392x128xf32, #tpu.memory_space<vmem>>, vector<392x128xf32>,
    return
  }
  func.func @transform_0(%arg0: i32) -> (i32, i32) {
    %c0_i32 = arith.constant 0 : i32
    %c0_i32_0 = arith.constant 0 : i32
    return %arg0, %c0_i32 : i32, i32
  }
  func.func @transform_1(%arg0: i32) -> (i32, i32) {
    %c0_i32 = arith.constant 0 : i32
    %c0_i32_0 = arith.constant 0 : i32
    %c0_i32_1 = arith.constant 0 : i32
    return %c0_i32, %c0_i32_0 : i32, i32
  }
  func.func @transform_2(%arg0: i32) -> (i32, i32) {
    %c0_i32 = arith.constant 0 : i32
    %c0_i32_0 = arith.constant 0 : i32
    %c0_i32_1 = arith.constant 0 : i32
    return %c0_i32, %c0_i32_0 : i32, i32
  }
  func.func @transform_3(%arg0: i32) -> (i32, i32) {
    %c0_i32 = arith.constant 0 : i32
    %c0_i32_0 = arith.constant 0 : i32
    return %arg0, %c0_i32 : i32, i32
  }
}

</mosaic_0001>

<llo_original>
// kernel: kan_conv2d.1
$region0: #{kan_conv2d.1}
  #allocation0 [shape = 'u32[]', space=smem, size = 0x4, offset = 0x4, fixed_abs, tag = 'smem constant byte address 0x4 - core index']
  #allocation1 [shape = 'u32[144,128]{1,0:T(1,128)}', space=vmem, size = 0x12000, scoped, tag = 'internal scratch']
  %s0 = inlined_call_operand.hbm [shape: f32[392,36], index: 0, kind: input, shape index: {}]
  %s1 = inlined_call_operand.hbm [shape: bf16[896,128], index: 1, kind: input, shape index: {}]
  %s2 = inlined_call_operand.hbm [shape: f32[1,128], index: 2, kind: input, shape index: {}]
  %s3 = inlined_call_operand.hbm [shape: f32[392,128], index: 3, kind: output, shape index: {}]
  %s4 = sld [smem:[#allocation0]]
  $region34: #{kan_conv2d.1} parent=0
    _
  %s6 = ssub.s32 1, %s4
  %s7 = scalar_select 0, %s6, %s4
  $region1: #{kan_conv2d.1} parent=0
    #allocation2 [shape = 'u8[200704]{0}', space=vmem, size = 0x31000, scoped, tag = 'input window, operand 0, single buffered']
    #allocation3 [shape = 's32[1]{0}', space=sflag, size = 0x4, scoped, tag = 'scoped memory for kan_conv2d.1']
    #allocation4 [shape = 's32[1]{0}', space=sflag, size = 0x4, scoped, tag = 'scoped memory for kan_conv2d.1']
    #allocation5 [shape = 'u8[229376]{0}', space=vmem, size = 0x38000, scoped, tag = 'input window, operand 1, single buffered']
    #allocation6 [shape = 's32[1]{0}', space=sflag, size = 0x4, scoped, tag = 'scoped memory for kan_conv2d.1']
    #allocation7 [shape = 'u8[512]{0}', space=vmem, size = 0x400, scoped, tag = 'input window, operand 2, single buffered']
    #allocation8 [shape = 'u8[200704]{0}', space=vmem, size = 0x31000, scoped, tag = 'output window, operand 0, single buffered']
    %8 = vsyncpa [#allocation3], 0
    %9 = vsyncpa [#allocation6], 0
    %10 = vsyncpa [#allocation4], 0
    // Predicated region
    $region2: #{kan_conv2d.1} parent=1 // pred_check
      _
    $region3: #{kan_conv2d.1} parent=1 // pred_check_branch
      %12 = sbr.rel (0) target = $region5
    $region4: #{kan_conv2d.1} parent=1 // pred_region
      %s14 = ssub.s32 6272, 6272
      %15 = vsyncadd [#allocation3], %s14
      %s16 = sshll.u32 [#allocation2], 4
      %s17 = int_to_ptr.vmem [resolvable:$true] %s16
      %22 = dma.hbm_to_vmem [thread:$0]  %s0, 6272, %s17, [#allocation3], 128, 128, 8
    $region5: #{kan_conv2d.1} parent=1 // pred_fallthru
      _
    // Predicated region
    $region6: #{kan_conv2d.1} parent=1 // pred_check
      _
    $region7: #{kan_conv2d.1} parent=1 // pred_check_branch
      %24 = sbr.rel (0) target = $region9
    $region8: #{kan_conv2d.1} parent=1 // pred_region
      %s26 = ssub.s32 7168, 7168
      %27 = vsyncadd [#allocation6], %s26
      %s28 = sshll.u32 [#allocation5], 4
      %s29 = int_to_ptr.vmem [resolvable:$true] %s28
      %34 = dma.hbm_to_vmem [thread:$0]  %s1, 7168, %s29, [#allocation6], 64, 64, 4
    $region9: #{kan_conv2d.1} parent=1 // pred_fallthru
      _
    // Predicated region
    $region10: #{kan_conv2d.1} parent=1 // pred_check
      _
    $region11: #{kan_conv2d.1} parent=1 // pred_check_branch
      %36 = sbr.rel (0) target = $region13
    $region12: #{kan_conv2d.1} parent=1 // pred_region
      %s38 = ssub.s32 16, 16
      %39 = vsyncadd [#allocation6], %s38
      %s41 = sshll.u32 [#allocation7], 4
      %s42 = int_to_ptr.vmem [resolvable:$true] %s41
      %44 = dma.hbm_to_vmem [thread:$0]  %s2, 16, %s42, [#allocation6]
    $region13: #{kan_conv2d.1} parent=1 // pred_fallthru
      _
    // Predicated region
    $region14: #{kan_conv2d.1} parent=1 // pred_check
      _
    $region15: #{kan_conv2d.1} parent=1 // pred_check_branch
      %46 = sbr.rel (0) target = $region17
    $region16: #{kan_conv2d.1} parent=1 // pred_region
      %47 = dma.done [#allocation3], 6272
    $region17: #{kan_conv2d.1} parent=1 // pred_fallthru
      _
    // Predicated region
    $region18: #{kan_conv2d.1} parent=1 // pred_check
      _
    $region19: #{kan_conv2d.1} parent=1 // pred_check_branch
      %49 = sbr.rel (0) target = $region21
    $region20: #{kan_conv2d.1} parent=1 // pred_region
      %50 = dma.done [#allocation6], 7168
    $region21: #{kan_conv2d.1} parent=1 // pred_fallthru
      _
    // Predicated region
    $region22: #{kan_conv2d.1} parent=1 // pred_check
      _
    $region23: #{kan_conv2d.1} parent=1 // pred_check_branch
      %52 = sbr.rel (0) target = $region25
    $region24: #{kan_conv2d.1} parent=1 // pred_region
      %53 = dma.done [#allocation6], 16
    $region25: #{kan_conv2d.1} parent=1 // pred_fallthru
      _
    %v55 = vld [vmem:[#allocation2] sm:$0xff]
    %v56 = vld [vmem:[#allocation2 + $0x8] sm:$0xff]
    %v57 = vld [vmem:[#allocation2 + $0x10] sm:$0xff]
    %v58 = vld [vmem:[#allocation2 + $0x18] sm:$0xff]
    %v59 = vld [vmem:[#allocation2 + $0x20] sm:$0xff]
    %v60 = vld [vmem:[#allocation2 + $0x28] sm:$0xff]
    %v61 = vld [vmem:[#allocation2 + $0x30] sm:$0xff]
    %v62 = vld [vmem:[#allocation2 + $0x38] sm:$0xff]
    %v63 = vld [vmem:[#allocation2 + $0x40] sm:$0xff]
    %v64 = vld [vmem:[#allocation2 + $0x48] sm:$0xff]
    %v65 = vld [vmem:[#allocation2 + $0x50] sm:$0xff]
    %v66 = vld [vmem:[#allocation2 + $0x58] sm:$0xff]
    %v67 = vld [vmem:[#allocation2 + $0x60] sm:$0xff]
    %v68 = vld [vmem:[#allocation2 + $0x68] sm:$0xff]
    %v69 = vld [vmem:[#allocation2 + $0x70] sm:$0xff]
    %v70 = vld [vmem:[#allocation2 + $0x78] sm:$0xff]
    %v71 = vld [vmem:[#allocation2 + $0x80] sm:$0xff]
    %v72 = vld [vmem:[#allocation2 + $0x88] sm:$0xff]
    %v73 = vld [vmem:[#allocation2 + $0x90] sm:$0xff]
    %v74 = vld [vmem:[#allocation2 + $0x98] sm:$0xff]
    %v75 = vld [vmem:[#allocation2 + $0xa0] sm:$0xff]
    %v76 = vld [vmem:[#allocation2 + $0xa8] sm:$0xff]
    %v77 = vld [vmem:[#allocation2 + $0xb0] sm:$0xff]
    %v78 = vld [vmem:[#allocation2 + $0xb8] sm:$0xff]
    %v79 = vld [vmem:[#allocation2 + $0xc0] sm:$0xff]
    %v80 = vld [vmem:[#allocation2 + $0xc8] sm:$0xff]
    %v81 = vld [vmem:[#allocation2 + $0xd0] sm:$0xff]
    %v82 = vld [vmem:[#allocation2 + $0xd8] sm:$0xff]
    %v83 = vld [vmem:[#allocation2 + $0xe0] sm:$0xff]
    %v84 = vld [vmem:[#allocation2 + $0xe8] sm:$0xff]
    %v85 = vld [vmem:[#allocation2 + $0xf0] sm:$0xff]
    %v86 = vld [vmem:[#allocation2 + $0xf8] sm:$0xff]
    %v87 = vld [vmem:[#allocation2 + $0x100] sm:$0xff]
    %v88 = vld [vmem:[#allocation2 + $0x108] sm:$0xff]
    %v89 = vld [vmem:[#allocation2 + $0x110] sm:$0xff]
    %v90 = vld [vmem:[#allocation2 + $0x118] sm:$0xff]
    %v91 = vld [vmem:[#allocation2 + $0x120] sm:$0xff]
    %v92 = vld [vmem:[#allocation2 + $0x128] sm:$0xff]
    %v93 = vld [vmem:[#allocation2 + $0x130] sm:$0xff]
    %v94 = vld [vmem:[#allocation2 + $0x138] sm:$0xff]
    %v95 = vld [vmem:[#allocation2 + $0x140] sm:$0xff]
    %v96 = vld [vmem:[#allocation2 + $0x148] sm:$0xff]
    %v97 = vld [vmem:[#allocation2 + $0x150] sm:$0xff]
    %v98 = vld [vmem:[#allocation2 + $0x158] sm:$0xff]
    %v99 = vld [vmem:[#allocation2 + $0x160] sm:$0xff]
    %v100 = vld [vmem:[#allocation2 + $0x168] sm:$0xff]
    %v101 = vld [vmem:[#allocation2 + $0x170] sm:$0xff]
    %v102 = vld [vmem:[#allocation2 + $0x178] sm:$0xff]
    %v103 = vld [vmem:[#allocation2 + $0x180] sm:$0xff]
    %vm104 = vcmask 293888
    %v105 = vsel %vm104, %v55, 0.0
    %v106 = vsel %vm104, %v56, 0.0
    %v107 = vsel %vm104, %v57, 0.0
    %v108 = vsel %vm104, %v58, 0.0
    %v109 = vsel %vm104, %v59, 0.0
    %v110 = vsel %vm104, %v60, 0.0
    %v111 = vsel %vm104, %v61, 0.0
    %v112 = vsel %vm104, %v62, 0.0
    %v113 = vsel %vm104, %v63, 0.0
    %v114 = vsel %vm104, %v64, 0.0
    %v115 = vsel %vm104, %v65, 0.0
    %v116 = vsel %vm104, %v66, 0.0
    %v117 = vsel %vm104, %v67, 0.0
    %v118 = vsel %vm104, %v68, 0.0
    %v119 = vsel %vm104, %v69, 0.0
    %v120 = vsel %vm104, %v70, 0.0
    %v121 = vsel %vm104, %v71, 0.0
    %v122 = vsel %vm104, %v72, 0.0
    %v123 = vsel %vm104, %v73, 0.0
    %v124 = vsel %vm104, %v74, 0.0
    %v125 = vsel %vm104, %v75, 0.0
    %v126 = vsel %vm104, %v76, 0.0
    %v127 = vsel %vm104, %v77, 0.0
    %v128 = vsel %vm104, %v78, 0.0
    %v129 = vsel %vm104, %v79, 0.0
    %v130 = vsel %vm104, %v80, 0.0
    %v131 = vsel %vm104, %v81, 0.0
    %v132 = vsel %vm104, %v82, 0.0
    %v133 = vsel %vm104, %v83, 0.0
    %v134 = vsel %vm104, %v84, 0.0
    %v135 = vsel %vm104, %v85, 0.0
    %v136 = vsel %vm104, %v86, 0.0
    %v137 = vsel %vm104, %v87, 0.0
    %v138 = vsel %vm104, %v88, 0.0
    %v139 = vsel %vm104, %v89, 0.0
    %v140 = vsel %vm104, %v90, 0.0
    %v141 = vsel %vm104, %v91, 0.0
    %v142 = vsel %vm104, %v92, 0.0
    %v143 = vsel %vm104, %v93, 0.0
    %v144 = vsel %vm104, %v94, 0.0
    %v145 = vsel %vm104, %v95, 0.0
    %v146 = vsel %vm104, %v96, 0.0
    %v147 = vsel %vm104, %v97, 0.0
    %v148 = vsel %vm104, %v98, 0.0
    %v149 = vsel %vm104, %v99, 0.0
    %v150 = vsel %vm104, %v100, 0.0
    %v151 = vsel %vm104, %v101, 0.0
    %v152 = vsel %vm104, %v102, 0.0
    %v153 = vsel %vm104, %v103, 0.0
    %v154 = vxor.u32 %v105, 2147483648
    %v155 = vxor.u32 %v106, 2147483648
    %v156 = vxor.u32 %v107, 2147483648
    %v157 = vxor.u32 %v108, 2147483648
    %v158 = vxor.u32 %v109, 2147483648
    %v159 = vxor.u32 %v110, 2147483648
    %v160 = vxor.u32 %v111, 2147483648
    %v161 = vxor.u32 %v112, 2147483648
    %v162 = vxor.u32 %v113, 2147483648
    %v163 = vxor.u32 %v114, 2147483648
    %v164 = vxor.u32 %v115, 2147483648
    %v165 = vxor.u32 %v116, 2147483648
    %v166 = vxor.u32 %v117, 2147483648
    %v167 = vxor.u32 %v118, 2147483648
    %v168 = vxor.u32 %v119, 2147483648
    %v169 = vxor.u32 %v120, 2147483648
    %v170 = vxor.u32 %v121, 2147483648
    %v171 = vxor.u32 %v122, 2147483648
    %v172 = vxor.u32 %v123, 2147483648
    %v173 = vxor.u32 %v124, 2147483648
    %v174 = vxor.u32 %v125, 2147483648
    %v175 = vxor.u32 %v126, 2147483648
    %v176 = vxor.u32 %v127, 2147483648
    %v177 = vxor.u32 %v128, 2147483648
    %v178 = vxor.u32 %v129, 2147483648
    %v179 = vxor.u32 %v130, 2147483648
    %v180 = vxor.u32 %v131, 2147483648
    %v181 = vxor.u32 %v132, 2147483648
    %v182 = vxor.u32 %v133, 2147483648
    %v183 = vxor.u32 %v134, 2147483648
    %v184 = vxor.u32 %v135, 2147483648
    %v185 = vxor.u32 %v136, 2147483648
    %v186 = vxor.u32 %v137, 2147483648
    %v187 = vxor.u32 %v138, 2147483648
    %v188 = vxor.u32 %v139, 2147483648
    %v189 = vxor.u32 %v140, 2147483648
    %v190 = vxor.u32 %v141, 2147483648
    %v191 = vxor.u32 %v142, 2147483648
    %v192 = vxor.u32 %v143, 2147483648
    %v193 = vxor.u32 %v144, 2147483648
    %v194 = vxor.u32 %v145, 2147483648
    %v195 = vxor.u32 %v146, 2147483648
    %v196 = vxor.u32 %v147, 2147483648
    %v197 = vxor.u32 %v148, 2147483648
    %v198 = vxor.u32 %v149, 2147483648
    %v199 = vxor.u32 %v150, 2147483648
    %v200 = vxor.u32 %v151, 2147483648
    %v201 = vxor.u32 %v152, 2147483648
    %v202 = vxor.u32 %v153, 2147483648
    %v203 = vmul.f32 %v154, 1.442695
    %v204 = vpow.pop %v203
    %v205 = vmul.f32 %v155, 1.442695
    %v206 = vpow.pop %v205
    %v207 = vmul.f32 %v156, 1.442695
    %v208 = vpow.pop %v207
    %v209 = vmul.f32 %v157, 1.442695
    %v210 = vpow.pop %v209
    %v211 = vmul.f32 %v158, 1.442695
    %v212 = vpow.pop %v211
    %v213 = vmul.f32 %v159, 1.442695
    %v214 = vpow.pop %v213
    %v215 = vmul.f32 %v160, 1.442695
    %v216 = vpow.pop %v215
    %v217 = vmul.f32 %v161, 1.442695
    %v218 = vpow.pop %v217
    %v219 = vmul.f32 %v162, 1.442695
    %v220 = vpow.pop %v219
    %v221 = vmul.f32 %v163, 1.442695
    %v222 = vpow.pop %v221
    %v223 = vmul.f32 %v164, 1.442695
    %v224 = vpow.pop %v223
    %v225 = vmul.f32 %v165, 1.442695
    %v226 = vpow.pop %v225
    %v227 = vmul.f32 %v166, 1.442695
    %v228 = vpow.pop %v227
    %v229 = vmul.f32 %v167, 1.442695
    %v230 = vpow.pop %v229
    %v231 = vmul.f32 %v168, 1.442695
    %v232 = vpow.pop %v231
    %v233 = vmul.f32 %v169, 1.442695
    %v234 = vpow.pop %v233
    %v235 = vmul.f32 %v170, 1.442695
    %v236 = vpow.pop %v235
    %v237 = vmul.f32 %v171, 1.442695
    %v238 = vpow.pop %v237
    %v239 = vmul.f32 %v172, 1.442695
    %v240 = vpow.pop %v239
    %v241 = vmul.f32 %v173, 1.442695
    %v242 = vpow.pop %v241
    %v243 = vmul.f32 %v174, 1.442695
    %v244 = vpow.pop %v243
    %v245 = vmul.f32 %v175, 1.442695
    %v246 = vpow.pop %v245
    %v247 = vmul.f32 %v176, 1.442695
    %v248 = vpow.pop %v247
    %v249 = vmul.f32 %v177, 1.442695
    %v250 = vpow.pop %v249
    %v251 = vmul.f32 %v178, 1.442695
    %v252 = vpow.pop %v251
    %v253 = vmul.f32 %v179, 1.442695
    %v254 = vpow.pop %v253
    %v255 = vmul.f32 %v180, 1.442695
    %v256 = vpow.pop %v255
    %v257 = vmul.f32 %v181, 1.442695
    %v258 = vpow.pop %v257
    %v259 = vmul.f32 %v182, 1.442695
    %v260 = vpow.pop %v259
    %v261 = vmul.f32 %v183, 1.442695
    %v262 = vpow.pop %v261
    %v263 = vmul.f32 %v184, 1.442695
    %v264 = vpow.pop %v263
    %v265 = vmul.f32 %v185, 1.442695
    %v266 = vpow.pop %v265
    %v267 = vmul.f32 %v186, 1.442695
    %v268 = vpow.pop %v267
    %v269 = vmul.f32 %v187, 1.442695
    %v270 = vpow.pop %v269
    %v271 = vmul.f32 %v188, 1.442695
    %v272 = vpow.pop %v271
    %v273 = vmul.f32 %v189, 1.442695
    %v274 = vpow.pop %v273
    %v275 = vmul.f32 %v190, 1.442695
    %v276 = vpow.pop %v275
    %v277 = vmul.f32 %v191, 1.442695
    %v278 = vpow.pop %v277
    %v279 = vmul.f32 %v192, 1.442695
    %v280 = vpow.pop %v279
    %v281 = vmul.f32 %v193, 1.442695
    %v282 = vpow.pop %v281
    %v283 = vmul.f32 %v194, 1.442695
    %v284 = vpow.pop %v283
    %v285 = vmul.f32 %v195, 1.442695
    %v286 = vpow.pop %v285
    %v287 = vmul.f32 %v196, 1.442695
    %v288 = vpow.pop %v287
    %v289 = vmul.f32 %v197, 1.442695
    %v290 = vpow.pop %v289
    %v291 = vmul.f32 %v198, 1.442695
    %v292 = vpow.pop %v291
    %v293 = vmul.f32 %v199, 1.442695
    %v294 = vpow.pop %v293
    %v295 = vmul.f32 %v200, 1.442695
    %v296 = vpow.pop %v295
    %v297 = vmul.f32 %v201, 1.442695
    %v298 = vpow.pop %v297
    %v299 = vmul.f32 %v202, 1.442695
    %v300 = vpow.pop %v299
    %v301 = vadd.f32 %v204, 1.0
    %v302 = vadd.f32 %v206, 1.0
    %v303 = vadd.f32 %v208, 1.0
    %v304 = vadd.f32 %v210, 1.0
    %v305 = vadd.f32 %v212, 1.0
    %v306 = vadd.f32 %v214, 1.0
    %v307 = vadd.f32 %v216, 1.0
    %v308 = vadd.f32 %v218, 1.0
    %v309 = vadd.f32 %v220, 1.0
    %v310 = vadd.f32 %v222, 1.0
    %v311 = vadd.f32 %v224, 1.0
    %v312 = vadd.f32 %v226, 1.0
    %v313 = vadd.f32 %v228, 1.0
    %v314 = vadd.f32 %v230, 1.0
    %v315 = vadd.f32 %v232, 1.0
    %v316 = vadd.f32 %v234, 1.0
    %v317 = vadd.f32 %v236, 1.0
    %v318 = vadd.f32 %v238, 1.0
    %v319 = vadd.f32 %v240, 1.0
    %v320 = vadd.f32 %v242, 1.0
    %v321 = vadd.f32 %v244, 1.0
    %v322 = vadd.f32 %v246, 1.0
    %v323 = vadd.f32 %v248, 1.0
    %v324 = vadd.f32 %v250, 1.0
    %v325 = vadd.f32 %v252, 1.0
    %v326 = vadd.f32 %v254, 1.0
    %v327 = vadd.f32 %v256, 1.0
    %v328 = vadd.f32 %v258, 1.0
    %v329 = vadd.f32 %v260, 1.0
    %v330 = vadd.f32 %v262, 1.0
    %v331 = vadd.f32 %v264, 1.0
    %v332 = vadd.f32 %v266, 1.0
    %v333 = vadd.f32 %v268, 1.0
    %v334 = vadd.f32 %v270, 1.0
    %v335 = vadd.f32 %v272, 1.0
    %v336 = vadd.f32 %v274, 1.0
    %v337 = vadd.f32 %v276, 1.0
    %v338 = vadd.f32 %v278, 1.0
    %v339 = vadd.f32 %v280, 1.0
    %v340 = vadd.f32 %v282, 1.0
    %v341 = vadd.f32 %v284, 1.0
    %v342 = vadd.f32 %v286, 1.0
    %v343 = vadd.f32 %v288, 1.0
    %v344 = vadd.f32 %v290, 1.0
    %v345 = vadd.f32 %v292, 1.0
    %v346 = vadd.f32 %v294, 1.0
    %v347 = vadd.f32 %v296, 1.0
    %v348 = vadd.f32 %v298, 1.0
    %v349 = vadd.f32 %v300, 1.0
    %v350 = vrcp.pop %v301
    %v351 = vmul.f32 1.0, %v350
    %v352 = vrcp.pop %v302
    %v353 = vmul.f32 1.0, %v352
    %v354 = vrcp.pop %v303
    %v355 = vmul.f32 1.0, %v354
    %v356 = vrcp.pop %v304
    %v357 = vmul.f32 1.0, %v356
    %v358 = vrcp.pop %v305
    %v359 = vmul.f32 1.0, %v358
    %v360 = vrcp.pop %v306
    %v361 = vmul.f32 1.0, %v360
    %v362 = vrcp.pop %v307
    %v363 = vmul.f32 1.0, %v362
    %v364 = vrcp.pop %v308
    %v365 = vmul.f32 1.0, %v364
    %v366 = vrcp.pop %v309
    %v367 = vmul.f32 1.0, %v366
    %v368 = vrcp.pop %v310
    %v369 = vmul.f32 1.0, %v368
    %v370 = vrcp.pop %v311
    %v371 = vmul.f32 1.0, %v370
    %v372 = vrcp.pop %v312
    %v373 = vmul.f32 1.0, %v372
    %v374 = vrcp.pop %v313
    %v375 = vmul.f32 1.0, %v374
    %v376 = vrcp.pop %v314
    %v377 = vmul.f32 1.0, %v376
    %v378 = vrcp.pop %v315
    %v379 = vmul.f32 1.0, %v378
    %v380 = vrcp.pop %v316
    %v381 = vmul.f32 1.0, %v380
    %v382 = vrcp.pop %v317
    %v383 = vmul.f32 1.0, %v382
    %v384 = vrcp.pop %v318
    %v385 = vmul.f32 1.0, %v384
    %v386 = vrcp.pop %v319
    %v387 = vmul.f32 1.0, %v386
    %v388 = vrcp.pop %v320
    %v389 = vmul.f32 1.0, %v388
    %v390 = vrcp.pop %v321
    %v391 = vmul.f32 1.0, %v390
    %v392 = vrcp.pop %v322
    %v393 = vmul.f32 1.0, %v392
    %v394 = vrcp.pop %v323
    %v395 = vmul.f32 1.0, %v394
    %v396 = vrcp.pop %v324
    %v397 = vmul.f32 1.0, %v396
    %v398 = vrcp.pop %v325
    %v399 = vmul.f32 1.0, %v398
    %v400 = vrcp.pop %v326
    %v401 = vmul.f32 1.0, %v400
    %v402 = vrcp.pop %v327
    %v403 = vmul.f32 1.0, %v402
    %v404 = vrcp.pop %v328
    %v405 = vmul.f32 1.0, %v404
    %v406 = vrcp.pop %v329
    %v407 = vmul.f32 1.0, %v406
    %v408 = vrcp.pop %v330
    %v409 = vmul.f32 1.0, %v408
    %v410 = vrcp.pop %v331
    %v411 = vmul.f32 1.0, %v410
    %v412 = vrcp.pop %v332
    %v413 = vmul.f32 1.0, %v412
    %v414 = vrcp.pop %v333
    %v415 = vmul.f32 1.0, %v414
    %v416 = vrcp.pop %v334
    %v417 = vmul.f32 1.0, %v416
    %v418 = vrcp.pop %v335
    %v419 = vmul.f32 1.0, %v418
    %v420 = vrcp.pop %v336
    %v421 = vmul.f32 1.0, %v420
    %v422 = vrcp.pop %v337
    %v423 = vmul.f32 1.0, %v422
    %v424 = vrcp.pop %v338
    %v425 = vmul.f32 1.0, %v424
    %v426 = vrcp.pop %v339
    %v427 = vmul.f32 1.0, %v426
    %v428 = vrcp.pop %v340
    %v429 = vmul.f32 1.0, %v428
    %v430 = vrcp.pop %v341
    %v431 = vmul.f32 1.0, %v430
    %v432 = vrcp.pop %v342
    %v433 = vmul.f32 1.0, %v432
    %v434 = vrcp.pop %v343
    %v435 = vmul.f32 1.0, %v434
    %v436 = vrcp.pop %v344
    %v437 = vmul.f32 1.0, %v436
    %v438 = vrcp.pop %v345
    %v439 = vmul.f32 1.0, %v438
    %v440 = vrcp.pop %v346
    %v441 = vmul.f32 1.0, %v440
    %v442 = vrcp.pop %v347
    %v443 = vmul.f32 1.0, %v442
    %v444 = vrcp.pop %v348
    %v445 = vmul.f32 1.0, %v444
    %v446 = vrcp.pop %v349
    %v447 = vmul.f32 1.0, %v446
    %v448 = vmul.f32 %v105, %v351
    %v449 = vmul.f32 %v106, %v353
    %v450 = vmul.f32 %v107, %v355
    %v451 = vmul.f32 %v108, %v357
    %v452 = vmul.f32 %v109, %v359
    %v453 = vmul.f32 %v110, %v361
    %v454 = vmul.f32 %v111, %v363
    %v455 = vmul.f32 %v112, %v365
    %v456 = vmul.f32 %v113, %v367
    %v457 = vmul.f32 %v114, %v369
    %v458 = vmul.f32 %v115, %v371
    %v459 = vmul.f32 %v116, %v373
    %v460 = vmul.f32 %v117, %v375
    %v461 = vmul.f32 %v118, %v377
    %v462 = vmul.f32 %v119, %v379
    %v463 = vmul.f32 %v120, %v381
    %v464 = vmul.f32 %v121, %v383
    %v465 = vmul.f32 %v122, %v385
    %v466 = vmul.f32 %v123, %v387
    %v467 = vmul.f32 %v124, %v389
    %v468 = vmul.f32 %v125, %v391
    %v469 = vmul.f32 %v126, %v393
    %v470 = vmul.f32 %v127, %v395
    %v471 = vmul.f32 %v128, %v397
    %v472 = vmul.f32 %v129, %v399
    %v473 = vmul.f32 %v130, %v401
    %v474 = vmul.f32 %v131, %v403
    %v475 = vmul.f32 %v132, %v405
    %v476 = vmul.f32 %v133, %v407
    %v477 = vmul.f32 %v134, %v409
    %v478 = vmul.f32 %v135, %v411
    %v479 = vmul.f32 %v136, %v413
    %v480 = vmul.f32 %v137, %v415
    %v481 = vmul.f32 %v138, %v417
    %v482 = vmul.f32 %v139, %v419
    %v483 = vmul.f32 %v140, %v421
    %v484 = vmul.f32 %v141, %v423
    %v485 = vmul.f32 %v142, %v425
    %v486 = vmul.f32 %v143, %v427
    %v487 = vmul.f32 %v144, %v429
    %v488 = vmul.f32 %v145, %v431
    %v489 = vmul.f32 %v146, %v433
    %v490 = vmul.f32 %v147, %v435
    %v491 = vmul.f32 %v148, %v437
    %v492 = vmul.f32 %v149, %v439
    %v493 = vmul.f32 %v150, %v441
    %v494 = vmul.f32 %v151, %v443
    %v495 = vmul.f32 %v152, %v445
    %v496 = vmul.f32 %v153, %v447
    %v497 = vpack.c.bf16 %v449, %v448
    %v498 = vpack.c.bf16 %v451, %v450
    %v499 = vpack.c.bf16 %v453, %v452
    %v500 = vpack.c.bf16 %v455, %v454
    %v501 = vpack.c.bf16 %v457, %v456
    %v502 = vpack.c.bf16 %v459, %v458
    %v503 = vpack.c.bf16 %v461, %v460
    %v504 = vpack.c.bf16 %v463, %v462
    %v505 = vpack.c.bf16 %v465, %v464
    %v506 = vpack.c.bf16 %v467, %v466
    %v507 = vpack.c.bf16 %v469, %v468
    %v508 = vpack.c.bf16 %v471, %v470
    %v509 = vpack.c.bf16 %v473, %v472
    %v510 = vpack.c.bf16 %v475, %v474
    %v511 = vpack.c.bf16 %v477, %v476
    %v512 = vpack.c.bf16 %v479, %v478
    %v513 = vpack.c.bf16 %v481, %v480
    %v514 = vpack.c.bf16 %v483, %v482
    %v515 = vpack.c.bf16 %v485, %v484
    %v516 = vpack.c.bf16 %v487, %v486
    %v517 = vpack.c.bf16 %v489, %v488
    %v518 = vpack.c.bf16 %v491, %v490
    %v519 = vpack.c.bf16 %v493, %v492
    %v520 = vpack.c.bf16 %v495, %v494
    %v521 = vpack.c.bf16 %v496, %v496
    %v522 = vld [vmem:[#allocation5] sm:$0xf]
    %v523 = vld [vmem:[#allocation5 + $0x4] sm:$0xf]
    %v524 = vld [vmem:[#allocation5 + $0x8] sm:$0xf]
    %v525 = vld [vmem:[#allocation5 + $0xc] sm:$0xf]
    %v526 = vld [vmem:[#allocation5 + $0x10] sm:$0xf]
    %v527 = vld [vmem:[#allocation5 + $0x14] sm:$0xf]
    %v528 = vld [vmem:[#allocation5 + $0x18] sm:$0xf]
    %v529 = vld [vmem:[#allocation5 + $0x1c] sm:$0xf]
    %v530 = vld [vmem:[#allocation5 + $0x20] sm:$0xf]
    %v531 = vld [vmem:[#allocation5 + $0x24] sm:$0xf]
    %v532 = vld [vmem:[#allocation5 + $0x28] sm:$0xf]
    %v533 = vld [vmem:[#allocation5 + $0x2c] sm:$0xf]
    %v534 = vld [vmem:[#allocation5 + $0x30] sm:$0xf]
    %v535 = vld [vmem:[#allocation5 + $0x34] sm:$0xf]
    %v536 = vld [vmem:[#allocation5 + $0x38] sm:$0xf]
    %v537 = vld [vmem:[#allocation5 + $0x3c] sm:$0xf]
    %v538 = vsub.f32 %v105, -3.0
    %v539 = vsub.f32 %v106, -3.0
    %v540 = vsub.f32 %v107, -3.0
    %v541 = vsub.f32 %v108, -3.0
    %v542 = vsub.f32 %v109, -3.0
    %v543 = vsub.f32 %v110, -3.0
    %v544 = vsub.f32 %v111, -3.0
    %v545 = vsub.f32 %v112, -3.0
    %v546 = vsub.f32 %v113, -3.0
    %v547 = vsub.f32 %v114, -3.0
    %v548 = vsub.f32 %v115, -3.0
    %v549 = vsub.f32 %v116, -3.0
    %v550 = vsub.f32 %v117, -3.0
    %v551 = vsub.f32 %v118, -3.0
    %v552 = vsub.f32 %v119, -3.0
    %v553 = vsub.f32 %v120, -3.0
    %v554 = vsub.f32 %v121, -3.0
    %v555 = vsub.f32 %v122, -3.0
    %v556 = vsub.f32 %v123, -3.0
    %v557 = vsub.f32 %v124, -3.0
    %v558 = vsub.f32 %v125, -3.0
    %v559 = vsub.f32 %v126, -3.0
    %v560 = vsub.f32 %v127, -3.0
    %v561 = vsub.f32 %v128, -3.0
    %v562 = vsub.f32 %v129, -3.0
    %v563 = vsub.f32 %v130, -3.0
    %v564 = vsub.f32 %v131, -3.0
    %v565 = vsub.f32 %v132, -3.0
    %v566 = vsub.f32 %v133, -3.0
    %v567 = vsub.f32 %v134, -3.0
    %v568 = vsub.f32 %v135, -3.0
    %v569 = vsub.f32 %v136, -3.0
    %v570 = vsub.f32 %v137, -3.0
    %v571 = vsub.f32 %v138, -3.0
    %v572 = vsub.f32 %v139, -3.0
    %v573 = vsub.f32 %v140, -3.0
    %v574 = vsub.f32 %v141, -3.0
    %v575 = vsub.f32 %v142, -3.0
    %v576 = vsub.f32 %v143, -3.0
    %v577 = vsub.f32 %v144, -3.0
    %v578 = vsub.f32 %v145, -3.0
    %v579 = vsub.f32 %v146, -3.0
    %v580 = vsub.f32 %v147, -3.0
    %v581 = vsub.f32 %v148, -3.0
    %v582 = vsub.f32 %v149, -3.0
    %v583 = vsub.f32 %v150, -3.0
    %v584 = vsub.f32 %v151, -3.0
    %v585 = vsub.f32 %v152, -3.0
    %v586 = vsub.f32 %v153, -3.0
    %v587 = vmul.f32 %v538, 1.5
    %v588 = vmul.f32 %v539, 1.5
    %v589 = vmul.f32 %v540, 1.5
    %v590 = vmul.f32 %v541, 1.5
    %v591 = vmul.f32 %v542, 1.5
    %v592 = vmul.f32 %v543, 1.5
    %v593 = vmul.f32 %v544, 1.5
    %v594 = vmul.f32 %v545, 1.5
    %v595 = vmul.f32 %v546, 1.5
    %v596 = vmul.f32 %v547, 1.5
    %v597 = vmul.f32 %v548, 1.5
    %v598 = vmul.f32 %v549, 1.5
    %v599 = vmul.f32 %v550, 1.5
    %v600 = vmul.f32 %v551, 1.5
    %v601 = vmul.f32 %v552, 1.5
    %v602 = vmul.f32 %v553, 1.5
    %v603 = vmul.f32 %v554, 1.5
    %v604 = vmul.f32 %v555, 1.5
    %v605 = vmul.f32 %v556, 1.5
    %v606 = vmul.f32 %v557, 1.5
    %v607 = vmul.f32 %v558, 1.5
    %v608 = vmul.f32 %v559, 1.5
    %v609 = vmul.f32 %v560, 1.5
    %v610 = vmul.f32 %v561, 1.5
    %v611 = vmul.f32 %v562, 1.5
    %v612 = vmul.f32 %v563, 1.5
    %v613 = vmul.f32 %v564, 1.5
    %v614 = vmul.f32 %v565, 1.5
    %v615 = vmul.f32 %v566, 1.5
    %v616 = vmul.f32 %v567, 1.5
    %v617 = vmul.f32 %v568, 1.5
    %v618 = vmul.f32 %v569, 1.5
    %v619 = vmul.f32 %v570, 1.5
    %v620 = vmul.f32 %v571, 1.5
    %v621 = vmul.f32 %v572, 1.5
    %v622 = vmul.f32 %v573, 1.5
    %v623 = vmul.f32 %v574, 1.5
    %v624 = vmul.f32 %v575, 1.5
    %v625 = vmul.f32 %v576, 1.5
    %v626 = vmul.f32 %v577, 1.5
    %v627 = vmul.f32 %v578, 1.5
    %v628 = vmul.f32 %v579, 1.5
    %v629 = vmul.f32 %v580, 1.5
    %v630 = vmul.f32 %v581, 1.5
    %v631 = vmul.f32 %v582, 1.5
    %v632 = vmul.f32 %v583, 1.5
    %v633 = vmul.f32 %v584, 1.5
    %v634 = vmul.f32 %v585, 1.5
    %v635 = vmul.f32 %v586, 1.5
    %v636 = vfloor.f32 %v587
    %v637 = vfloor.f32 %v588
    %v638 = vfloor.f32 %v589
    %v639 = vfloor.f32 %v590
    %v640 = vfloor.f32 %v591
    %v641 = vfloor.f32 %v592
    %v642 = vfloor.f32 %v593
    %v643 = vfloor.f32 %v594
    %v644 = vfloor.f32 %v595
    %v645 = vfloor.f32 %v596
    %v646 = vfloor.f32 %v597
    %v647 = vfloor.f32 %v598
    %v648 = vfloor.f32 %v599
    %v649 = vfloor.f32 %v600
    %v650 = vfloor.f32 %v601
    %v651 = vfloor.f32 %v602
    %v652 = vfloor.f32 %v603
    %v653 = vfloor.f32 %v604
    %v654 = vfloor.f32 %v605
    %v655 = vfloor.f32 %v606
    %v656 = vfloor.f32 %v607
    %v657 = vfloor.f32 %v608
    %v658 = vfloor.f32 %v609
    %v659 = vfloor.f32 %v610
    %v660 = vfloor.f32 %v611
    %v661 = vfloor.f32 %v612
    %v662 = vfloor.f32 %v613
    %v663 = vfloor.f32 %v614
    %v664 = vfloor.f32 %v615
    %v665 = vfloor.f32 %v616
    %v666 = vfloor.f32 %v617
    %v667 = vfloor.f32 %v618
    %v668 = vfloor.f32 %v619
    %v669 = vfloor.f32 %v620
    %v670 = vfloor.f32 %v621
    %v671 = vfloor.f32 %v622
    %v672 = vfloor.f32 %v623
    %v673 = vfloor.f32 %v624
    %v674 = vfloor.f32 %v625
    %v675 = vfloor.f32 %v626
    %v676 = vfloor.f32 %v627
    %v677 = vfloor.f32 %v628
    %v678 = vfloor.f32 %v629
    %v679 = vfloor.f32 %v630
    %v680 = vfloor.f32 %v631
    %v681 = vfloor.f32 %v632
    %v682 = vfloor.f32 %v633
    %v683 = vfloor.f32 %v634
    %v684 = vfloor.f32 %v635
    %v685 = vsub.f32 %v587, %v636
    %v686 = vsub.f32 %v588, %v637
    %v687 = vsub.f32 %v589, %v638
    %v688 = vsub.f32 %v590, %v639
    %v689 = vsub.f32 %v591, %v640
    %v690 = vsub.f32 %v592, %v641
    %v691 = vsub.f32 %v593, %v642
    %v692 = vsub.f32 %v594, %v643
    %v693 = vsub.f32 %v595, %v644
    %v694 = vsub.f32 %v596, %v645
    %v695 = vsub.f32 %v597, %v646
    %v696 = vsub.f32 %v598, %v647
    %v697 = vsub.f32 %v599, %v648
    %v698 = vsub.f32 %v600, %v649
    %v699 = vsub.f32 %v601, %v650
    %v700 = vsub.f32 %v602, %v651
    %v701 = vsub.f32 %v603, %v652
    %v702 = vsub.f32 %v604, %v653
    %v703 = vsub.f32 %v605, %v654
    %v704 = vsub.f32 %v606, %v655
    %v705 = vsub.f32 %v607, %v656
    %v706 = vsub.f32 %v608, %v657
    %v707 = vsub.f32 %v609, %v658
    %v708 = vsub.f32 %v610, %v659
    %v709 = vsub.f32 %v611, %v660
    %v710 = vsub.f32 %v612, %v661
    %v711 = vsub.f32 %v613, %v662
    %v712 = vsub.f32 %v614, %v663
    %v713 = vsub.f32 %v615, %v664
    %v714 = vsub.f32 %v616, %v665
    %v715 = vsub.f32 %v617, %v666
    %v716 = vsub.f32 %v618, %v667
    %v717 = vsub.f32 %v619, %v668
    %v718 = vsub.f32 %v620, %v669
    %v719 = vsub.f32 %v621, %v670
    %v720 = vsub.f32 %v622, %v671
    %v721 = vsub.f32 %v623, %v672
    %v722 = vsub.f32 %v624, %v673
    %v723 = vsub.f32 %v625, %v674
    %v724 = vsub.f32 %v626, %v675
    %v725 = vsub.f32 %v627, %v676
    %v726 = vsub.f32 %v628, %v677
    %v727 = vsub.f32 %v629, %v678
    %v728 = vsub.f32 %v630, %v679
    %v729 = vsub.f32 %v631, %v680
    %v730 = vsub.f32 %v632, %v681
    %v731 = vsub.f32 %v633, %v682
    %v732 = vsub.f32 %v634, %v683
    %v733 = vsub.f32 %v635, %v684
    %v734 = vmul.f32 %v685, %v685
    %v735 = vmul.f32 %v686, %v686
    %v736 = vmul.f32 %v687, %v687
    %v737 = vmul.f32 %v688, %v688
    %v738 = vmul.f32 %v689, %v689
    %v739 = vmul.f32 %v690, %v690
    %v740 = vmul.f32 %v691, %v691
    %v741 = vmul.f32 %v692, %v692
    %v742 = vmul.f32 %v693, %v693
    %v743 = vmul.f32 %v694, %v694
    %v744 = vmul.f32 %v695, %v695
    %v745 = vmul.f32 %v696, %v696
    %v746 = vmul.f32 %v697, %v697
    %v747 = vmul.f32 %v698, %v698
    %v748 = vmul.f32 %v699, %v699
    %v749 = vmul.f32 %v700, %v700
    %v750 = vmul.f32 %v701, %v701
    %v751 = vmul.f32 %v702, %v702
    %v752 = vmul.f32 %v703, %v703
    %v753 = vmul.f32 %v704, %v704
    %v754 = vmul.f32 %v705, %v705
    %v755 = vmul.f32 %v706, %v706
    %v756 = vmul.f32 %v707, %v707
    %v757 = vmul.f32 %v708, %v708
    %v758 = vmul.f32 %v709, %v709
    %v759 = vmul.f32 %v710, %v710
    %v760 = vmul.f32 %v711, %v711
    %v761 = vmul.f32 %v712, %v712
    %v762 = vmul.f32 %v713, %v713
    %v763 = vmul.f32 %v714, %v714
    %v764 = vmul.f32 %v715, %v715
    %v765 = vmul.f32 %v716, %v716
    %v766 = vmul.f32 %v717, %v717
    %v767 = vmul.f32 %v718, %v718
    %v768 = vmul.f32 %v719, %v719
    %v769 = vmul.f32 %v720, %v720
    %v770 = vmul.f32 %v721, %v721
    %v771 = vmul.f32 %v722, %v722
    %v772 = vmul.f32 %v723, %v723
    %v773 = vmul.f32 %v724, %v724
    %v774 = vmul.f32 %v725, %v725
    %v775 = vmul.f32 %v726, %v726
    %v776 = vmul.f32 %v727, %v727
    %v777 = vmul.f32 %v728, %v728
    %v778 = vmul.f32 %v729, %v729
    %v779 = vmul.f32 %v730, %v730
    %v780 = vmul.f32 %v731, %v731
    %v781 = vmul.f32 %v732, %v732
    %v782 = vmul.f32 %v733, %v733
    %v783 = vmul.f32 %v734, %v685
    %v784 = vmul.f32 %v735, %v686
    %v785 = vmul.f32 %v736, %v687
    %v786 = vmul.f32 %v737, %v688
    %v787 = vmul.f32 %v738, %v689
    %v788 = vmul.f32 %v739, %v690
    %v789 = vmul.f32 %v740, %v691
    %v790 = vmul.f32 %v741, %v692
    %v791 = vmul.f32 %v742, %v693
    %v792 = vmul.f32 %v743, %v694
    %v793 = vmul.f32 %v744, %v695
    %v794 = vmul.f32 %v745, %v696
    %v795 = vmul.f32 %v746, %v697
    %v796 = vmul.f32 %v747, %v698
    %v797 = vmul.f32 %v748, %v699
    %v798 = vmul.f32 %v749, %v700
    %v799 = vmul.f32 %v750, %v701
    %v800 = vmul.f32 %v751, %v702
    %v801 = vmul.f32 %v752, %v703
    %v802 = vmul.f32 %v753, %v704
    %v803 = vmul.f32 %v754, %v705
    %v804 = vmul.f32 %v755, %v706
    %v805 = vmul.f32 %v756, %v707
    %v806 = vmul.f32 %v757, %v708
    %v807 = vmul.f32 %v758, %v709
    %v808 = vmul.f32 %v759, %v710
    %v809 = vmul.f32 %v760, %v711
    %v810 = vmul.f32 %v761, %v712
    %v811 = vmul.f32 %v762, %v713
    %v812 = vmul.f32 %v763, %v714
    %v813 = vmul.f32 %v764, %v715
    %v814 = vmul.f32 %v765, %v716
    %v815 = vmul.f32 %v766, %v717
    %v816 = vmul.f32 %v767, %v718
    %v817 = vmul.f32 %v768, %v719
    %v818 = vmul.f32 %v769, %v720
    %v819 = vmul.f32 %v770, %v721
    %v820 = vmul.f32 %v771, %v722
    %v821 = vmul.f32 %v772, %v723
    %v822 = vmul.f32 %v773, %v724
    %v823 = vmul.f32 %v774, %v725
    %v824 = vmul.f32 %v775, %v726
    %v825 = vmul.f32 %v776, %v727
    %v826 = vmul.f32 %v777, %v728
    %v827 = vmul.f32 %v778, %v729
    %v828 = vmul.f32 %v779, %v730
    %v829 = vmul.f32 %v780, %v731
    %v830 = vmul.f32 %v781, %v732
    %v831 = vmul.f32 %v782, %v733
    %v832 = vsub.f32 1.0, %v685
    %v833 = vsub.f32 1.0, %v686
    %v834 = vsub.f32 1.0, %v687
    %v835 = vsub.f32 1.0, %v688
    %v836 = vsub.f32 1.0, %v689
    %v837 = vsub.f32 1.0, %v690
    %v838 = vsub.f32 1.0, %v691
    %v839 = vsub.f32 1.0, %v692
    %v840 = vsub.f32 1.0, %v693
    %v841 = vsub.f32 1.0, %v694
    %v842 = vsub.f32 1.0, %v695
    %v843 = vsub.f32 1.0, %v696
    %v844 = vsub.f32 1.0, %v697
    %v845 = vsub.f32 1.0, %v698
    %v846 = vsub.f32 1.0, %v699
    %v847 = vsub.f32 1.0, %v700
    %v848 = vsub.f32 1.0, %v701
    %v849 = vsub.f32 1.0, %v702
    %v850 = vsub.f32 1.0, %v703
    %v851 = vsub.f32 1.0, %v704
    %v852 = vsub.f32 1.0, %v705
    %v853 = vsub.f32 1.0, %v706
    %v854 = vsub.f32 1.0, %v707
    %v855 = vsub.f32 1.0, %v708
    %v856 = vsub.f32 1.0, %v709
    %v857 = vsub.f32 1.0, %v710
    %v858 = vsub.f32 1.0, %v711
    %v859 = vsub.f32 1.0, %v712
    %v860 = vsub.f32 1.0, %v713
    %v861 = vsub.f32 1.0, %v714
    %v862 = vsub.f32 1.0, %v715
    %v863 = vsub.f32 1.0, %v716
    %v864 = vsub.f32 1.0, %v717
    %v865 = vsub.f32 1.0, %v718
    %v866 = vsub.f32 1.0, %v719
    %v867 = vsub.f32 1.0, %v720
    %v868 = vsub.f32 1.0, %v721
    %v869 = vsub.f32 1.0, %v722
    %v870 = vsub.f32 1.0, %v723
    %v871 = vsub.f32 1.0, %v724
    %v872 = vsub.f32 1.0, %v725
    %v873 = vsub.f32 1.0, %v726
    %v874 = vsub.f32 1.0, %v727
    %v875 = vsub.f32 1.0, %v728
    %v876 = vsub.f32 1.0, %v729
    %v877 = vsub.f32 1.0, %v730
    %v878 = vsub.f32 1.0, %v731
    %v879 = vsub.f32 1.0, %v732
    %v880 = vsub.f32 1.0, %v733
    %v881 = vmul.f32 %v783, 0.16666667
    %v882 = vmul.f32 %v784, 0.16666667
    %v883 = vmul.f32 %v785, 0.16666667
    %v884 = vmul.f32 %v786, 0.16666667
    %v885 = vmul.f32 %v787, 0.16666667
    %v886 = vmul.f32 %v788, 0.16666667
    %v887 = vmul.f32 %v789, 0.16666667
    %v888 = vmul.f32 %v790, 0.16666667
    %v889 = vmul.f32 %v791, 0.16666667
    %v890 = vmul.f32 %v792, 0.16666667
    %v891 = vmul.f32 %v793, 0.16666667
    %v892 = vmul.f32 %v794, 0.16666667
    %v893 = vmul.f32 %v795, 0.16666667
    %v894 = vmul.f32 %v796, 0.16666667
    %v895 = vmul.f32 %v797, 0.16666667
    %v896 = vmul.f32 %v798, 0.16666667
    %v897 = vmul.f32 %v799, 0.16666667
    %v898 = vmul.f32 %v800, 0.16666667
    %v899 = vmul.f32 %v801, 0.16666667
    %v900 = vmul.f32 %v802, 0.16666667
    %v901 = vmul.f32 %v803, 0.16666667
    %v902 = vmul.f32 %v804, 0.16666667
    %v903 = vmul.f32 %v805, 0.16666667
    %v904 = vmul.f32 %v806, 0.16666667
    %v905 = vmul.f32 %v807, 0.16666667
    %v906 = vmul.f32 %v808, 0.16666667
    %v907 = vmul.f32 %v809, 0.16666667
    %v908 = vmul.f32 %v810, 0.16666667
    %v909 = vmul.f32 %v811, 0.16666667
    %v910 = vmul.f32 %v812, 0.16666667
    %v911 = vmul.f32 %v813, 0.16666667
    %v912 = vmul.f32 %v814, 0.16666667
    %v913 = vmul.f32 %v815, 0.16666667
    %v914 = vmul.f32 %v816, 0.16666667
    %v915 = vmul.f32 %v817, 0.16666667
    %v916 = vmul.f32 %v818, 0.16666667
    %v917 = vmul.f32 %v819, 0.16666667
    %v918 = vmul.f32 %v820, 0.16666667
    %v919 = vmul.f32 %v821, 0.16666667
    %v920 = vmul.f32 %v822, 0.16666667
    %v921 = vmul.f32 %v823, 0.16666667
    %v922 = vmul.f32 %v824, 0.16666667
    %v923 = vmul.f32 %v825, 0.16666667
    %v924 = vmul.f32 %v826, 0.16666667
    %v925 = vmul.f32 %v827, 0.16666667
    %v926 = vmul.f32 %v828, 0.16666667
    %v927 = vmul.f32 %v829, 0.16666667
    %v928 = vmul.f32 %v830, 0.16666667
    %v929 = vmul.f32 %v831, 0.16666667
    %v930 = vmul.f32 %v685, -0.5
    %v931 = vmul.f32 %v686, -0.5
    %v932 = vmul.f32 %v687, -0.5
    %v933 = vmul.f32 %v688, -0.5
    %v934 = vmul.f32 %v689, -0.5
    %v935 = vmul.f32 %v690, -0.5
    %v936 = vmul.f32 %v691, -0.5
    %v937 = vmul.f32 %v692, -0.5
    %v938 = vmul.f32 %v693, -0.5
    %v939 = vmul.f32 %v694, -0.5
    %v940 = vmul.f32 %v695, -0.5
    %v941 = vmul.f32 %v696, -0.5
    %v942 = vmul.f32 %v697, -0.5
    %v943 = vmul.f32 %v698, -0.5
    %v944 = vmul.f32 %v699, -0.5
    %v945 = vmul.f32 %v700, -0.5
    %v946 = vmul.f32 %v701, -0.5
    %v947 = vmul.f32 %v702, -0.5
    %v948 = vmul.f32 %v703, -0.5
    %v949 = vmul.f32 %v704, -0.5
    %v950 = vmul.f32 %v705, -0.5
    %v951 = vmul.f32 %v706, -0.5
    %v952 = vmul.f32 %v707, -0.5
    %v953 = vmul.f32 %v708, -0.5
    %v954 = vmul.f32 %v709, -0.5
    %v955 = vmul.f32 %v710, -0.5
    %v956 = vmul.f32 %v711, -0.5
    %v957 = vmul.f32 %v712, -0.5
    %v958 = vmul.f32 %v713, -0.5
    %v959 = vmul.f32 %v714, -0.5
    %v960 = vmul.f32 %v715, -0.5
    %v961 = vmul.f32 %v716, -0.5
    %v962 = vmul.f32 %v717, -0.5
    %v963 = vmul.f32 %v718, -0.5
    %v964 = vmul.f32 %v719, -0.5
    %v965 = vmul.f32 %v720, -0.5
    %v966 = vmul.f32 %v721, -0.5
    %v967 = vmul.f32 %v722, -0.5
    %v968 = vmul.f32 %v723, -0.5
    %v969 = vmul.f32 %v724, -0.5
    %v970 = vmul.f32 %v725, -0.5
    %v971 = vmul.f32 %v726, -0.5
    %v972 = vmul.f32 %v727, -0.5
    %v973 = vmul.f32 %v728, -0.5
    %v974 = vmul.f32 %v729, -0.5
    %v975 = vmul.f32 %v730, -0.5
    %v976 = vmul.f32 %v731, -0.5
    %v977 = vmul.f32 %v732, -0.5
    %v978 = vmul.f32 %v733, -0.5
    %v979 = vadd.f32 %v930, 0.5
    %v980 = vadd.f32 %v931, 0.5
    %v981 = vadd.f32 %v932, 0.5
    %v982 = vadd.f32 %v933, 0.5
    %v983 = vadd.f32 %v934, 0.5
    %v984 = vadd.f32 %v935, 0.5
    %v985 = vadd.f32 %v936, 0.5
    %v986 = vadd.f32 %v937, 0.5
    %v987 = vadd.f32 %v938, 0.5
    %v988 = vadd.f32 %v939, 0.5
    %v989 = vadd.f32 %v940, 0.5
    %v990 = vadd.f32 %v941, 0.5
    %v991 = vadd.f32 %v942, 0.5
    %v992 = vadd.f32 %v943, 0.5
    %v993 = vadd.f32 %v944, 0.5
    %v994 = vadd.f32 %v945, 0.5
    %v995 = vadd.f32 %v946, 0.5
    %v996 = vadd.f32 %v947, 0.5
    %v997 = vadd.f32 %v948, 0.5
    %v998 = vadd.f32 %v949, 0.5
    %v999 = vadd.f32 %v950, 0.5
    %v1000 = vadd.f32 %v951, 0.5
    %v1001 = vadd.f32 %v952, 0.5
    %v1002 = vadd.f32 %v953, 0.5
    %v1003 = vadd.f32 %v954, 0.5
    %v1004 = vadd.f32 %v955, 0.5
    %v1005 = vadd.f32 %v956, 0.5
    %v1006 = vadd.f32 %v957, 0.5
    %v1007 = vadd.f32 %v958, 0.5
    %v1008 = vadd.f32 %v959, 0.5
    %v1009 = vadd.f32 %v960, 0.5
    %v1010 = vadd.f32 %v961, 0.5
    %v1011 = vadd.f32 %v962, 0.5
    %v1012 = vadd.f32 %v963, 0.5
    %v1013 = vadd.f32 %v964, 0.5
    %v1014 = vadd.f32 %v965, 0.5
    %v1015 = vadd.f32 %v966, 0.5
    %v1016 = vadd.f32 %v967, 0.5
    %v1017 = vadd.f32 %v968, 0.5
    %v1018 = vadd.f32 %v969, 0.5
    %v1019 = vadd.f32 %v970, 0.5
    %v1020 = vadd.f32 %v971, 0.5
    %v1021 = vadd.f32 %v972, 0.5
    %v1022 = vadd.f32 %v973, 0.5
    %v1023 = vadd.f32 %v974, 0.5
    %v1024 = vadd.f32 %v975, 0.5
    %v1025 = vadd.f32 %v976, 0.5
    %v1026 = vadd.f32 %v977, 0.5
    %v1027 = vadd.f32 %v978, 0.5
    %v1028 = vmul.f32 %v979, %v685
    %v1029 = vmul.f32 %v980, %v686
    %v1030 = vmul.f32 %v981, %v687
    %v1031 = vmul.f32 %v982, %v688
    %v1032 = vmul.f32 %v983, %v689
    %v1033 = vmul.f32 %v984, %v690
    %v1034 = vmul.f32 %v985, %v691
    %v1035 = vmul.f32 %v986, %v692
    %v1036 = vmul.f32 %v987, %v693
    %v1037 = vmul.f32 %v988, %v694
    %v1038 = vmul.f32 %v989, %v695
    %v1039 = vmul.f32 %v990, %v696
    %v1040 = vmul.f32 %v991, %v697
    %v1041 = vmul.f32 %v992, %v698
    %v1042 = vmul.f32 %v993, %v699
    %v1043 = vmul.f32 %v994, %v700
    %v1044 = vmul.f32 %v995, %v701
    %v1045 = vmul.f32 %v996, %v702
    %v1046 = vmul.f32 %v997, %v703
    %v1047 = vmul.f32 %v998, %v704
    %v1048 = vmul.f32 %v999, %v705
    %v1049 = vmul.f32 %v1000, %v706
    %v1050 = vmul.f32 %v1001, %v707
    %v1051 = vmul.f32 %v1002, %v708
    %v1052 = vmul.f32 %v1003, %v709
    %v1053 = vmul.f32 %v1004, %v710
    %v1054 = vmul.f32 %v1005, %v711
    %v1055 = vmul.f32 %v1006, %v712
    %v1056 = vmul.f32 %v1007, %v713
    %v1057 = vmul.f32 %v1008, %v714
    %v1058 = vmul.f32 %v1009, %v715
    %v1059 = vmul.f32 %v1010, %v716
    %v1060 = vmul.f32 %v1011, %v717
    %v1061 = vmul.f32 %v1012, %v718
    %v1062 = vmul.f32 %v1013, %v719
    %v1063 = vmul.f32 %v1014, %v720
    %v1064 = vmul.f32 %v1015, %v721
    %v1065 = vmul.f32 %v1016, %v722
    %v1066 = vmul.f32 %v1017, %v723
    %v1067 = vmul.f32 %v1018, %v724
    %v1068 = vmul.f32 %v1019, %v725
    %v1069 = vmul.f32 %v1020, %v726
    %v1070 = vmul.f32 %v1021, %v727
    %v1071 = vmul.f32 %v1022, %v728
    %v1072 = vmul.f32 %v1023, %v729
    %v1073 = vmul.f32 %v1024, %v730
    %v1074 = vmul.f32 %v1025, %v731
    %v1075 = vmul.f32 %v1026, %v732
    %v1076 = vmul.f32 %v1027, %v733
    %v1077 = vadd.f32 %v1028, 0.5
    %v1078 = vadd.f32 %v1029, 0.5
    %v1079 = vadd.f32 %v1030, 0.5
    %v1080 = vadd.f32 %v1031, 0.5
    %v1081 = vadd.f32 %v1032, 0.5
    %v1082 = vadd.f32 %v1033, 0.5
    %v1083 = vadd.f32 %v1034, 0.5
    %v1084 = vadd.f32 %v1035, 0.5
    %v1085 = vadd.f32 %v1036, 0.5
    %v1086 = vadd.f32 %v1037, 0.5
    %v1087 = vadd.f32 %v1038, 0.5
    %v1088 = vadd.f32 %v1039, 0.5
    %v1089 = vadd.f32 %v1040, 0.5
    %v1090 = vadd.f32 %v1041, 0.5
    %v1091 = vadd.f32 %v1042, 0.5
    %v1092 = vadd.f32 %v1043, 0.5
    %v1093 = vadd.f32 %v1044, 0.5
    %v1094 = vadd.f32 %v1045, 0.5
    %v1095 = vadd.f32 %v1046, 0.5
    %v1096 = vadd.f32 %v1047, 0.5
    %v1097 = vadd.f32 %v1048, 0.5
    %v1098 = vadd.f32 %v1049, 0.5
    %v1099 = vadd.f32 %v1050, 0.5
    %v1100 = vadd.f32 %v1051, 0.5
    %v1101 = vadd.f32 %v1052, 0.5
    %v1102 = vadd.f32 %v1053, 0.5
    %v1103 = vadd.f32 %v1054, 0.5
    %v1104 = vadd.f32 %v1055, 0.5
    %v1105 = vadd.f32 %v1056, 0.5
    %v1106 = vadd.f32 %v1057, 0.5
    %v1107 = vadd.f32 %v1058, 0.5
    %v1108 = vadd.f32 %v1059, 0.5
    %v1109 = vadd.f32 %v1060, 0.5
    %v1110 = vadd.f32 %v1061, 0.5
    %v1111 = vadd.f32 %v1062, 0.5
    %v1112 = vadd.f32 %v1063, 0.5
    %v1113 = vadd.f32 %v1064, 0.5
    %v1114 = vadd.f32 %v1065, 0.5
    %v1115 = vadd.f32 %v1066, 0.5
    %v1116 = vadd.f32 %v1067, 0.5
    %v1117 = vadd.f32 %v1068, 0.5
    %v1118 = vadd.f32 %v1069, 0.5
    %v1119 = vadd.f32 %v1070, 0.5
    %v1120 = vadd.f32 %v1071, 0.5
    %v1121 = vadd.f32 %v1072, 0.5
    %v1122 = vadd.f32 %v1073, 0.5
    %v1123 = vadd.f32 %v1074, 0.5
    %v1124 = vadd.f32 %v1075, 0.5
    %v1125 = vadd.f32 %v1076, 0.5
    %v1126 = vmul.f32 %v1077, %v685
    %v1127 = vmul.f32 %v1078, %v686
    %v1128 = vmul.f32 %v1079, %v687
    %v1129 = vmul.f32 %v1080, %v688
    %v1130 = vmul.f32 %v1081, %v689
    %v1131 = vmul.f32 %v1082, %v690
    %v1132 = vmul.f32 %v1083, %v691
    %v1133 = vmul.f32 %v1084, %v692
    %v1134 = vmul.f32 %v1085, %v693
    %v1135 = vmul.f32 %v1086, %v694
    %v1136 = vmul.f32 %v1087, %v695
    %v1137 = vmul.f32 %v1088, %v696
    %v1138 = vmul.f32 %v1089, %v697
    %v1139 = vmul.f32 %v1090, %v698
    %v1140 = vmul.f32 %v1091, %v699
    %v1141 = vmul.f32 %v1092, %v700
    %v1142 = vmul.f32 %v1093, %v701
    %v1143 = vmul.f32 %v1094, %v702
    %v1144 = vmul.f32 %v1095, %v703
    %v1145 = vmul.f32 %v1096, %v704
    %v1146 = vmul.f32 %v1097, %v705
    %v1147 = vmul.f32 %v1098, %v706
    %v1148 = vmul.f32 %v1099, %v707
    %v1149 = vmul.f32 %v1100, %v708
    %v1150 = vmul.f32 %v1101, %v709
    %v1151 = vmul.f32 %v1102, %v710
    %v1152 = vmul.f32 %v1103, %v711
    %v1153 = vmul.f32 %v1104, %v712
    %v1154 = vmul.f32 %v1105, %v713
    %v1155 = vmul.f32 %v1106, %v714
    %v1156 = vmul.f32 %v1107, %v715
    %v1157 = vmul.f32 %v1108, %v716
    %v1158 = vmul.f32 %v1109, %v717
    %v1159 = vmul.f32 %v1110, %v718
    %v1160 = vmul.f32 %v1111, %v719
    %v1161 = vmul.f32 %v1112, %v720
    %v1162 = vmul.f32 %v1113, %v721
    %v1163 = vmul.f32 %v1114, %v722
    %v1164 = vmul.f32 %v1115, %v723
    %v1165 = vmul.f32 %v1116, %v724
    %v1166 = vmul.f32 %v1117, %v725
    %v1167 = vmul.f32 %v1118, %v726
    %v1168 = vmul.f32 %v1119, %v727
    %v1169 = vmul.f32 %v1120, %v728
    %v1170 = vmul.f32 %v1121, %v729
    %v1171 = vmul.f32 %v1122, %v730
    %v1172 = vmul.f32 %v1123, %v731
    %v1173 = vmul.f32 %v1124, %v732
    %v1174 = vmul.f32 %v1125, %v733
    %v1175 = vadd.f32 %v1126, 0.16666667
    %v1176 = vadd.f32 %v1127, 0.16666667
    %v1177 = vadd.f32 %v1128, 0.16666667
    %v1178 = vadd.f32 %v1129, 0.16666667
    %v1179 = vadd.f32 %v1130, 0.16666667
    %v1180 = vadd.f32 %v1131, 0.16666667
    %v1181 = vadd.f32 %v1132, 0.16666667
    %v1182 = vadd.f32 %v1133, 0.16666667
    %v1183 = vadd.f32 %v1134, 0.16666667
    %v1184 = vadd.f32 %v1135, 0.16666667
    %v1185 = vadd.f32 %v1136, 0.16666667
    %v1186 = vadd.f32 %v1137, 0.16666667
    %v1187 = vadd.f32 %v1138, 0.16666667
    %v1188 = vadd.f32 %v1139, 0.16666667
    %v1189 = vadd.f32 %v1140, 0.16666667
    %v1190 = vadd.f32 %v1141, 0.16666667
    %v1191 = vadd.f32 %v1142, 0.16666667
    %v1192 = vadd.f32 %v1143, 0.16666667
    %v1193 = vadd.f32 %v1144, 0.16666667
    %v1194 = vadd.f32 %v1145, 0.16666667
    %v1195 = vadd.f32 %v1146, 0.16666667
    %v1196 = vadd.f32 %v1147, 0.16666667
    %v1197 = vadd.f32 %v1148, 0.16666667
    %v1198 = vadd.f32 %v1149, 0.16666667
    %v1199 = vadd.f32 %v1150, 0.16666667
    %v1200 = vadd.f32 %v1151, 0.16666667
    %v1201 = vadd.f32 %v1152, 0.16666667
    %v1202 = vadd.f32 %v1153, 0.16666667
    %v1203 = vadd.f32 %v1154, 0.16666667
    %v1204 = vadd.f32 %v1155, 0.16666667
    %v1205 = vadd.f32 %v1156, 0.16666667
    %v1206 = vadd.f32 %v1157, 0.16666667
    %v1207 = vadd.f32 %v1158, 0.16666667
    %v1208 = vadd.f32 %v1159, 0.16666667
    %v1209 = vadd.f32 %v1160, 0.16666667
    %v1210 = vadd.f32 %v1161, 0.16666667
    %v1211 = vadd.f32 %v1162, 0.16666667
    %v1212 = vadd.f32 %v1163, 0.16666667
    %v1213 = vadd.f32 %v1164, 0.16666667
    %v1214 = vadd.f32 %v1165, 0.16666667
    %v1215 = vadd.f32 %v1166, 0.16666667
    %v1216 = vadd.f32 %v1167, 0.16666667
    %v1217 = vadd.f32 %v1168, 0.16666667
    %v1218 = vadd.f32 %v1169, 0.16666667
    %v1219 = vadd.f32 %v1170, 0.16666667
    %v1220 = vadd.f32 %v1171, 0.16666667
    %v1221 = vadd.f32 %v1172, 0.16666667
    %v1222 = vadd.f32 %v1173, 0.16666667
    %v1223 = vadd.f32 %v1174, 0.16666667
    %v1224 = vmul.f32 %v832, %v832
    %v1225 = vmul.f32 %v833, %v833
    %v1226 = vmul.f32 %v834, %v834
    %v1227 = vmul.f32 %v835, %v835
    %v1228 = vmul.f32 %v836, %v836
    %v1229 = vmul.f32 %v837, %v837
    %v1230 = vmul.f32 %v838, %v838
    %v1231 = vmul.f32 %v839, %v839
    %v1232 = vmul.f32 %v840, %v840
    %v1233 = vmul.f32 %v841, %v841
    %v1234 = vmul.f32 %v842, %v842
    %v1235 = vmul.f32 %v843, %v843
    %v1236 = vmul.f32 %v844, %v844
    %v1237 = vmul.f32 %v845, %v845
    %v1238 = vmul.f32 %v846, %v846
    %v1239 = vmul.f32 %v847, %v847
    %v1240 = vmul.f32 %v848, %v848
    %v1241 = vmul.f32 %v849, %v849
    %v1242 = vmul.f32 %v850, %v850
    %v1243 = vmul.f32 %v851, %v851
    %v1244 = vmul.f32 %v852, %v852
    %v1245 = vmul.f32 %v853, %v853
    %v1246 = vmul.f32 %v854, %v854
    %v1247 = vmul.f32 %v855, %v855
    %v1248 = vmul.f32 %v856, %v856
    %v1249 = vmul.f32 %v857, %v857
    %v1250 = vmul.f32 %v858, %v858
    %v1251 = vmul.f32 %v859, %v859
    %v1252 = vmul.f32 %v860, %v860
    %v1253 = vmul.f32 %v861, %v861
    %v1254 = vmul.f32 %v862, %v862
    %v1255 = vmul.f32 %v863, %v863
    %v1256 = vmul.f32 %v864, %v864
    %v1257 = vmul.f32 %v865, %v865
    %v1258 = vmul.f32 %v866, %v866
    %v1259 = vmul.f32 %v867, %v867
    %v1260 = vmul.f32 %v868, %v868
    %v1261 = vmul.f32 %v869, %v869
    %v1262 = vmul.f32 %v870, %v870
    %v1263 = vmul.f32 %v871, %v871
    %v1264 = vmul.f32 %v872, %v872
    %v1265 = vmul.f32 %v873, %v873
    %v1266 = vmul.f32 %v874, %v874
    %v1267 = vmul.f32 %v875, %v875
    %v1268 = vmul.f32 %v876, %v876
    %v1269 = vmul.f32 %v877, %v877
    %v1270 = vmul.f32 %v878, %v878
    %v1271 = vmul.f32 %v879, %v879
    %v1272 = vmul.f32 %v880, %v880
    %v1273 = vmul.f32 %v1224, %v832
    %v1274 = vmul.f32 %v1225, %v833
    %v1275 = vmul.f32 %v1226, %v834
    %v1276 = vmul.f32 %v1227, %v835
    %v1277 = vmul.f32 %v1228, %v836
    %v1278 = vmul.f32 %v1229, %v837
    %v1279 = vmul.f32 %v1230, %v838
    %v1280 = vmul.f32 %v1231, %v839
    %v1281 = vmul.f32 %v1232, %v840
    %v1282 = vmul.f32 %v1233, %v841
    %v1283 = vmul.f32 %v1234, %v842
    %v1284 = vmul.f32 %v1235, %v843
    %v1285 = vmul.f32 %v1236, %v844
    %v1286 = vmul.f32 %v1237, %v845
    %v1287 = vmul.f32 %v1238, %v846
    %v1288 = vmul.f32 %v1239, %v847
    %v1289 = vmul.f32 %v1240, %v848
    %v1290 = vmul.f32 %v1241, %v849
    %v1291 = vmul.f32 %v1242, %v850
    %v1292 = vmul.f32 %v1243, %v851
    %v1293 = vmul.f32 %v1244, %v852
    %v1294 = vmul.f32 %v1245, %v853
    %v1295 = vmul.f32 %v1246, %v854
    %v1296 = vmul.f32 %v1247, %v855
    %v1297 = vmul.f32 %v1248, %v856
    %v1298 = vmul.f32 %v1249, %v857
    %v1299 = vmul.f32 %v1250, %v858
    %v1300 = vmul.f32 %v1251, %v859
    %v1301 = vmul.f32 %v1252, %v860
    %v1302 = vmul.f32 %v1253, %v861
    %v1303 = vmul.f32 %v1254, %v862
    %v1304 = vmul.f32 %v1255, %v863
    %v1305 = vmul.f32 %v1256, %v864
    %v1306 = vmul.f32 %v1257, %v865
    %v1307 = vmul.f32 %v1258, %v866
    %v1308 = vmul.f32 %v1259, %v867
    %v1309 = vmul.f32 %v1260, %v868
    %v1310 = vmul.f32 %v1261, %v869
    %v1311 = vmul.f32 %v1262, %v870
    %v1312 = vmul.f32 %v1263, %v871
    %v1313 = vmul.f32 %v1264, %v872
    %v1314 = vmul.f32 %v1265, %v873
    %v1315 = vmul.f32 %v1266, %v874
    %v1316 = vmul.f32 %v1267, %v875
    %v1317 = vmul.f32 %v1268, %v876
    %v1318 = vmul.f32 %v1269, %v877
    %v1319 = vmul.f32 %v1270, %v878
    %v1320 = vmul.f32 %v1271, %v879
    %v1321 = vmul.f32 %v1272, %v880
    %v1322 = vmul.f32 %v1273, 0.16666667
    %v1323 = vmul.f32 %v1274, 0.16666667
    %v1324 = vmul.f32 %v1275, 0.16666667
    %v1325 = vmul.f32 %v1276, 0.16666667
    %v1326 = vmul.f32 %v1277, 0.16666667
    %v1327 = vmul.f32 %v1278, 0.16666667
    %v1328 = vmul.f32 %v1279, 0.16666667
    %v1329 = vmul.f32 %v1280, 0.16666667
    %v1330 = vmul.f32 %v1281, 0.16666667
    %v1331 = vmul.f32 %v1282, 0.16666667
    %v1332 = vmul.f32 %v1283, 0.16666667
    %v1333 = vmul.f32 %v1284, 0.16666667
    %v1334 = vmul.f32 %v1285, 0.16666667
    %v1335 = vmul.f32 %v1286, 0.16666667
    %v1336 = vmul.f32 %v1287, 0.16666667
    %v1337 = vmul.f32 %v1288, 0.16666667
    %v1338 = vmul.f32 %v1289, 0.16666667
    %v1339 = vmul.f32 %v1290, 0.16666667
    %v1340 = vmul.f32 %v1291, 0.16666667
    %v1341 = vmul.f32 %v1292, 0.16666667
    %v1342 = vmul.f32 %v1293, 0.16666667
    %v1343 = vmul.f32 %v1294, 0.16666667
    %v1344 = vmul.f32 %v1295, 0.16666667
    %v1345 = vmul.f32 %v1296, 0.16666667
    %v1346 = vmul.f32 %v1297, 0.16666667
    %v1347 = vmul.f32 %v1298, 0.16666667
    %v1348 = vmul.f32 %v1299, 0.16666667
    %v1349 = vmul.f32 %v1300, 0.16666667
    %v1350 = vmul.f32 %v1301, 0.16666667
    %v1351 = vmul.f32 %v1302, 0.16666667
    %v1352 = vmul.f32 %v1303, 0.16666667
    %v1353 = vmul.f32 %v1304, 0.16666667
    %v1354 = vmul.f32 %v1305, 0.16666667
    %v1355 = vmul.f32 %v1306, 0.16666667
    %v1356 = vmul.f32 %v1307, 0.16666667
    %v1357 = vmul.f32 %v1308, 0.16666667
    %v1358 = vmul.f32 %v1309, 0.16666667
    %v1359 = vmul.f32 %v1310, 0.16666667
    %v1360 = vmul.f32 %v1311, 0.16666667
    %v1361 = vmul.f32 %v1312, 0.16666667
    %v1362 = vmul.f32 %v1313, 0.16666667
    %v1363 = vmul.f32 %v1314, 0.16666667
    %v1364 = vmul.f32 %v1315, 0.16666667
    %v1365 = vmul.f32 %v1316, 0.16666667
    %v1366 = vmul.f32 %v1317, 0.16666667
    %v1367 = vmul.f32 %v1318, 0.16666667
    %v1368 = vmul.f32 %v1319, 0.16666667
    %v1369 = vmul.f32 %v1320, 0.16666667
    %v1370 = vmul.f32 %v1321, 0.16666667
    %v1371 = vsub.f32 1.0, %v881
    %v1372 = vsub.f32 1.0, %v882
    %v1373 = vsub.f32 1.0, %v883
    %v1374 = vsub.f32 1.0, %v884
    %v1375 = vsub.f32 1.0, %v885
    %v1376 = vsub.f32 1.0, %v886
    %v1377 = vsub.f32 1.0, %v887
    %v1378 = vsub.f32 1.0, %v888
    %v1379 = vsub.f32 1.0, %v889
    %v1380 = vsub.f32 1.0, %v890
    %v1381 = vsub.f32 1.0, %v891
    %v1382 = vsub.f32 1.0, %v892
    %v1383 = vsub.f32 1.0, %v893
    %v1384 = vsub.f32 1.0, %v894
    %v1385 = vsub.f32 1.0, %v895
    %v1386 = vsub.f32 1.0, %v896
    %v1387 = vsub.f32 1.0, %v897
    %v1388 = vsub.f32 1.0, %v898
    %v1389 = vsub.f32 1.0, %v899
    %v1390 = vsub.f32 1.0, %v900
    %v1391 = vsub.f32 1.0, %v901
    %v1392 = vsub.f32 1.0, %v902
    %v1393 = vsub.f32 1.0, %v903
    %v1394 = vsub.f32 1.0, %v904
    %v1395 = vsub.f32 1.0, %v905
    %v1396 = vsub.f32 1.0, %v906
    %v1397 = vsub.f32 1.0, %v907
    %v1398 = vsub.f32 1.0, %v908
    %v1399 = vsub.f32 1.0, %v909
    %v1400 = vsub.f32 1.0, %v910
    %v1401 = vsub.f32 1.0, %v911
    %v1402 = vsub.f32 1.0, %v912
    %v1403 = vsub.f32 1.0, %v913
    %v1404 = vsub.f32 1.0, %v914
    %v1405 = vsub.f32 1.0, %v915
    %v1406 = vsub.f32 1.0, %v916
    %v1407 = vsub.f32 1.0, %v917
    %v1408 = vsub.f32 1.0, %v918
    %v1409 = vsub.f32 1.0, %v919
    %v1410 = vsub.f32 1.0, %v920
    %v1411 = vsub.f32 1.0, %v921
    %v1412 = vsub.f32 1.0, %v922
    %v1413 = vsub.f32 1.0, %v923
    %v1414 = vsub.f32 1.0, %v924
    %v1415 = vsub.f32 1.0, %v925
    %v1416 = vsub.f32 1.0, %v926
    %v1417 = vsub.f32 1.0, %v927
    %v1418 = vsub.f32 1.0, %v928
    %v1419 = vsub.f32 1.0, %v929
    %v1420 = vsub.f32 %v1371, %v1175
    %v1421 = vsub.f32 %v1372, %v1176
    %v1422 = vsub.f32 %v1373, %v1177
    %v1423 = vsub.f32 %v1374, %v1178
    %v1424 = vsub.f32 %v1375, %v1179
    %v1425 = vsub.f32 %v1376, %v1180
    %v1426 = vsub.f32 %v1377, %v1181
    %v1427 = vsub.f32 %v1378, %v1182
    %v1428 = vsub.f32 %v1379, %v1183
    %v1429 = vsub.f32 %v1380, %v1184
    %v1430 = vsub.f32 %v1381, %v1185
    %v1431 = vsub.f32 %v1382, %v1186
    %v1432 = vsub.f32 %v1383, %v1187
    %v1433 = vsub.f32 %v1384, %v1188
    %v1434 = vsub.f32 %v1385, %v1189
    %v1435 = vsub.f32 %v1386, %v1190
    %v1436 = vsub.f32 %v1387, %v1191
    %v1437 = vsub.f32 %v1388, %v1192
    %v1438 = vsub.f32 %v1389, %v1193
    %v1439 = vsub.f32 %v1390, %v1194
    %v1440 = vsub.f32 %v1391, %v1195
    %v1441 = vsub.f32 %v1392, %v1196
    %v1442 = vsub.f32 %v1393, %v1197
    %v1443 = vsub.f32 %v1394, %v1198
    %v1444 = vsub.f32 %v1395, %v1199
    %v1445 = vsub.f32 %v1396, %v1200
    %v1446 = vsub.f32 %v1397, %v1201
    %v1447 = vsub.f32 %v1398, %v1202
    %v1448 = vsub.f32 %v1399, %v1203
    %v1449 = vsub.f32 %v1400, %v1204
    %v1450 = vsub.f32 %v1401, %v1205
    %v1451 = vsub.f32 %v1402, %v1206
    %v1452 = vsub.f32 %v1403, %v1207
    %v1453 = vsub.f32 %v1404, %v1208
    %v1454 = vsub.f32 %v1405, %v1209
    %v1455 = vsub.f32 %v1406, %v1210
    %v1456 = vsub.f32 %v1407, %v1211
    %v1457 = vsub.f32 %v1408, %v1212
    %v1458 = vsub.f32 %v1409, %v1213
    %v1459 = vsub.f32 %v1410, %v1214
    %v1460 = vsub.f32 %v1411, %v1215
    %v1461 = vsub.f32 %v1412, %v1216
    %v1462 = vsub.f32 %v1413, %v1217
    %v1463 = vsub.f32 %v1414, %v1218
    %v1464 = vsub.f32 %v1415, %v1219
    %v1465 = vsub.f32 %v1416, %v1220
    %v1466 = vsub.f32 %v1417, %v1221
    %v1467 = vsub.f32 %v1418, %v1222
    %v1468 = vsub.f32 %v1419, %v1223
    %v1469 = vsub.f32 %v1420, %v1322
    %v1470 = vsub.f32 %v1421, %v1323
    %v1471 = vsub.f32 %v1422, %v1324
    %v1472 = vsub.f32 %v1423, %v1325
    %v1473 = vsub.f32 %v1424, %v1326
    %v1474 = vsub.f32 %v1425, %v1327
    %v1475 = vsub.f32 %v1426, %v1328
    %v1476 = vsub.f32 %v1427, %v1329
    %v1477 = vsub.f32 %v1428, %v1330
    %v1478 = vsub.f32 %v1429, %v1331
    %v1479 = vsub.f32 %v1430, %v1332
    %v1480 = vsub.f32 %v1431, %v1333
    %v1481 = vsub.f32 %v1432, %v1334
    %v1482 = vsub.f32 %v1433, %v1335
    %v1483 = vsub.f32 %v1434, %v1336
    %v1484 = vsub.f32 %v1435, %v1337
    %v1485 = vsub.f32 %v1436, %v1338
    %v1486 = vsub.f32 %v1437, %v1339
    %v1487 = vsub.f32 %v1438, %v1340
    %v1488 = vsub.f32 %v1439, %v1341
    %v1489 = vsub.f32 %v1440, %v1342
    %v1490 = vsub.f32 %v1441, %v1343
    %v1491 = vsub.f32 %v1442, %v1344
    %v1492 = vsub.f32 %v1443, %v1345
    %v1493 = vsub.f32 %v1444, %v1346
    %v1494 = vsub.f32 %v1445, %v1347
    %v1495 = vsub.f32 %v1446, %v1348
    %v1496 = vsub.f32 %v1447, %v1349
    %v1497 = vsub.f32 %v1448, %v1350
    %v1498 = vsub.f32 %v1449, %v1351
    %v1499 = vsub.f32 %v1450, %v1352
    %v1500 = vsub.f32 %v1451, %v1353
    %v1501 = vsub.f32 %v1452, %v1354
    %v1502 = vsub.f32 %v1453, %v1355
    %v1503 = vsub.f32 %v1454, %v1356
    %v1504 = vsub.f32 %v1455, %v1357
    %v1505 = vsub.f32 %v1456, %v1358
    %v1506 = vsub.f32 %v1457, %v1359
    %v1507 = vsub.f32 %v1458, %v1360
    %v1508 = vsub.f32 %v1459, %v1361
    %v1509 = vsub.f32 %v1460, %v1362
    %v1510 = vsub.f32 %v1461, %v1363
    %v1511 = vsub.f32 %v1462, %v1364
    %v1512 = vsub.f32 %v1463, %v1365
    %v1513 = vsub.f32 %v1464, %v1366
    %v1514 = vsub.f32 %v1465, %v1367
    %v1515 = vsub.f32 %v1466, %v1368
    %v1516 = vsub.f32 %v1467, %v1369
    %v1517 = vsub.f32 %v1468, %v1370
    %vm1518 = vcmp.eq.f32.partialorder %v636, 0.0
    %vm1519 = vcmp.eq.f32.partialorder %v637, 0.0
    %vm1520 = vcmp.eq.f32.partialorder %v638, 0.0
    %vm1521 = vcmp.eq.f32.partialorder %v639, 0.0
    %vm1522 = vcmp.eq.f32.partialorder %v640, 0.0
    %vm1523 = vcmp.eq.f32.partialorder %v641, 0.0
    %vm1524 = vcmp.eq.f32.partialorder %v642, 0.0
    %vm1525 = vcmp.eq.f32.partialorder %v643, 0.0
    %vm1526 = vcmp.eq.f32.partialorder %v644, 0.0
    %vm1527 = vcmp.eq.f32.partialorder %v645, 0.0
    %vm1528 = vcmp.eq.f32.partialorder %v646, 0.0
    %vm1529 = vcmp.eq.f32.partialorder %v647, 0.0
    %vm1530 = vcmp.eq.f32.partialorder %v648, 0.0
    %vm1531 = vcmp.eq.f32.partialorder %v649, 0.0
    %vm1532 = vcmp.eq.f32.partialorder %v650, 0.0
    %vm1533 = vcmp.eq.f32.partialorder %v651, 0.0
    %vm1534 = vcmp.eq.f32.partialorder %v652, 0.0
    %vm1535 = vcmp.eq.f32.partialorder %v653, 0.0
    %vm1536 = vcmp.eq.f32.partialorder %v654, 0.0
    %vm1537 = vcmp.eq.f32.partialorder %v655, 0.0
    %vm1538 = vcmp.eq.f32.partialorder %v656, 0.0
    %vm1539 = vcmp.eq.f32.partialorder %v657, 0.0
    %vm1540 = vcmp.eq.f32.partialorder %v658, 0.0
    %vm1541 = vcmp.eq.f32.partialorder %v659, 0.0
    %vm1542 = vcmp.eq.f32.partialorder %v660, 0.0
    %vm1543 = vcmp.eq.f32.partialorder %v661, 0.0
    %vm1544 = vcmp.eq.f32.partialorder %v662, 0.0
    %vm1545 = vcmp.eq.f32.partialorder %v663, 0.0
    %vm1546 = vcmp.eq.f32.partialorder %v664, 0.0
    %vm1547 = vcmp.eq.f32.partialorder %v665, 0.0
    %vm1548 = vcmp.eq.f32.partialorder %v666, 0.0
    %vm1549 = vcmp.eq.f32.partialorder %v667, 0.0
    %vm1550 = vcmp.eq.f32.partialorder %v668, 0.0
    %vm1551 = vcmp.eq.f32.partialorder %v669, 0.0
    %vm1552 = vcmp.eq.f32.partialorder %v670, 0.0
    %vm1553 = vcmp.eq.f32.partialorder %v671, 0.0
    %vm1554 = vcmp.eq.f32.partialorder %v672, 0.0
    %vm1555 = vcmp.eq.f32.partialorder %v673, 0.0
    %vm1556 = vcmp.eq.f32.partialorder %v674, 0.0
    %vm1557 = vcmp.eq.f32.partialorder %v675, 0.0
    %vm1558 = vcmp.eq.f32.partialorder %v676, 0.0
    %vm1559 = vcmp.eq.f32.partialorder %v677, 0.0
    %vm1560 = vcmp.eq.f32.partialorder %v678, 0.0
    %vm1561 = vcmp.eq.f32.partialorder %v679, 0.0
    %vm1562 = vcmp.eq.f32.partialorder %v680, 0.0
    %vm1563 = vcmp.eq.f32.partialorder %v681, 0.0
    %vm1564 = vcmp.eq.f32.partialorder %v682, 0.0
    %vm1565 = vcmp.eq.f32.partialorder %v683, 0.0
    %vm1566 = vcmp.eq.f32.partialorder %v684, 0.0
    %vm1567 = vcmp.eq.f32.partialorder %v636, 1.0
    %vm1568 = vcmp.eq.f32.partialorder %v637, 1.0
    %vm1569 = vcmp.eq.f32.partialorder %v638, 1.0
    %vm1570 = vcmp.eq.f32.partialorder %v639, 1.0
    %vm1571 = vcmp.eq.f32.partialorder %v640, 1.0
    %vm1572 = vcmp.eq.f32.partialorder %v641, 1.0
    %vm1573 = vcmp.eq.f32.partialorder %v642, 1.0
    %vm1574 = vcmp.eq.f32.partialorder %v643, 1.0
    %vm1575 = vcmp.eq.f32.partialorder %v644, 1.0
    %vm1576 = vcmp.eq.f32.partialorder %v645, 1.0
    %vm1577 = vcmp.eq.f32.partialorder %v646, 1.0
    %vm1578 = vcmp.eq.f32.partialorder %v647, 1.0
    %vm1579 = vcmp.eq.f32.partialorder %v648, 1.0
    %vm1580 = vcmp.eq.f32.partialorder %v649, 1.0
    %vm1581 = vcmp.eq.f32.partialorder %v650, 1.0
    %vm1582 = vcmp.eq.f32.partialorder %v651, 1.0
    %vm1583 = vcmp.eq.f32.partialorder %v652, 1.0
    %vm1584 = vcmp.eq.f32.partialorder %v653, 1.0
    %vm1585 = vcmp.eq.f32.partialorder %v654, 1.0
    %vm1586 = vcmp.eq.f32.partialorder %v655, 1.0
    %vm1587 = vcmp.eq.f32.partialorder %v656, 1.0
    %vm1588 = vcmp.eq.f32.partialorder %v657, 1.0
    %vm1589 = vcmp.eq.f32.partialorder %v658, 1.0
    %vm1590 = vcmp.eq.f32.partialorder %v659, 1.0
    %vm1591 = vcmp.eq.f32.partialorder %v660, 1.0
    %vm1592 = vcmp.eq.f32.partialorder %v661, 1.0
    %vm1593 = vcmp.eq.f32.partialorder %v662, 1.0
    %vm1594 = vcmp.eq.f32.partialorder %v663, 1.0
    %vm1595 = vcmp.eq.f32.partialorder %v664, 1.0
    %vm1596 = vcmp.eq.f32.partialorder %v665, 1.0
    %vm1597 = vcmp.eq.f32.partialorder %v666, 1.0
    %vm1598 = vcmp.eq.f32.partialorder %v667, 1.0
    %vm1599 = vcmp.eq.f32.partialorder %v668, 1.0
    %vm1600 = vcmp.eq.f32.partialorder %v669, 1.0
    %vm1601 = vcmp.eq.f32.partialorder %v670, 1.0
    %vm1602 = vcmp.eq.f32.partialorder %v671, 1.0
    %vm1603 = vcmp.eq.f32.partialorder %v672, 1.0
    %vm1604 = vcmp.eq.f32.partialorder %v673, 1.0
    %vm1605 = vcmp.eq.f32.partialorder %v674, 1.0
    %vm1606 = vcmp.eq.f32.partialorder %v675, 1.0
    %vm1607 = vcmp.eq.f32.partialorder %v676, 1.0
    %vm1608 = vcmp.eq.f32.partialorder %v677, 1.0
    %vm1609 = vcmp.eq.f32.partialorder %v678, 1.0
    %vm1610 = vcmp.eq.f32.partialorder %v679, 1.0
    %vm1611 = vcmp.eq.f32.partialorder %v680, 1.0
    %vm1612 = vcmp.eq.f32.partialorder %v681, 1.0
    %vm1613 = vcmp.eq.f32.partialorder %v682, 1.0
    %vm1614 = vcmp.eq.f32.partialorder %v683, 1.0
    %vm1615 = vcmp.eq.f32.partialorder %v684, 1.0
    %vm1616 = vcmp.eq.f32.partialorder %v636, 2.0
    %vm1617 = vcmp.eq.f32.partialorder %v637, 2.0
    %vm1618 = vcmp.eq.f32.partialorder %v638, 2.0
    %vm1619 = vcmp.eq.f32.partialorder %v639, 2.0
    %vm1620 = vcmp.eq.f32.partialorder %v640, 2.0
    %vm1621 = vcmp.eq.f32.partialorder %v641, 2.0
    %vm1622 = vcmp.eq.f32.partialorder %v642, 2.0
    %vm1623 = vcmp.eq.f32.partialorder %v643, 2.0
    %vm1624 = vcmp.eq.f32.partialorder %v644, 2.0
    %vm1625 = vcmp.eq.f32.partialorder %v645, 2.0
    %vm1626 = vcmp.eq.f32.partialorder %v646, 2.0
    %vm1627 = vcmp.eq.f32.partialorder %v647, 2.0
    %vm1628 = vcmp.eq.f32.partialorder %v648, 2.0
    %vm1629 = vcmp.eq.f32.partialorder %v649, 2.0
    %vm1630 = vcmp.eq.f32.partialorder %v650, 2.0
    %vm1631 = vcmp.eq.f32.partialorder %v651, 2.0
    %vm1632 = vcmp.eq.f32.partialorder %v652, 2.0
    %vm1633 = vcmp.eq.f32.partialorder %v653, 2.0
    %vm1634 = vcmp.eq.f32.partialorder %v654, 2.0
    %vm1635 = vcmp.eq.f32.partialorder %v655, 2.0
    %vm1636 = vcmp.eq.f32.partialorder %v656, 2.0
    %vm1637 = vcmp.eq.f32.partialorder %v657, 2.0
    %vm1638 = vcmp.eq.f32.partialorder %v658, 2.0
    %vm1639 = vcmp.eq.f32.partialorder %v659, 2.0
    %vm1640 = vcmp.eq.f32.partialorder %v660, 2.0
    %vm1641 = vcmp.eq.f32.partialorder %v661, 2.0
    %vm1642 = vcmp.eq.f32.partialorder %v662, 2.0
    %vm1643 = vcmp.eq.f32.partialorder %v663, 2.0
    %vm1644 = vcmp.eq.f32.partialorder %v664, 2.0
    %vm1645 = vcmp.eq.f32.partialorder %v665, 2.0
    %vm1646 = vcmp.eq.f32.partialorder %v666, 2.0
    %vm1647 = vcmp.eq.f32.partialorder %v667, 2.0
    %vm1648 = vcmp.eq.f32.partialorder %v668, 2.0
    %vm1649 = vcmp.eq.f32.partialorder %v669, 2.0
    %vm1650 = vcmp.eq.f32.partialorder %v670, 2.0
    %vm1651 = vcmp.eq.f32.partialorder %v671, 2.0
    %vm1652 = vcmp.eq.f32.partialorder %v672, 2.0
    %vm1653 = vcmp.eq.f32.partialorder %v673, 2.0
    %vm1654 = vcmp.eq.f32.partialorder %v674, 2.0
    %vm1655 = vcmp.eq.f32.partialorder %v675, 2.0
    %vm1656 = vcmp.eq.f32.partialorder %v676, 2.0
    %vm1657 = vcmp.eq.f32.partialorder %v677, 2.0
    %vm1658 = vcmp.eq.f32.partialorder %v678, 2.0
    %vm1659 = vcmp.eq.f32.partialorder %v679, 2.0
    %vm1660 = vcmp.eq.f32.partialorder %v680, 2.0
    %vm1661 = vcmp.eq.f32.partialorder %v681, 2.0
    %vm1662 = vcmp.eq.f32.partialorder %v682, 2.0
    %vm1663 = vcmp.eq.f32.partialorder %v683, 2.0
    %vm1664 = vcmp.eq.f32.partialorder %v684, 2.0
    %vm1665 = vcmp.eq.f32.partialorder %v636, 3.0
    %vm1666 = vcmp.eq.f32.partialorder %v637, 3.0
    %vm1667 = vcmp.eq.f32.partialorder %v638, 3.0
    %vm1668 = vcmp.eq.f32.partialorder %v639, 3.0
    %vm1669 = vcmp.eq.f32.partialorder %v640, 3.0
    %vm1670 = vcmp.eq.f32.partialorder %v641, 3.0
    %vm1671 = vcmp.eq.f32.partialorder %v642, 3.0
    %vm1672 = vcmp.eq.f32.partialorder %v643, 3.0
    %vm1673 = vcmp.eq.f32.partialorder %v644, 3.0
    %vm1674 = vcmp.eq.f32.partialorder %v645, 3.0
    %vm1675 = vcmp.eq.f32.partialorder %v646, 3.0
    %vm1676 = vcmp.eq.f32.partialorder %v647, 3.0
    %vm1677 = vcmp.eq.f32.partialorder %v648, 3.0
    %vm1678 = vcmp.eq.f32.partialorder %v649, 3.0
    %vm1679 = vcmp.eq.f32.partialorder %v650, 3.0
    %vm1680 = vcmp.eq.f32.partialorder %v651, 3.0
    %vm1681 = vcmp.eq.f32.partialorder %v652, 3.0
    %vm1682 = vcmp.eq.f32.partialorder %v653, 3.0
    %vm1683 = vcmp.eq.f32.partialorder %v654, 3.0
    %vm1684 = vcmp.eq.f32.partialorder %v655, 3.0
    %vm1685 = vcmp.eq.f32.partialorder %v656, 3.0
    %vm1686 = vcmp.eq.f32.partialorder %v657, 3.0
    %vm1687 = vcmp.eq.f32.partialorder %v658, 3.0
    %vm1688 = vcmp.eq.f32.partialorder %v659, 3.0
    %vm1689 = vcmp.eq.f32.partialorder %v660, 3.0
    %vm1690 = vcmp.eq.f32.partialorder %v661, 3.0
    %vm1691 = vcmp.eq.f32.partialorder %v662, 3.0
    %vm1692 = vcmp.eq.f32.partialorder %v663, 3.0
    %vm1693 = vcmp.eq.f32.partialorder %v664, 3.0
    %vm1694 = vcmp.eq.f32.partialorder %v665, 3.0
    %vm1695 = vcmp.eq.f32.partialorder %v666, 3.0
    %vm1696 = vcmp.eq.f32.partialorder %v667, 3.0
    %vm1697 = vcmp.eq.f32.partialorder %v668, 3.0
    %vm1698 = vcmp.eq.f32.partialorder %v669, 3.0
    %vm1699 = vcmp.eq.f32.partialorder %v670, 3.0
    %vm1700 = vcmp.eq.f32.partialorder %v671, 3.0
    %vm1701 = vcmp.eq.f32.partialorder %v672, 3.0
    %vm1702 = vcmp.eq.f32.partialorder %v673, 3.0
    %vm1703 = vcmp.eq.f32.partialorder %v674, 3.0
    %vm1704 = vcmp.eq.f32.partialorder %v675, 3.0
    %vm1705 = vcmp.eq.f32.partialorder %v676, 3.0
    %vm1706 = vcmp.eq.f32.partialorder %v677, 3.0
    %vm1707 = vcmp.eq.f32.partialorder %v678, 3.0
    %vm1708 = vcmp.eq.f32.partialorder %v679, 3.0
    %vm1709 = vcmp.eq.f32.partialorder %v680, 3.0
    %vm1710 = vcmp.eq.f32.partialorder %v681, 3.0
    %vm1711 = vcmp.eq.f32.partialorder %v682, 3.0
    %vm1712 = vcmp.eq.f32.partialorder %v683, 3.0
    %vm1713 = vcmp.eq.f32.partialorder %v684, 3.0
    %vm1714 = vcmp.eq.f32.partialorder %v636, 4.0
    %vm1715 = vcmp.eq.f32.partialorder %v637, 4.0
    %vm1716 = vcmp.eq.f32.partialorder %v638, 4.0
    %vm1717 = vcmp.eq.f32.partialorder %v639, 4.0
    %vm1718 = vcmp.eq.f32.partialorder %v640, 4.0
    %vm1719 = vcmp.eq.f32.partialorder %v641, 4.0
    %vm1720 = vcmp.eq.f32.partialorder %v642, 4.0
    %vm1721 = vcmp.eq.f32.partialorder %v643, 4.0
    %vm1722 = vcmp.eq.f32.partialorder %v644, 4.0
    %vm1723 = vcmp.eq.f32.partialorder %v645, 4.0
    %vm1724 = vcmp.eq.f32.partialorder %v646, 4.0
    %vm1725 = vcmp.eq.f32.partialorder %v647, 4.0
    %vm1726 = vcmp.eq.f32.partialorder %v648, 4.0
    %vm1727 = vcmp.eq.f32.partialorder %v649, 4.0
    %vm1728 = vcmp.eq.f32.partialorder %v650, 4.0
    %vm1729 = vcmp.eq.f32.partialorder %v651, 4.0
    %vm1730 = vcmp.eq.f32.partialorder %v652, 4.0
    %vm1731 = vcmp.eq.f32.partialorder %v653, 4.0
    %vm1732 = vcmp.eq.f32.partialorder %v654, 4.0
    %vm1733 = vcmp.eq.f32.partialorder %v655, 4.0
    %vm1734 = vcmp.eq.f32.partialorder %v656, 4.0
    %vm1735 = vcmp.eq.f32.partialorder %v657, 4.0
    %vm1736 = vcmp.eq.f32.partialorder %v658, 4.0
    %vm1737 = vcmp.eq.f32.partialorder %v659, 4.0
    %vm1738 = vcmp.eq.f32.partialorder %v660, 4.0
    %vm1739 = vcmp.eq.f32.partialorder %v661, 4.0
    %vm1740 = vcmp.eq.f32.partialorder %v662, 4.0
    %vm1741 = vcmp.eq.f32.partialorder %v663, 4.0
    %vm1742 = vcmp.eq.f32.partialorder %v664, 4.0
    %vm1743 = vcmp.eq.f32.partialorder %v665, 4.0
    %vm1744 = vcmp.eq.f32.partialorder %v666, 4.0
    %vm1745 = vcmp.eq.f32.partialorder %v667, 4.0
    %vm1746 = vcmp.eq.f32.partialorder %v668, 4.0
    %vm1747 = vcmp.eq.f32.partialorder %v669, 4.0
    %vm1748 = vcmp.eq.f32.partialorder %v670, 4.0
    %vm1749 = vcmp.eq.f32.partialorder %v671, 4.0
    %vm1750 = vcmp.eq.f32.partialorder %v672, 4.0
    %vm1751 = vcmp.eq.f32.partialorder %v673, 4.0
    %vm1752 = vcmp.eq.f32.partialorder %v674, 4.0
    %vm1753 = vcmp.eq.f32.partialorder %v675, 4.0
    %vm1754 = vcmp.eq.f32.partialorder %v676, 4.0
    %vm1755 = vcmp.eq.f32.partialorder %v677, 4.0
    %vm1756 = vcmp.eq.f32.partialorder %v678, 4.0
    %vm1757 = vcmp.eq.f32.partialorder %v679, 4.0
    %vm1758 = vcmp.eq.f32.partialorder %v680, 4.0
    %vm1759 = vcmp.eq.f32.partialorder %v681, 4.0
    %vm1760 = vcmp.eq.f32.partialorder %v682, 4.0
    %vm1761 = vcmp.eq.f32.partialorder %v683, 4.0
    %vm1762 = vcmp.eq.f32.partialorder %v684, 4.0
    %vm1763 = vcmp.eq.f32.partialorder %v636, 5.0
    %vm1764 = vcmp.eq.f32.partialorder %v637, 5.0
    %vm1765 = vcmp.eq.f32.partialorder %v638, 5.0
    %vm1766 = vcmp.eq.f32.partialorder %v639, 5.0
    %vm1767 = vcmp.eq.f32.partialorder %v640, 5.0
    %vm1768 = vcmp.eq.f32.partialorder %v641, 5.0
    %vm1769 = vcmp.eq.f32.partialorder %v642, 5.0
    %vm1770 = vcmp.eq.f32.partialorder %v643, 5.0
    %vm1771 = vcmp.eq.f32.partialorder %v644, 5.0
    %vm1772 = vcmp.eq.f32.partialorder %v645, 5.0
    %vm1773 = vcmp.eq.f32.partialorder %v646, 5.0
    %vm1774 = vcmp.eq.f32.partialorder %v647, 5.0
    %vm1775 = vcmp.eq.f32.partialorder %v648, 5.0
    %vm1776 = vcmp.eq.f32.partialorder %v649, 5.0
    %vm1777 = vcmp.eq.f32.partialorder %v650, 5.0
    %vm1778 = vcmp.eq.f32.partialorder %v651, 5.0
    %vm1779 = vcmp.eq.f32.partialorder %v652, 5.0
    %vm1780 = vcmp.eq.f32.partialorder %v653, 5.0
    %vm1781 = vcmp.eq.f32.partialorder %v654, 5.0
    %vm1782 = vcmp.eq.f32.partialorder %v655, 5.0
    %vm1783 = vcmp.eq.f32.partialorder %v656, 5.0
    %vm1784 = vcmp.eq.f32.partialorder %v657, 5.0
    %vm1785 = vcmp.eq.f32.partialorder %v658, 5.0
    %vm1786 = vcmp.eq.f32.partialorder %v659, 5.0
    %vm1787 = vcmp.eq.f32.partialorder %v660, 5.0
    %vm1788 = vcmp.eq.f32.partialorder %v661, 5.0
    %vm1789 = vcmp.eq.f32.partialorder %v662, 5.0
    %vm1790 = vcmp.eq.f32.partialorder %v663, 5.0
    %vm1791 = vcmp.eq.f32.partialorder %v664, 5.0
    %vm1792 = vcmp.eq.f32.partialorder %v665, 5.0
    %vm1793 = vcmp.eq.f32.partialorder %v666, 5.0
    %vm1794 = vcmp.eq.f32.partialorder %v667, 5.0
    %vm1795 = vcmp.eq.f32.partialorder %v668, 5.0
    %vm1796 = vcmp.eq.f32.partialorder %v669, 5.0
    %vm1797 = vcmp.eq.f32.partialorder %v670, 5.0
    %vm1798 = vcmp.eq.f32.partialorder %v671, 5.0
    %vm1799 = vcmp.eq.f32.partialorder %v672, 5.0
    %vm1800 = vcmp.eq.f32.partialorder %v673, 5.0
    %vm1801 = vcmp.eq.f32.partialorder %v674, 5.0
    %vm1802 = vcmp.eq.f32.partialorder %v675, 5.0
    %vm1803 = vcmp.eq.f32.partialorder %v676, 5.0
    %vm1804 = vcmp.eq.f32.partialorder %v677, 5.0
    %vm1805 = vcmp.eq.f32.partialorder %v678, 5.0
    %vm1806 = vcmp.eq.f32.partialorder %v679, 5.0
    %vm1807 = vcmp.eq.f32.partialorder %v680, 5.0
    %vm1808 = vcmp.eq.f32.partialorder %v681, 5.0
    %vm1809 = vcmp.eq.f32.partialorder %v682, 5.0
    %vm1810 = vcmp.eq.f32.partialorder %v683, 5.0
    %vm1811 = vcmp.eq.f32.partialorder %v684, 5.0
    %vm1812 = vcmp.eq.f32.partialorder %v636, 6.0
    %vm1813 = vcmp.eq.f32.partialorder %v637, 6.0
    %vm1814 = vcmp.eq.f32.partialorder %v638, 6.0
    %vm1815 = vcmp.eq.f32.partialorder %v639, 6.0
    %vm1816 = vcmp.eq.f32.partialorder %v640, 6.0
    %vm1817 = vcmp.eq.f32.partialorder %v641, 6.0
    %vm1818 = vcmp.eq.f32.partialorder %v642, 6.0
    %vm1819 = vcmp.eq.f32.partialorder %v643, 6.0
    %vm1820 = vcmp.eq.f32.partialorder %v644, 6.0
    %vm1821 = vcmp.eq.f32.partialorder %v645, 6.0
    %vm1822 = vcmp.eq.f32.partialorder %v646, 6.0
    %vm1823 = vcmp.eq.f32.partialorder %v647, 6.0
    %vm1824 = vcmp.eq.f32.partialorder %v648, 6.0
    %vm1825 = vcmp.eq.f32.partialorder %v649, 6.0
    %vm1826 = vcmp.eq.f32.partialorder %v650, 6.0
    %vm1827 = vcmp.eq.f32.partialorder %v651, 6.0
    %vm1828 = vcmp.eq.f32.partialorder %v652, 6.0
    %vm1829 = vcmp.eq.f32.partialorder %v653, 6.0
    %vm1830 = vcmp.eq.f32.partialorder %v654, 6.0
    %vm1831 = vcmp.eq.f32.partialorder %v655, 6.0
    %vm1832 = vcmp.eq.f32.partialorder %v656, 6.0
    %vm1833 = vcmp.eq.f32.partialorder %v657, 6.0
    %vm1834 = vcmp.eq.f32.partialorder %v658, 6.0
    %vm1835 = vcmp.eq.f32.partialorder %v659, 6.0
    %vm1836 = vcmp.eq.f32.partialorder %v660, 6.0
    %vm1837 = vcmp.eq.f32.partialorder %v661, 6.0
    %vm1838 = vcmp.eq.f32.partialorder %v662, 6.0
    %vm1839 = vcmp.eq.f32.partialorder %v663, 6.0
    %vm1840 = vcmp.eq.f32.partialorder %v664, 6.0
    %vm1841 = vcmp.eq.f32.partialorder %v665, 6.0
    %vm1842 = vcmp.eq.f32.partialorder %v666, 6.0
    %vm1843 = vcmp.eq.f32.partialorder %v667, 6.0
    %vm1844 = vcmp.eq.f32.partialorder %v668, 6.0
    %vm1845 = vcmp.eq.f32.partialorder %v669, 6.0
    %vm1846 = vcmp.eq.f32.partialorder %v670, 6.0
    %vm1847 = vcmp.eq.f32.partialorder %v671, 6.0
    %vm1848 = vcmp.eq.f32.partialorder %v672, 6.0
    %vm1849 = vcmp.eq.f32.partialorder %v673, 6.0
    %vm1850 = vcmp.eq.f32.partialorder %v674, 6.0
    %vm1851 = vcmp.eq.f32.partialorder %v675, 6.0
    %vm1852 = vcmp.eq.f32.partialorder %v676, 6.0
    %vm1853 = vcmp.eq.f32.partialorder %v677, 6.0
    %vm1854 = vcmp.eq.f32.partialorder %v678, 6.0
    %vm1855 = vcmp.eq.f32.partialorder %v679, 6.0
    %vm1856 = vcmp.eq.f32.partialorder %v680, 6.0
    %vm1857 = vcmp.eq.f32.partialorder %v681, 6.0
    %vm1858 = vcmp.eq.f32.partialorder %v682, 6.0
    %vm1859 = vcmp.eq.f32.partialorder %v683, 6.0
    %vm1860 = vcmp.eq.f32.partialorder %v684, 6.0
    %vm1861 = vcmp.eq.f32.partialorder %v636, 7.0
    %vm1862 = vcmp.eq.f32.partialorder %v637, 7.0
    %vm1863 = vcmp.eq.f32.partialorder %v638, 7.0
    %vm1864 = vcmp.eq.f32.partialorder %v639, 7.0
    %vm1865 = vcmp.eq.f32.partialorder %v640, 7.0
    %vm1866 = vcmp.eq.f32.partialorder %v641, 7.0
    %vm1867 = vcmp.eq.f32.partialorder %v642, 7.0
    %vm1868 = vcmp.eq.f32.partialorder %v643, 7.0
    %vm1869 = vcmp.eq.f32.partialorder %v644, 7.0
    %vm1870 = vcmp.eq.f32.partialorder %v645, 7.0
    %vm1871 = vcmp.eq.f32.partialorder %v646, 7.0
    %vm1872 = vcmp.eq.f32.partialorder %v647, 7.0
    %vm1873 = vcmp.eq.f32.partialorder %v648, 7.0
    %vm1874 = vcmp.eq.f32.partialorder %v649, 7.0
    %vm1875 = vcmp.eq.f32.partialorder %v650, 7.0
    %vm1876 = vcmp.eq.f32.partialorder %v651, 7.0
    %vm1877 = vcmp.eq.f32.partialorder %v652, 7.0
    %vm1878 = vcmp.eq.f32.partialorder %v653, 7.0
    %vm1879 = vcmp.eq.f32.partialorder %v654, 7.0
    %vm1880 = vcmp.eq.f32.partialorder %v655, 7.0
    %vm1881 = vcmp.eq.f32.partialorder %v656, 7.0
    %vm1882 = vcmp.eq.f32.partialorder %v657, 7.0
    %vm1883 = vcmp.eq.f32.partialorder %v658, 7.0
    %vm1884 = vcmp.eq.f32.partialorder %v659, 7.0
    %vm1885 = vcmp.eq.f32.partialorder %v660, 7.0
    %vm1886 = vcmp.eq.f32.partialorder %v661, 7.0
    %vm1887 = vcmp.eq.f32.partialorder %v662, 7.0
    %vm1888 = vcmp.eq.f32.partialorder %v663, 7.0
    %vm1889 = vcmp.eq.f32.partialorder %v664, 7.0
    %vm1890 = vcmp.eq.f32.partialorder %v665, 7.0
    %vm1891 = vcmp.eq.f32.partialorder %v666, 7.0
    %vm1892 = vcmp.eq.f32.partialorder %v667, 7.0
    %vm1893 = vcmp.eq.f32.partialorder %v668, 7.0
    %vm1894 = vcmp.eq.f32.partialorder %v669, 7.0
    %vm1895 = vcmp.eq.f32.partialorder %v670, 7.0
    %vm1896 = vcmp.eq.f32.partialorder %v671, 7.0
    %vm1897 = vcmp.eq.f32.partialorder %v672, 7.0
    %vm1898 = vcmp.eq.f32.partialorder %v673, 7.0
    %vm1899 = vcmp.eq.f32.partialorder %v674, 7.0
    %vm1900 = vcmp.eq.f32.partialorder %v675, 7.0
    %vm1901 = vcmp.eq.f32.partialorder %v676, 7.0
    %vm1902 = vcmp.eq.f32.partialorder %v677, 7.0
    %vm1903 = vcmp.eq.f32.partialorder %v678, 7.0
    %vm1904 = vcmp.eq.f32.partialorder %v679, 7.0
    %vm1905 = vcmp.eq.f32.partialorder %v680, 7.0
    %vm1906 = vcmp.eq.f32.partialorder %v681, 7.0
    %vm1907 = vcmp.eq.f32.partialorder %v682, 7.0
    %vm1908 = vcmp.eq.f32.partialorder %v683, 7.0
    %vm1909 = vcmp.eq.f32.partialorder %v684, 7.0
    %vm1910 = vcmp.eq.f32.partialorder %v636, 8.0
    %vm1911 = vcmp.eq.f32.partialorder %v637, 8.0
    %vm1912 = vcmp.eq.f32.partialorder %v638, 8.0
    %vm1913 = vcmp.eq.f32.partialorder %v639, 8.0
    %vm1914 = vcmp.eq.f32.partialorder %v640, 8.0
    %vm1915 = vcmp.eq.f32.partialorder %v641, 8.0
    %vm1916 = vcmp.eq.f32.partialorder %v642, 8.0
    %vm1917 = vcmp.eq.f32.partialorder %v643, 8.0
    %vm1918 = vcmp.eq.f32.partialorder %v644, 8.0
    %vm1919 = vcmp.eq.f32.partialorder %v645, 8.0
    %vm1920 = vcmp.eq.f32.partialorder %v646, 8.0
    %vm1921 = vcmp.eq.f32.partialorder %v647, 8.0
    %vm1922 = vcmp.eq.f32.partialorder %v648, 8.0
    %vm1923 = vcmp.eq.f32.partialorder %v649, 8.0
    %vm1924 = vcmp.eq.f32.partialorder %v650, 8.0
    %vm1925 = vcmp.eq.f32.partialorder %v651, 8.0
    %vm1926 = vcmp.eq.f32.partialorder %v652, 8.0
    %vm1927 = vcmp.eq.f32.partialorder %v653, 8.0
    %vm1928 = vcmp.eq.f32.partialorder %v654, 8.0
    %vm1929 = vcmp.eq.f32.partialorder %v655, 8.0
    %vm1930 = vcmp.eq.f32.partialorder %v656, 8.0
    %vm1931 = vcmp.eq.f32.partialorder %v657, 8.0
    %vm1932 = vcmp.eq.f32.partialorder %v658, 8.0
    %vm1933 = vcmp.eq.f32.partialorder %v659, 8.0
    %vm1934 = vcmp.eq.f32.partialorder %v660, 8.0
    %vm1935 = vcmp.eq.f32.partialorder %v661, 8.0
    %vm1936 = vcmp.eq.f32.partialorder %v662, 8.0
    %vm1937 = vcmp.eq.f32.partialorder %v663, 8.0
    %vm1938 = vcmp.eq.f32.partialorder %v664, 8.0
    %vm1939 = vcmp.eq.f32.partialorder %v665, 8.0
    %vm1940 = vcmp.eq.f32.partialorder %v666, 8.0
    %vm1941 = vcmp.eq.f32.partialorder %v667, 8.0
    %vm1942 = vcmp.eq.f32.partialorder %v668, 8.0
    %vm1943 = vcmp.eq.f32.partialorder %v669, 8.0
    %vm1944 = vcmp.eq.f32.partialorder %v670, 8.0
    %vm1945 = vcmp.eq.f32.partialorder %v671, 8.0
    %vm1946 = vcmp.eq.f32.partialorder %v672, 8.0
    %vm1947 = vcmp.eq.f32.partialorder %v673, 8.0
    %vm1948 = vcmp.eq.f32.partialorder %v674, 8.0
    %vm1949 = vcmp.eq.f32.partialorder %v675, 8.0
    %vm1950 = vcmp.eq.f32.partialorder %v676, 8.0
    %vm1951 = vcmp.eq.f32.partialorder %v677, 8.0
    %vm1952 = vcmp.eq.f32.partialorder %v678, 8.0
    %vm1953 = vcmp.eq.f32.partialorder %v679, 8.0
    %vm1954 = vcmp.eq.f32.partialorder %v680, 8.0
    %vm1955 = vcmp.eq.f32.partialorder %v681, 8.0
    %vm1956 = vcmp.eq.f32.partialorder %v682, 8.0
    %vm1957 = vcmp.eq.f32.partialorder %v683, 8.0
    %vm1958 = vcmp.eq.f32.partialorder %v684, 8.0
    %v1959 = vsel %vm1665, %v1322, 0.0
    %v1960 = vsel %vm1666, %v1323, 0.0
    %v1961 = vsel %vm1667, %v1324, 0.0
    %v1962 = vsel %vm1668, %v1325, 0.0
    %v1963 = vsel %vm1669, %v1326, 0.0
    %v1964 = vsel %vm1670, %v1327, 0.0
    %v1965 = vsel %vm1671, %v1328, 0.0
    %v1966 = vsel %vm1672, %v1329, 0.0
    %v1967 = vsel %vm1673, %v1330, 0.0
    %v1968 = vsel %vm1674, %v1331, 0.0
    %v1969 = vsel %vm1675, %v1332, 0.0
    %v1970 = vsel %vm1676, %v1333, 0.0
    %v1971 = vsel %vm1677, %v1334, 0.0
    %v1972 = vsel %vm1678, %v1335, 0.0
    %v1973 = vsel %vm1679, %v1336, 0.0
    %v1974 = vsel %vm1680, %v1337, 0.0
    %v1975 = vsel %vm1681, %v1338, 0.0
    %v1976 = vsel %vm1682, %v1339, 0.0
    %v1977 = vsel %vm1683, %v1340, 0.0
    %v1978 = vsel %vm1684, %v1341, 0.0
    %v1979 = vsel %vm1685, %v1342, 0.0
    %v1980 = vsel %vm1686, %v1343, 0.0
    %v1981 = vsel %vm1687, %v1344, 0.0
    %v1982 = vsel %vm1688, %v1345, 0.0
    %v1983 = vsel %vm1689, %v1346, 0.0
    %v1984 = vsel %vm1690, %v1347, 0.0
    %v1985 = vsel %vm1691, %v1348, 0.0
    %v1986 = vsel %vm1692, %v1349, 0.0
    %v1987 = vsel %vm1693, %v1350, 0.0
    %v1988 = vsel %vm1694, %v1351, 0.0
    %v1989 = vsel %vm1695, %v1352, 0.0
    %v1990 = vsel %vm1696, %v1353, 0.0
    %v1991 = vsel %vm1697, %v1354, 0.0
    %v1992 = vsel %vm1698, %v1355, 0.0
    %v1993 = vsel %vm1699, %v1356, 0.0
    %v1994 = vsel %vm1700, %v1357, 0.0
    %v1995 = vsel %vm1701, %v1358, 0.0
    %v1996 = vsel %vm1702, %v1359, 0.0
    %v1997 = vsel %vm1703, %v1360, 0.0
    %v1998 = vsel %vm1704, %v1361, 0.0
    %v1999 = vsel %vm1705, %v1362, 0.0
    %v2000 = vsel %vm1706, %v1363, 0.0
    %v2001 = vsel %vm1707, %v1364, 0.0
    %v2002 = vsel %vm1708, %v1365, 0.0
    %v2003 = vsel %vm1709, %v1366, 0.0
    %v2004 = vsel %vm1710, %v1367, 0.0
    %v2005 = vsel %vm1711, %v1368, 0.0
    %v2006 = vsel %vm1712, %v1369, 0.0
    %v2007 = vsel %vm1713, %v1370, 0.0
    %v2008 = vsel %vm1616, %v1469, %v1959
    %v2009 = vsel %vm1617, %v1470, %v1960
    %v2010 = vsel %vm1618, %v1471, %v1961
    %v2011 = vsel %vm1619, %v1472, %v1962
    %v2012 = vsel %vm1620, %v1473, %v1963
    %v2013 = vsel %vm1621, %v1474, %v1964
    %v2014 = vsel %vm1622, %v1475, %v1965
    %v2015 = vsel %vm1623, %v1476, %v1966
    %v2016 = vsel %vm1624, %v1477, %v1967
    %v2017 = vsel %vm1625, %v1478, %v1968
    %v2018 = vsel %vm1626, %v1479, %v1969
    %v2019 = vsel %vm1627, %v1480, %v1970
    %v2020 = vsel %vm1628, %v1481, %v1971
    %v2021 = vsel %vm1629, %v1482, %v1972
    %v2022 = vsel %vm1630, %v1483, %v1973
    %v2023 = vsel %vm1631, %v1484, %v1974
    %v2024 = vsel %vm1632, %v1485, %v1975
    %v2025 = vsel %vm1633, %v1486, %v1976
    %v2026 = vsel %vm1634, %v1487, %v1977
    %v2027 = vsel %vm1635, %v1488, %v1978
    %v2028 = vsel %vm1636, %v1489, %v1979
    %v2029 = vsel %vm1637, %v1490, %v1980
    %v2030 = vsel %vm1638, %v1491, %v1981
    %v2031 = vsel %vm1639, %v1492, %v1982
    %v2032 = vsel %vm1640, %v1493, %v1983
    %v2033 = vsel %vm1641, %v1494, %v1984
    %v2034 = vsel %vm1642, %v1495, %v1985
    %v2035 = vsel %vm1643, %v1496, %v1986
    %v2036 = vsel %vm1644, %v1497, %v1987
    %v2037 = vsel %vm1645, %v1498, %v1988
    %v2038 = vsel %vm1646, %v1499, %v1989
    %v2039 = vsel %vm1647, %v1500, %v1990
    %v2040 = vsel %vm1648, %v1501, %v1991
    %v2041 = vsel %vm1649, %v1502, %v1992
    %v2042 = vsel %vm1650, %v1503, %v1993
    %v2043 = vsel %vm1651, %v1504, %v1994
    %v2044 = vsel %vm1652, %v1505, %v1995
    %v2045 = vsel %vm1653, %v1506, %v1996
    %v2046 = vsel %vm1654, %v1507, %v1997
    %v2047 = vsel %vm1655, %v1508, %v1998
    %v2048 = vsel %vm1656, %v1509, %v1999
    %v2049 = vsel %vm1657, %v1510, %v2000
    %v2050 = vsel %vm1658, %v1511, %v2001
    %v2051 = vsel %vm1659, %v1512, %v2002
    %v2052 = vsel %vm1660, %v1513, %v2003
    %v2053 = vsel %vm1661, %v1514, %v2004
    %v2054 = vsel %vm1662, %v1515, %v2005
    %v2055 = vsel %vm1663, %v1516, %v2006
    %v2056 = vsel %vm1664, %v1517, %v2007
    %v2057 = vsel %vm1567, %v1175, %v2008
    %v2058 = vsel %vm1568, %v1176, %v2009
    %v2059 = vsel %vm1569, %v1177, %v2010
    %v2060 = vsel %vm1570, %v1178, %v2011
    %v2061 = vsel %vm1571, %v1179, %v2012
    %v2062 = vsel %vm1572, %v1180, %v2013
    %v2063 = vsel %vm1573, %v1181, %v2014
    %v2064 = vsel %vm1574, %v1182, %v2015
    %v2065 = vsel %vm1575, %v1183, %v2016
    %v2066 = vsel %vm1576, %v1184, %v2017
    %v2067 = vsel %vm1577, %v1185, %v2018
    %v2068 = vsel %vm1578, %v1186, %v2019
    %v2069 = vsel %vm1579, %v1187, %v2020
    %v2070 = vsel %vm1580, %v1188, %v2021
    %v2071 = vsel %vm1581, %v1189, %v2022
    %v2072 = vsel %vm1582, %v1190, %v2023
    %v2073 = vsel %vm1583, %v1191, %v2024
    %v2074 = vsel %vm1584, %v1192, %v2025
    %v2075 = vsel %vm1585, %v1193, %v2026
    %v2076 = vsel %vm1586, %v1194, %v2027
    %v2077 = vsel %vm1587, %v1195, %v2028
    %v2078 = vsel %vm1588, %v1196, %v2029
    %v2079 = vsel %vm1589, %v1197, %v2030
    %v2080 = vsel %vm1590, %v1198, %v2031
    %v2081 = vsel %vm1591, %v1199, %v2032
    %v2082 = vsel %vm1592, %v1200, %v2033
    %v2083 = vsel %vm1593, %v1201, %v2034
    %v2084 = vsel %vm1594, %v1202, %v2035
    %v2085 = vsel %vm1595, %v1203, %v2036
    %v2086 = vsel %vm1596, %v1204, %v2037
    %v2087 = vsel %vm1597, %v1205, %v2038
    %v2088 = vsel %vm1598, %v1206, %v2039
    %v2089 = vsel %vm1599, %v1207, %v2040
    %v2090 = vsel %vm1600, %v1208, %v2041
    %v2091 = vsel %vm1601, %v1209, %v2042
    %v2092 = vsel %vm1602, %v1210, %v2043
    %v2093 = vsel %vm1603, %v1211, %v2044
    %v2094 = vsel %vm1604, %v1212, %v2045
    %v2095 = vsel %vm1605, %v1213, %v2046
    %v2096 = vsel %vm1606, %v1214, %v2047
    %v2097 = vsel %vm1607, %v1215, %v2048
    %v2098 = vsel %vm1608, %v1216, %v2049
    %v2099 = vsel %vm1609, %v1217, %v2050
    %v2100 = vsel %vm1610, %v1218, %v2051
    %v2101 = vsel %vm1611, %v1219, %v2052
    %v2102 = vsel %vm1612, %v1220, %v2053
    %v2103 = vsel %vm1613, %v1221, %v2054
    %v2104 = vsel %vm1614, %v1222, %v2055
    %v2105 = vsel %vm1615, %v1223, %v2056
    %v2106 = vsel %vm1518, %v881, %v2057
    %v2107 = vsel %vm1519, %v882, %v2058
    %v2108 = vsel %vm1520, %v883, %v2059
    %v2109 = vsel %vm1521, %v884, %v2060
    %v2110 = vsel %vm1522, %v885, %v2061
    %v2111 = vsel %vm1523, %v886, %v2062
    %v2112 = vsel %vm1524, %v887, %v2063
    %v2113 = vsel %vm1525, %v888, %v2064
    %v2114 = vsel %vm1526, %v889, %v2065
    %v2115 = vsel %vm1527, %v890, %v2066
    %v2116 = vsel %vm1528, %v891, %v2067
    %v2117 = vsel %vm1529, %v892, %v2068
    %v2118 = vsel %vm1530, %v893, %v2069
    %v2119 = vsel %vm1531, %v894, %v2070
    %v2120 = vsel %vm1532, %v895, %v2071
    %v2121 = vsel %vm1533, %v896, %v2072
    %v2122 = vsel %vm1534, %v897, %v2073
    %v2123 = vsel %vm1535, %v898, %v2074
    %v2124 = vsel %vm1536, %v899, %v2075
    %v2125 = vsel %vm1537, %v900, %v2076
    %v2126 = vsel %vm1538, %v901, %v2077
    %v2127 = vsel %vm1539, %v902, %v2078
    %v2128 = vsel %vm1540, %v903, %v2079
    %v2129 = vsel %vm1541, %v904, %v2080
    %v2130 = vsel %vm1542, %v905, %v2081
    %v2131 = vsel %vm1543, %v906, %v2082
    %v2132 = vsel %vm1544, %v907, %v2083
    %v2133 = vsel %vm1545, %v908, %v2084
    %v2134 = vsel %vm1546, %v909, %v2085
    %v2135 = vsel %vm1547, %v910, %v2086
    %v2136 = vsel %vm1548, %v911, %v2087
    %v2137 = vsel %vm1549, %v912, %v2088
    %v2138 = vsel %vm1550, %v913, %v2089
    %v2139 = vsel %vm1551, %v914, %v2090
    %v2140 = vsel %vm1552, %v915, %v2091
    %v2141 = vsel %vm1553, %v916, %v2092
    %v2142 = vsel %vm1554, %v917, %v2093
    %v2143 = vsel %vm1555, %v918, %v2094
    %v2144 = vsel %vm1556, %v919, %v2095
    %v2145 = vsel %vm1557, %v920, %v2096
    %v2146 = vsel %vm1558, %v921, %v2097
    %v2147 = vsel %vm1559, %v922, %v2098
    %v2148 = vsel %vm1560, %v923, %v2099
    %v2149 = vsel %vm1561, %v924, %v2100
    %v2150 = vsel %vm1562, %v925, %v2101
    %v2151 = vsel %vm1563, %v926, %v2102
    %v2152 = vsel %vm1564, %v927, %v2103
    %v2153 = vsel %vm1565, %v928, %v2104
    %v2154 = vsel %vm1566, %v929, %v2105
    %v2155 = vpack.c.bf16 %v2107, %v2106
    %v2156 = vpack.c.bf16 %v2109, %v2108
    %v2157 = vpack.c.bf16 %v2111, %v2110
    %v2158 = vpack.c.bf16 %v2113, %v2112
    %v2159 = vpack.c.bf16 %v2115, %v2114
    %v2160 = vpack.c.bf16 %v2117, %v2116
    %v2161 = vpack.c.bf16 %v2119, %v2118
    %v2162 = vpack.c.bf16 %v2121, %v2120
    %v2163 = vpack.c.bf16 %v2123, %v2122
    %v2164 = vpack.c.bf16 %v2125, %v2124
    %v2165 = vpack.c.bf16 %v2127, %v2126
    %v2166 = vpack.c.bf16 %v2129, %v2128
    %v2167 = vpack.c.bf16 %v2131, %v2130
    %v2168 = vpack.c.bf16 %v2133, %v2132
    %v2169 = vpack.c.bf16 %v2135, %v2134
    %v2170 = vpack.c.bf16 %v2137, %v2136
    %v2171 = vpack.c.bf16 %v2139, %v2138
    %v2172 = vpack.c.bf16 %v2141, %v2140
    %v2173 = vpack.c.bf16 %v2143, %v2142
    %v2174 = vpack.c.bf16 %v2145, %v2144
    %v2175 = vpack.c.bf16 %v2147, %v2146
    %v2176 = vpack.c.bf16 %v2149, %v2148
    %v2177 = vpack.c.bf16 %v2151, %v2150
    %v2178 = vpack.c.bf16 %v2153, %v2152
    %v2179 = vpack.c.bf16 %v2154, %v2154
    %v2180 = vld [vmem:[#allocation5 + $0x40] sm:$0xf]
    %v2181 = vld [vmem:[#allocation5 + $0x44] sm:$0xf]
    %v2182 = vld [vmem:[#allocation5 + $0x48] sm:$0xf]
    %v2183 = vld [vmem:[#allocation5 + $0x4c] sm:$0xf]
    %v2184 = vld [vmem:[#allocation5 + $0x50] sm:$0xf]
    %v2185 = vld [vmem:[#allocation5 + $0x54] sm:$0xf]
    %v2186 = vld [vmem:[#allocation5 + $0x58] sm:$0xf]
    %v2187 = vld [vmem:[#allocation5 + $0x5c] sm:$0xf]
    %v2188 = vld [vmem:[#allocation5 + $0x60] sm:$0xf]
    %v2189 = vld [vmem:[#allocation5 + $0x64] sm:$0xf]
    %v2190 = vld [vmem:[#allocation5 + $0x68] sm:$0xf]
    %v2191 = vld [vmem:[#allocation5 + $0x6c] sm:$0xf]
    %v2192 = vld [vmem:[#allocation5 + $0x70] sm:$0xf]
    %v2193 = vld [vmem:[#allocation5 + $0x74] sm:$0xf]
    %v2194 = vld [vmem:[#allocation5 + $0x78] sm:$0xf]
    %v2195 = vld [vmem:[#allocation5 + $0x7c] sm:$0xf]
    %v2212 = vunpack.c.l.b16 %v2180
    %v2213 = vunpack.c.l.b16 %v2181
    %v2214 = vunpack.c.l.b16 %v2182
    %v2215 = vunpack.c.l.b16 %v2183
    %v2216 = vunpack.c.l.b16 %v2184
    %v2217 = vunpack.c.l.b16 %v2185
    %v2218 = vunpack.c.l.b16 %v2186
    %v2219 = vunpack.c.l.b16 %v2187
    %v2220 = vunpack.c.l.b16 %v2188
    %v2221 = vunpack.c.l.b16 %v2189
    %v2222 = vunpack.c.l.b16 %v2190
    %v2223 = vunpack.c.l.b16 %v2191
    %v2224 = vunpack.c.l.b16 %v2192
    %v2225 = vunpack.c.l.b16 %v2193
    %v2226 = vunpack.c.l.b16 %v2194
    %v2227 = vunpack.c.l.b16 %v2195
    %v2228 = vpack.c.b16 %v2213, %v2212
    %v2229 = vpack.c.b16 %v2215, %v2214
    %v2230 = vpack.c.b16 %v2217, %v2216
    %v2231 = vpack.c.b16 %v2219, %v2218
    %v2232 = vpack.c.b16 %v2221, %v2220
    %v2233 = vpack.c.b16 %v2223, %v2222
    %v2234 = vpack.c.b16 %v2225, %v2224
    %v2235 = vpack.c.b16 %v2227, %v2226
    %2244 = vmatprep.subr.bf16.mxu0 0
    %2245 = vmatpush1.bf16.msra.mxu0 %v2228
    %2246 = vmatprep.subr.bf16.mxu0 0
    %2247 = vmatpush1.bf16.msra.mxu0 %v2229
    %2248 = vmatprep.subr.bf16.mxu0 0
    %2249 = vmatpush1.bf16.msra.mxu0 %v2230
    %2250 = vmatprep.subr.bf16.mxu0 0
    %2251 = vmatpush1.bf16.msra.mxu0 %v2231
    %2252 = vmatprep.subr.bf16.mxu0 0
    %2253 = vmatpush1.bf16.msra.mxu0 %v2232
    %2254 = vmatprep.subr.bf16.mxu0 0
    %2255 = vmatpush1.bf16.msra.mxu0 %v2233
    %2256 = vmatprep.subr.bf16.mxu0 0
    %2257 = vmatpush1.bf16.msra.mxu0 %v2234
    %2258 = vmatprep.subr.bf16.mxu0 0
    %2259 = vmatpush1.bf16.msra.mxu0 %v2235
    %2260 = vmatprep.subr.bf16.mxu0 0
    %2261 = vmatpush1.bf16.msra.mxu0 0
    %2262 = vmatprep.subr.bf16.mxu0 0
    %2263 = vmatpush1.bf16.msra.mxu0 0
    %2264 = vmatprep.subr.bf16.mxu0 0
    %2265 = vmatpush1.bf16.msra.mxu0 0
    %2266 = vmatprep.subr.bf16.mxu0 0
    %2267 = vmatpush1.bf16.msra.mxu0 0
    %2268 = vmatprep.subr.bf16.mxu0 0
    %2269 = vmatpush1.bf16.msra.mxu0 0
    %2270 = vmatprep.subr.bf16.mxu0 0
    %2271 = vmatpush1.bf16.msra.mxu0 0
    %2272 = vmatprep.subr.bf16.mxu0 0
    %2273 = vmatpush1.bf16.msra.mxu0 0
    %2274 = vmatprep.subr.bf16.mxu0 0
    %2275 = vmatpush1.bf16.msra.mxu0 0
    %2276 = vmatprep.mubr.bf16.mxu0 0
    %2277 = vmatmul.mubr.bf16.gmra.mrb[0].mxu0 %v2155
    %v2278 = vpop.f32.mrb[0].mxu0
    %v2279 = vadd.f32 0.0, %v2278
    %v2280 = vpop.f32.mrb[0].mxu0
    %v2281 = vpop.f32.mrb[0].mxu0
    %v2282 = vadd.f32 0.0, %v2281
    %v2283 = vpop.f32.mrb[0].mxu0
    %2284 = vmatprep.mubr.bf16.mxu0 0
    %2285 = vmatmul.mubr.bf16.gmra.mrb[0].mxu0 %v2156
    %v2286 = vpop.f32.mrb[0].mxu0
    %v2287 = vadd.f32 0.0, %v2286
    %v2288 = vpop.f32.mrb[0].mxu0
    %v2289 = vpop.f32.mrb[0].mxu0
    %v2290 = vadd.f32 0.0, %v2289
    %v2291 = vpop.f32.mrb[0].mxu0
    %2292 = vmatprep.mubr.bf16.mxu0 0
    %2293 = vmatmul.mubr.bf16.gmra.mrb[0].mxu0 %v2157
    %v2294 = vpop.f32.mrb[0].mxu0
    %v2295 = vadd.f32 0.0, %v2294
    %v2296 = vpop.f32.mrb[0].mxu0
    %v2297 = vpop.f32.mrb[0].mxu0
    %v2298 = vadd.f32 0.0, %v2297
    %v2299 = vpop.f32.mrb[0].mxu0
    %2300 = vmatprep.mubr.bf16.mxu0 0
    %2301 = vmatmul.mubr.bf16.gmra.mrb[0].mxu0 %v2158
    %v2302 = vpop.f32.mrb[0].mxu0
    %v2303 = vadd.f32 0.0, %v2302
    %v2304 = vpop.f32.mrb[0].mxu0
    %v2305 = vpop.f32.mrb[0].mxu0
    %v2306 = vadd.f32 0.0, %v2305
    %v2307 = vpop.f32.mrb[0].mxu0
    %2308 = vmatprep.mubr.bf16.mxu0 0
    %2309 = vmatmul.mubr.bf16.gmra.mrb[0].mxu0 %v2159
    %v2310 = vpop.f32.mrb[0].mxu0
    %v2311 = vadd.f32 0.0, %v2310
    %v2312 = vpop.f32.mrb[0].mxu0
    %v2313 = vpop.f32.mrb[0].mxu0
    %v2314 = vadd.f32 0.0, %v2313
    %v2315 = vpop.f32.mrb[0].mxu0
    %2316 = vmatprep.mubr.bf16.mxu0 0
    %2317 = vmatmul.mubr.bf16.gmra.mrb[0].mxu0 %v2160
    %v2318 = vpop.f32.mrb[0].mxu0
    %v2319 = vadd.f32 0.0, %v2318
    %v2320 = vpop.f32.mrb[0].mxu0
    %v2321 = vpop.f32.mrb[0].mxu0
    %v2322 = vadd.f32 0.0, %v2321
    %v2323 = vpop.f32.mrb[0].mxu0
    %2324 = vmatprep.mubr.bf16.mxu0 0
    %2325 = vmatmul.mubr.bf16.gmra.mrb[0].mxu0 %v2161
    %v2326 = vpop.f32.mrb[0].mxu0
    %v2327 = vadd.f32 0.0, %v2326
    %v2328 = vpop.f32.mrb[0].mxu0
    %v2329 = vpop.f32.mrb[0].mxu0
    %v2330 = vadd.f32 0.0, %v2329
    %v2331 = vpop.f32.mrb[0].mxu0
    %2332 = vmatprep.mubr.bf16.mxu0 0
    %2333 = vmatmul.mubr.bf16.gmra.mrb[0].mxu0 %v2162
    %v2334 = vpop.f32.mrb[0].mxu0
    %v2335 = vadd.f32 0.0, %v2334
    %v2336 = vpop.f32.mrb[0].mxu0
    %v2337 = vpop.f32.mrb[0].mxu0
    %v2338 = vadd.f32 0.0, %v2337
    %v2339 = vpop.f32.mrb[0].mxu0
    %2340 = vmatprep.mubr.bf16.mxu0 0
    %2341 = vmatmul.mubr.bf16.gmra.mrb[0].mxu0 %v2163
    %v2342 = vpop.f32.mrb[0].mxu0
    %v2343 = vadd.f32 0.0, %v2342
    %v2344 = vpop.f32.mrb[0].mxu0
    %v2345 = vpop.f32.mrb[0].mxu0
    %v2346 = vadd.f32 0.0, %v2345
    %v2347 = vpop.f32.mrb[0].mxu0
    %2348 = vmatprep.mubr.bf16.mxu0 0
    %2349 = vmatmul.mubr.bf16.gmra.mrb[0].mxu0 %v2164
    %v2350 = vpop.f32.mrb[0].mxu0
    %v2351 = vadd.f32 0.0, %v2350
    %v2352 = vpop.f32.mrb[0].mxu0
    %v2353 = vpop.f32.mrb[0].mxu0
    %v2354 = vadd.f32 0.0, %v2353
    %v2355 = vpop.f32.mrb[0].mxu0
    %2356 = vmatprep.mubr.bf16.mxu0 0
    %2357 = vmatmul.mubr.bf16.gmra.mrb[0].mxu0 %v2165
    %v2358 = vpop.f32.mrb[0].mxu0
    %v2359 = vadd.f32 0.0, %v2358
    %v2360 = vpop.f32.mrb[0].mxu0
    %v2361 = vpop.f32.mrb[0].mxu0
    %v2362 = vadd.f32 0.0, %v2361
    %v2363 = vpop.f32.mrb[0].mxu0
    %2364 = vmatprep.mubr.bf16.mxu0 0
    %2365 = vmatmul.mubr.bf16.gmra.mrb[0].mxu0 %v2166
    %v2366 = vpop.f32.mrb[0].mxu0
    %v2367 = vadd.f32 0.0, %v2366
    %v2368 = vpop.f32.mrb[0].mxu0
    %v2369 = vpop.f32.mrb[0].mxu0
    %v2370 = vadd.f32 0.0, %v2369
    %v2371 = vpop.f32.mrb[0].mxu0
    %2372 = vmatprep.mubr.bf16.mxu0 0
    %2373 = vmatmul.mubr.bf16.gmra.mrb[0].mxu0 %v2167
    %v2374 = vpop.f32.mrb[0].mxu0
    %v2375 = vadd.f32 0.0, %v2374
    %v2376 = vpop.f32.mrb[0].mxu0
    %v2377 = vpop.f32.mrb[0].mxu0
    %v2378 = vadd.f32 0.0, %v2377
    %v2379 = vpop.f32.mrb[0].mxu0
    %2380 = vmatprep.mubr.bf16.mxu0 0
    %2381 = vmatmul.mubr.bf16.gmra.mrb[0].mxu0 %v2168
    %v2382 = vpop.f32.mrb[0].mxu0
    %v2383 = vadd.f32 0.0, %v2382
    %v2384 = vpop.f32.mrb[0].mxu0
    %v2385 = vpop.f32.mrb[0].mxu0
    %v2386 = vadd.f32 0.0, %v2385
    %v2387 = vpop.f32.mrb[0].mxu0
    %2388 = vmatprep.mubr.bf16.mxu0 0
    %2389 = vmatmul.mubr.bf16.gmra.mrb[0].mxu0 %v2169
    %v2390 = vpop.f32.mrb[0].mxu0
    %v2391 = vadd.f32 0.0, %v2390
    %v2392 = vpop.f32.mrb[0].mxu0
    %v2393 = vpop.f32.mrb[0].mxu0
    %v2394 = vadd.f32 0.0, %v2393
    %v2395 = vpop.f32.mrb[0].mxu0
    %2396 = vmatprep.mubr.bf16.mxu0 0
    %2397 = vmatmul.mubr.bf16.gmra.mrb[0].mxu0 %v2170
    %v2398 = vpop.f32.mrb[0].mxu0
    %v2399 = vadd.f32 0.0, %v2398
    %v2400 = vpop.f32.mrb[0].mxu0
    %v2401 = vpop.f32.mrb[0].mxu0
    %v2402 = vadd.f32 0.0, %v2401
    %v2403 = vpop.f32.mrb[0].mxu0
    %2404 = vmatprep.mubr.bf16.mxu0 0
    %2405 = vmatmul.mubr.bf16.gmra.mrb[0].mxu0 %v2171
    %v2406 = vpop.f32.mrb[0].mxu0
    %v2407 = vadd.f32 0.0, %v2406
    %v2408 = vpop.f32.mrb[0].mxu0
    %v2409 = vpop.f32.mrb[0].mxu0
    %v2410 = vadd.f32 0.0, %v2409
    %v2411 = vpop.f32.mrb[0].mxu0
    %2412 = vmatprep.mubr.bf16.mxu0 0
    %2413 = vmatmul.mubr.bf16.gmra.mrb[0].mxu0 %v2172
    %v2414 = vpop.f32.mrb[0].mxu0
    %v2415 = vadd.f32 0.0, %v2414
    %v2416 = vpop.f32.mrb[0].mxu0
    %v2417 = vpop.f32.mrb[0].mxu0
    %v2418 = vadd.f32 0.0, %v2417
    %v2419 = vpop.f32.mrb[0].mxu0
    %2420 = vmatprep.mubr.bf16.mxu0 0
    %2421 = vmatmul.mubr.bf16.gmra.mrb[0].mxu0 %v2173
    %v2422 = vpop.f32.mrb[0].mxu0
    %v2423 = vadd.f32 0.0, %v2422
    %v2424 = vpop.f32.mrb[0].mxu0
    %v2425 = vpop.f32.mrb[0].mxu0
    %v2426 = vadd.f32 0.0, %v2425
    %v2427 = vpop.f32.mrb[0].mxu0
    %2428 = vmatprep.mubr.bf16.mxu0 0
    %2429 = vmatmul.mubr.bf16.gmra.mrb[0].mxu0 %v2174
    %v2430 = vpop.f32.mrb[0].mxu0
    %v2431 = vadd.f32 0.0, %v2430
    %v2432 = vpop.f32.mrb[0].mxu0
    %v2433 = vpop.f32.mrb[0].mxu0
    %v2434 = vadd.f32 0.0, %v2433
    %v2435 = vpop.f32.mrb[0].mxu0
    %2436 = vmatprep.mubr.bf16.mxu0 0
    %2437 = vmatmul.mubr.bf16.gmra.mrb[0].mxu0 %v2175
    %v2438 = vpop.f32.mrb[0].mxu0
    %v2439 = vadd.f32 0.0, %v2438
    %v2440 = vpop.f32.mrb[0].mxu0
    %v2441 = vpop.f32.mrb[0].mxu0
    %v2442 = vadd.f32 0.0, %v2441
    %v2443 = vpop.f32.mrb[0].mxu0
    %2444 = vmatprep.mubr.bf16.mxu0 0
    %2445 = vmatmul.mubr.bf16.gmra.mrb[0].mxu0 %v2176
    %v2446 = vpop.f32.mrb[0].mxu0
    %v2447 = vadd.f32 0.0, %v2446
    %v2448 = vpop.f32.mrb[0].mxu0
    %v2449 = vpop.f32.mrb[0].mxu0
    %v2450 = vadd.f32 0.0, %v2449
    %v2451 = vpop.f32.mrb[0].mxu0
    %2452 = vmatprep.mubr.bf16.mxu0 0
    %2453 = vmatmul.mubr.bf16.gmra.mrb[0].mxu0 %v2177
    %v2454 = vpop.f32.mrb[0].mxu0
    %v2455 = vadd.f32 0.0, %v2454
    %v2456 = vpop.f32.mrb[0].mxu0
    %v2457 = vpop.f32.mrb[0].mxu0
    %v2458 = vadd.f32 0.0, %v2457
    %v2459 = vpop.f32.mrb[0].mxu0
    %2460 = vmatprep.mubr.bf16.mxu0 0
    %2461 = vmatmul.mubr.bf16.gmra.mrb[0].mxu0 %v2178
    %v2462 = vpop.f32.mrb[0].mxu0
    %v2463 = vadd.f32 0.0, %v2462
    %v2464 = vpop.f32.mrb[0].mxu0
    %v2465 = vpop.f32.mrb[0].mxu0
    %v2466 = vadd.f32 0.0, %v2465
    %v2467 = vpop.f32.mrb[0].mxu0
    %2468 = vmatprep.mubr.bf16.mxu0 0
    %2469 = vmatmul.mubr.bf16.gmra.mrb[0].mxu0 %v2179
    %v2470 = vpop.f32.mrb[0].mxu0
    %v2471 = vadd.f32 0.0, %v2470
    %v2472 = vpop.f32.mrb[0].mxu0
    %v2473 = vpop.f32.mrb[0].mxu0
    %v2474 = vpop.f32.mrb[0].mxu0
    %2475 = vdwg.mxu0
    %v2492 = vunpack.c.l.b16 %v522
    %v2493 = vunpack.c.l.b16 %v523
    %v2494 = vunpack.c.l.b16 %v524
    %v2495 = vunpack.c.l.b16 %v525
    %v2496 = vunpack.c.l.b16 %v526
    %v2497 = vunpack.c.l.b16 %v527
    %v2498 = vunpack.c.l.b16 %v528
    %v2499 = vunpack.c.l.b16 %v529
    %v2500 = vunpack.c.l.b16 %v530
    %v2501 = vunpack.c.l.b16 %v531
    %v2502 = vunpack.c.l.b16 %v532
    %v2503 = vunpack.c.l.b16 %v533
    %v2504 = vunpack.c.l.b16 %v534
    %v2505 = vunpack.c.l.b16 %v535
    %v2506 = vunpack.c.l.b16 %v536
    %v2507 = vunpack.c.l.b16 %v537
    %v2508 = vpack.c.b16 %v2493, %v2492
    %v2509 = vpack.c.b16 %v2495, %v2494
    %v2510 = vpack.c.b16 %v2497, %v2496
    %v2511 = vpack.c.b16 %v2499, %v2498
    %v2512 = vpack.c.b16 %v2501, %v2500
    %v2513 = vpack.c.b16 %v2503, %v2502
    %v2514 = vpack.c.b16 %v2505, %v2504
    %v2515 = vpack.c.b16 %v2507, %v2506
    %2524 = vmatprep.subr.bf16.mxu0 0
    %2525 = vmatpush1.bf16.msra.mxu0 %v2508
    %2526 = vmatprep.subr.bf16.mxu0 0
    %2527 = vmatpush1.bf16.msra.mxu0 %v2509
    %2528 = vmatprep.subr.bf16.mxu0 0
    %2529 = vmatpush1.bf16.msra.mxu0 %v2510
    %2530 = vmatprep.subr.bf16.mxu0 0
    %2531 = vmatpush1.bf16.msra.mxu0 %v2511
    %2532 = vmatprep.subr.bf16.mxu0 0
    %2533 = vmatpush1.bf16.msra.mxu0 %v2512
    %2534 = vmatprep.subr.bf16.mxu0 0
    %2535 = vmatpush1.bf16.msra.mxu0 %v2513
    %2536 = vmatprep.subr.bf16.mxu0 0
    %2537 = vmatpush1.bf16.msra.mxu0 %v2514
    %2538 = vmatprep.subr.bf16.mxu0 0
    %2539 = vmatpush1.bf16.msra.mxu0 %v2515
    %2540 = vmatprep.subr.bf16.mxu0 0
    %2541 = vmatpush1.bf16.msra.mxu0 0
    %2542 = vmatprep.subr.bf16.mxu0 0
    %2543 = vmatpush1.bf16.msra.mxu0 0
    %2544 = vmatprep.subr.bf16.mxu0 0
    %2545 = vmatpush1.bf16.msra.mxu0 0
    %2546 = vmatprep.subr.bf16.mxu0 0
    %2547 = vmatpush1.bf16.msra.mxu0 0
    %2548 = vmatprep.subr.bf16.mxu0 0
    %2549 = vmatpush1.bf16.msra.mxu0 0
    %2550 = vmatprep.subr.bf16.mxu0 0
    %2551 = vmatpush1.bf16.msra.mxu0 0
    %2552 = vmatprep.subr.bf16.mxu0 0
    %2553 = vmatpush1.bf16.msra.mxu0 0
    %2554 = vmatprep.subr.bf16.mxu0 0
    %2555 = vmatpush1.bf16.msra.mxu0 0
    %2556 = vmatprep.mubr.bf16.mxu0 0
    %2557 = vmatmul.mubr.bf16.gmra.mrb[0].mxu0 %v497
    %v2558 = vpop.f32.mrb[0].mxu0
    %v2559 = vadd.f32 %v2279, %v2558
    %v2560 = vpop.f32.mrb[0].mxu0
    %v2561 = vpop.f32.mrb[0].mxu0
    %v2562 = vadd.f32 %v2282, %v2561
    %v2563 = vpop.f32.mrb[0].mxu0
    %2564 = vmatprep.mubr.bf16.mxu0 0
    %2565 = vmatmul.mubr.bf16.gmra.mrb[0].mxu0 %v498
    %v2566 = vpop.f32.mrb[0].mxu0
    %v2567 = vadd.f32 %v2287, %v2566
    %v2568 = vpop.f32.mrb[0].mxu0
    %v2569 = vpop.f32.mrb[0].mxu0
    %v2570 = vadd.f32 %v2290, %v2569
    %v2571 = vpop.f32.mrb[0].mxu0
    %2572 = vmatprep.mubr.bf16.mxu0 0
    %2573 = vmatmul.mubr.bf16.gmra.mrb[0].mxu0 %v499
    %v2574 = vpop.f32.mrb[0].mxu0
    %v2575 = vadd.f32 %v2295, %v2574
    %v2576 = vpop.f32.mrb[0].mxu0
    %v2577 = vpop.f32.mrb[0].mxu0
    %v2578 = vadd.f32 %v2298, %v2577
    %v2579 = vpop.f32.mrb[0].mxu0
    %2580 = vmatprep.mubr.bf16.mxu0 0
    %2581 = vmatmul.mubr.bf16.gmra.mrb[0].mxu0 %v500
    %v2582 = vpop.f32.mrb[0].mxu0
    %v2583 = vadd.f32 %v2303, %v2582
    %v2584 = vpop.f32.mrb[0].mxu0
    %v2585 = vpop.f32.mrb[0].mxu0
    %v2586 = vadd.f32 %v2306, %v2585
    %v2587 = vpop.f32.mrb[0].mxu0
    %2588 = vmatprep.mubr.bf16.mxu0 0
    %2589 = vmatmul.mubr.bf16.gmra.mrb[0].mxu0 %v501
    %v2590 = vpop.f32.mrb[0].mxu0
    %v2591 = vadd.f32 %v2311, %v2590
    %v2592 = vpop.f32.mrb[0].mxu0
    %v2593 = vpop.f32.mrb[0].mxu0
    %v2594 = vadd.f32 %v2314, %v2593
    %v2595 = vpop.f32.mrb[0].mxu0
    %2596 = vmatprep.mubr.bf16.mxu0 0
    %2597 = vmatmul.mubr.bf16.gmra.mrb[0].mxu0 %v502
    %v2598 = vpop.f32.mrb[0].mxu0
    %v2599 = vadd.f32 %v2319, %v2598
    %v2600 = vpop.f32.mrb[0].mxu0
    %v2601 = vpop.f32.mrb[0].mxu0
    %v2602 = vadd.f32 %v2322, %v2601
    %v2603 = vpop.f32.mrb[0].mxu0
    %2604 = vmatprep.mubr.bf16.mxu0 0
    %2605 = vmatmul.mubr.bf16.gmra.mrb[0].mxu0 %v503
    %v2606 = vpop.f32.mrb[0].mxu0
    %v2607 = vadd.f32 %v2327, %v2606
    %v2608 = vpop.f32.mrb[0].mxu0
    %v2609 = vpop.f32.mrb[0].mxu0
    %v2610 = vadd.f32 %v2330, %v2609
    %v2611 = vpop.f32.mrb[0].mxu0
    %2612 = vmatprep.mubr.bf16.mxu0 0
    %2613 = vmatmul.mubr.bf16.gmra.mrb[0].mxu0 %v504
    %v2614 = vpop.f32.mrb[0].mxu0
    %v2615 = vadd.f32 %v2335, %v2614
    %v2616 = vpop.f32.mrb[0].mxu0
    %v2617 = vpop.f32.mrb[0].mxu0
    %v2618 = vadd.f32 %v2338, %v2617
    %v2619 = vpop.f32.mrb[0].mxu0
    %2620 = vmatprep.mubr.bf16.mxu0 0
    %2621 = vmatmul.mubr.bf16.gmra.mrb[0].mxu0 %v505
    %v2622 = vpop.f32.mrb[0].mxu0
    %v2623 = vadd.f32 %v2343, %v2622
    %v2624 = vpop.f32.mrb[0].mxu0
    %v2625 = vpop.f32.mrb[0].mxu0
    %v2626 = vadd.f32 %v2346, %v2625
    %v2627 = vpop.f32.mrb[0].mxu0
    %2628 = vmatprep.mubr.bf16.mxu0 0
    %2629 = vmatmul.mubr.bf16.gmra.mrb[0].mxu0 %v506
    %v2630 = vpop.f32.mrb[0].mxu0
    %v2631 = vadd.f32 %v2351, %v2630
    %v2632 = vpop.f32.mrb[0].mxu0
    %v2633 = vpop.f32.mrb[0].mxu0
    %v2634 = vadd.f32 %v2354, %v2633
    %v2635 = vpop.f32.mrb[0].mxu0
    %2636 = vmatprep.mubr.bf16.mxu0 0
    %2637 = vmatmul.mubr.bf16.gmra.mrb[0].mxu0 %v507
    %v2638 = vpop.f32.mrb[0].mxu0
    %v2639 = vadd.f32 %v2359, %v2638
    %v2640 = vpop.f32.mrb[0].mxu0
    %v2641 = vpop.f32.mrb[0].mxu0
    %v2642 = vadd.f32 %v2362, %v2641
    %v2643 = vpop.f32.mrb[0].mxu0
    %2644 = vmatprep.mubr.bf16.mxu0 0
    %2645 = vmatmul.mubr.bf16.gmra.mrb[0].mxu0 %v508
    %v2646 = vpop.f32.mrb[0].mxu0
    %v2647 = vadd.f32 %v2367, %v2646
    %v2648 = vpop.f32.mrb[0].mxu0
    %v2649 = vpop.f32.mrb[0].mxu0
    %v2650 = vadd.f32 %v2370, %v2649
    %v2651 = vpop.f32.mrb[0].mxu0
    %2652 = vmatprep.mubr.bf16.mxu0 0
    %2653 = vmatmul.mubr.bf16.gmra.mrb[0].mxu0 %v509
    %v2654 = vpop.f32.mrb[0].mxu0
    %v2655 = vadd.f32 %v2375, %v2654
    %v2656 = vpop.f32.mrb[0].mxu0
    %v2657 = vpop.f32.mrb[0].mxu0
    %v2658 = vadd.f32 %v2378, %v2657
    %v2659 = vpop.f32.mrb[0].mxu0
    %2660 = vmatprep.mubr.bf16.mxu0 0
    %2661 = vmatmul.mubr.bf16.gmra.mrb[0].mxu0 %v510
    %v2662 = vpop.f32.mrb[0].mxu0
    %v2663 = vadd.f32 %v2383, %v2662
    %v2664 = vpop.f32.mrb[0].mxu0
    %v2665 = vpop.f32.mrb[0].mxu0
    %v2666 = vadd.f32 %v2386, %v2665
    %v2667 = vpop.f32.mrb[0].mxu0
    %2668 = vmatprep.mubr.bf16.mxu0 0
    %2669 = vmatmul.mubr.bf16.gmra.mrb[0].mxu0 %v511
    %v2670 = vpop.f32.mrb[0].mxu0
    %v2671 = vadd.f32 %v2391, %v2670
    %v2672 = vpop.f32.mrb[0].mxu0
    %v2673 = vpop.f32.mrb[0].mxu0
    %v2674 = vadd.f32 %v2394, %v2673
    %v2675 = vpop.f32.mrb[0].mxu0
    %2676 = vmatprep.mubr.bf16.mxu0 0
    %2677 = vmatmul.mubr.bf16.gmra.mrb[0].mxu0 %v512
    %v2678 = vpop.f32.mrb[0].mxu0
    %v2679 = vadd.f32 %v2399, %v2678
    %v2680 = vpop.f32.mrb[0].mxu0
    %v2681 = vpop.f32.mrb[0].mxu0
    %v2682 = vadd.f32 %v2402, %v2681
    %v2683 = vpop.f32.mrb[0].mxu0
    %2684 = vmatprep.mubr.bf16.mxu0 0
    %2685 = vmatmul.mubr.bf16.gmra.mrb[0].mxu0 %v513
    %v2686 = vpop.f32.mrb[0].mxu0
    %v2687 = vadd.f32 %v2407, %v2686
    %v2688 = vpop.f32.mrb[0].mxu0
    %v2689 = vpop.f32.mrb[0].mxu0
    %v2690 = vadd.f32 %v2410, %v2689
    %v2691 = vpop.f32.mrb[0].mxu0
    %2692 = vmatprep.mubr.bf16.mxu0 0
    %2693 = vmatmul.mubr.bf16.gmra.mrb[0].mxu0 %v514
    %v2694 = vpop.f32.mrb[0].mxu0
    %v2695 = vadd.f32 %v2415, %v2694
    %v2696 = vpop.f32.mrb[0].mxu0
    %v2697 = vpop.f32.mrb[0].mxu0
    %v2698 = vadd.f32 %v2418, %v2697
    %v2699 = vpop.f32.mrb[0].mxu0
    %2700 = vmatprep.mubr.bf16.mxu0 0
    %2701 = vmatmul.mubr.bf16.gmra.mrb[0].mxu0 %v515
    %v2702 = vpop.f32.mrb[0].mxu0
    %v2703 = vadd.f32 %v2423, %v2702
    %v2704 = vpop.f32.mrb[0].mxu0
    %v2705 = vpop.f32.mrb[0].mxu0
    %v2706 = vadd.f32 %v2426, %v2705
    %v2707 = vpop.f32.mrb[0].mxu0
    %2708 = vmatprep.mubr.bf16.mxu0 0
    %2709 = vmatmul.mubr.bf16.gmra.mrb[0].mxu0 %v516
    %v2710 = vpop.f32.mrb[0].mxu0
    %v2711 = vadd.f32 %v2431, %v2710
    %v2712 = vpop.f32.mrb[0].mxu0
    %v2713 = vpop.f32.mrb[0].mxu0
    %v2714 = vadd.f32 %v2434, %v2713
    %v2715 = vpop.f32.mrb[0].mxu0
    %2716 = vmatprep.mubr.bf16.mxu0 0
    %2717 = vmatmul.mubr.bf16.gmra.mrb[0].mxu0 %v517
    %v2718 = vpop.f32.mrb[0].mxu0
    %v2719 = vadd.f32 %v2439, %v2718
    %v2720 = vpop.f32.mrb[0].mxu0
    %v2721 = vpop.f32.mrb[0].mxu0
    %v2722 = vadd.f32 %v2442, %v2721
    %v2723 = vpop.f32.mrb[0].mxu0
    %2724 = vmatprep.mubr.bf16.mxu0 0
    %2725 = vmatmul.mubr.bf16.gmra.mrb[0].mxu0 %v518
    %v2726 = vpop.f32.mrb[0].mxu0
    %v2727 = vadd.f32 %v2447, %v2726
    %v2728 = vpop.f32.mrb[0].mxu0
    %v2729 = vpop.f32.mrb[0].mxu0
    %v2730 = vadd.f32 %v2450, %v2729
    %v2731 = vpop.f32.mrb[0].mxu0
    %2732 = vmatprep.mubr.bf16.mxu0 0
    %2733 = vmatmul.mubr.bf16.gmra.mrb[0].mxu0 %v519
    %v2734 = vpop.f32.mrb[0].mxu0
    %v2735 = vadd.f32 %v2455, %v2734
    %v2736 = vpop.f32.mrb[0].mxu0
    %v2737 = vpop.f32.mrb[0].mxu0
    %v2738 = vadd.f32 %v2458, %v2737
    %v2739 = vpop.f32.mrb[0].mxu0
    %2740 = vmatprep.mubr.bf16.mxu0 0
    %2741 = vmatmul.mubr.bf16.gmra.mrb[0].mxu0 %v520
    %v2742 = vpop.f32.mrb[0].mxu0
    %v2743 = vadd.f32 %v2463, %v2742
    %v2744 = vpop.f32.mrb[0].mxu0
    %v2745 = vpop.f32.mrb[0].mxu0
    %v2746 = vadd.f32 %v2466, %v2745
    %v2747 = vpop.f32.mrb[0].mxu0
    %2748 = vmatprep.mubr.bf16.mxu0 0
    %2749 = vmatmul.mubr.bf16.gmra.mrb[0].mxu0 %v521
    %v2750 = vpop.f32.mrb[0].mxu0
    %v2751 = vadd.f32 %v2471, %v2750
    %v2752 = vpop.f32.mrb[0].mxu0
    %v2753 = vpop.f32.mrb[0].mxu0
    %v2754 = vpop.f32.mrb[0].mxu0
    %2755 = vdwg.mxu0
    %v2756 = vsel %vm1714, %v1322, 0.0
    %v2757 = vsel %vm1715, %v1323, 0.0
    %v2758 = vsel %vm1716, %v1324, 0.0
    %v2759 = vsel %vm1717, %v1325, 0.0
    %v2760 = vsel %vm1718, %v1326, 0.0
    %v2761 = vsel %vm1719, %v1327, 0.0
    %v2762 = vsel %vm1720, %v1328, 0.0
    %v2763 = vsel %vm1721, %v1329, 0.0
    %v2764 = vsel %vm1722, %v1330, 0.0
    %v2765 = vsel %vm1723, %v1331, 0.0
    %v2766 = vsel %vm1724, %v1332, 0.0
    %v2767 = vsel %vm1725, %v1333, 0.0
    %v2768 = vsel %vm1726, %v1334, 0.0
    %v2769 = vsel %vm1727, %v1335, 0.0
    %v2770 = vsel %vm1728, %v1336, 0.0
    %v2771 = vsel %vm1729, %v1337, 0.0
    %v2772 = vsel %vm1730, %v1338, 0.0
    %v2773 = vsel %vm1731, %v1339, 0.0
    %v2774 = vsel %vm1732, %v1340, 0.0
    %v2775 = vsel %vm1733, %v1341, 0.0
    %v2776 = vsel %vm1734, %v1342, 0.0
    %v2777 = vsel %vm1735, %v1343, 0.0
    %v2778 = vsel %vm1736, %v1344, 0.0
    %v2779 = vsel %vm1737, %v1345, 0.0
    %v2780 = vsel %vm1738, %v1346, 0.0
    %v2781 = vsel %vm1739, %v1347, 0.0
    %v2782 = vsel %vm1740, %v1348, 0.0
    %v2783 = vsel %vm1741, %v1349, 0.0
    %v2784 = vsel %vm1742, %v1350, 0.0
    %v2785 = vsel %vm1743, %v1351, 0.0
    %v2786 = vsel %vm1744, %v1352, 0.0
    %v2787 = vsel %vm1745, %v1353, 0.0
    %v2788 = vsel %vm1746, %v1354, 0.0
    %v2789 = vsel %vm1747, %v1355, 0.0
    %v2790 = vsel %vm1748, %v1356, 0.0
    %v2791 = vsel %vm1749, %v1357, 0.0
    %v2792 = vsel %vm1750, %v1358, 0.0
    %v2793 = vsel %vm1751, %v1359, 0.0
    %v2794 = vsel %vm1752, %v1360, 0.0
    %v2795 = vsel %vm1753, %v1361, 0.0
    %v2796 = vsel %vm1754, %v1362, 0.0
    %v2797 = vsel %vm1755, %v1363, 0.0
    %v2798 = vsel %vm1756, %v1364, 0.0
    %v2799 = vsel %vm1757, %v1365, 0.0
    %v2800 = vsel %vm1758, %v1366, 0.0
    %v2801 = vsel %vm1759, %v1367, 0.0
    %v2802 = vsel %vm1760, %v1368, 0.0
    %v2803 = vsel %vm1761, %v1369, 0.0
    %v2804 = vsel %vm1762, %v1370, 0.0
    %v2805 = vsel %vm1665, %v1469, %v2756
    %v2806 = vsel %vm1666, %v1470, %v2757
    %v2807 = vsel %vm1667, %v1471, %v2758
    %v2808 = vsel %vm1668, %v1472, %v2759
    %v2809 = vsel %vm1669, %v1473, %v2760
    %v2810 = vsel %vm1670, %v1474, %v2761
    %v2811 = vsel %vm1671, %v1475, %v2762
    %v2812 = vsel %vm1672, %v1476, %v2763
    %v2813 = vsel %vm1673, %v1477, %v2764
    %v2814 = vsel %vm1674, %v1478, %v2765
    %v2815 = vsel %vm1675, %v1479, %v2766
    %v2816 = vsel %vm1676, %v1480, %v2767
    %v2817 = vsel %vm1677, %v1481, %v2768
    %v2818 = vsel %vm1678, %v1482, %v2769
    %v2819 = vsel %vm1679, %v1483, %v2770
    %v2820 = vsel %vm1680, %v1484, %v2771
    %v2821 = vsel %vm1681, %v1485, %v2772
    %v2822 = vsel %vm1682, %v1486, %v2773
    %v2823 = vsel %vm1683, %v1487, %v2774
    %v2824 = vsel %vm1684, %v1488, %v2775
    %v2825 = vsel %vm1685, %v1489, %v2776
    %v2826 = vsel %vm1686, %v1490, %v2777
    %v2827 = vsel %vm1687, %v1491, %v2778
    %v2828 = vsel %vm1688, %v1492, %v2779
    %v2829 = vsel %vm1689, %v1493, %v2780
    %v2830 = vsel %vm1690, %v1494, %v2781
    %v2831 = vsel %vm1691, %v1495, %v2782
    %v2832 = vsel %vm1692, %v1496, %v2783
    %v2833 = vsel %vm1693, %v1497, %v2784
    %v2834 = vsel %vm1694, %v1498, %v2785
    %v2835 = vsel %vm1695, %v1499, %v2786
    %v2836 = vsel %vm1696, %v1500, %v2787
    %v2837 = vsel %vm1697, %v1501, %v2788
    %v2838 = vsel %vm1698, %v1502, %v2789
    %v2839 = vsel %vm1699, %v1503, %v2790
    %v2840 = vsel %vm1700, %v1504, %v2791
    %v2841 = vsel %vm1701, %v1505, %v2792
    %v2842 = vsel %vm1702, %v1506, %v2793
    %v2843 = vsel %vm1703, %v1507, %v2794
    %v2844 = vsel %vm1704, %v1508, %v2795
    %v2845 = vsel %vm1705, %v1509, %v2796
    %v2846 = vsel %vm1706, %v1510, %v2797
    %v2847 = vsel %vm1707, %v1511, %v2798
    %v2848 = vsel %vm1708, %v1512, %v2799
    %v2849 = vsel %vm1709, %v1513, %v2800
    %v2850 = vsel %vm1710, %v1514, %v2801
    %v2851 = vsel %vm1711, %v1515, %v2802
    %v2852 = vsel %vm1712, %v1516, %v2803
    %v2853 = vsel %vm1713, %v1517, %v2804
    %v2854 = vsel %vm1616, %v1175, %v2805
    %v2855 = vsel %vm1617, %v1176, %v2806
    %v2856 = vsel %vm1618, %v1177, %v2807
    %v2857 = vsel %vm1619, %v1178, %v2808
    %v2858 = vsel %vm1620, %v1179, %v2809
    %v2859 = vsel %vm1621, %v1180, %v2810
    %v2860 = vsel %vm1622, %v1181, %v2811
    %v2861 = vsel %vm1623, %v1182, %v2812
    %v2862 = vsel %vm1624, %v1183, %v2813
    %v2863 = vsel %vm1625, %v1184, %v2814
    %v2864 = vsel %vm1626, %v1185, %v2815
    %v2865 = vsel %vm1627, %v1186, %v2816
    %v2866 = vsel %vm1628, %v1187, %v2817
    %v2867 = vsel %vm1629, %v1188, %v2818
    %v2868 = vsel %vm1630, %v1189, %v2819
    %v2869 = vsel %vm1631, %v1190, %v2820
    %v2870 = vsel %vm1632, %v1191, %v2821
    %v2871 = vsel %vm1633, %v1192, %v2822
    %v2872 = vsel %vm1634, %v1193, %v2823
    %v2873 = vsel %vm1635, %v1194, %v2824
    %v2874 = vsel %vm1636, %v1195, %v2825
    %v2875 = vsel %vm1637, %v1196, %v2826
    %v2876 = vsel %vm1638, %v1197, %v2827
    %v2877 = vsel %vm1639, %v1198, %v2828
    %v2878 = vsel %vm1640, %v1199, %v2829
    %v2879 = vsel %vm1641, %v1200, %v2830
    %v2880 = vsel %vm1642, %v1201, %v2831
    %v2881 = vsel %vm1643, %v1202, %v2832
    %v2882 = vsel %vm1644, %v1203, %v2833
    %v2883 = vsel %vm1645, %v1204, %v2834
    %v2884 = vsel %vm1646, %v1205, %v2835
    %v2885 = vsel %vm1647, %v1206, %v2836
    %v2886 = vsel %vm1648, %v1207, %v2837
    %v2887 = vsel %vm1649, %v1208, %v2838
    %v2888 = vsel %vm1650, %v1209, %v2839
    %v2889 = vsel %vm1651, %v1210, %v2840
    %v2890 = vsel %vm1652, %v1211, %v2841
    %v2891 = vsel %vm1653, %v1212, %v2842
    %v2892 = vsel %vm1654, %v1213, %v2843
    %v2893 = vsel %vm1655, %v1214, %v2844
    %v2894 = vsel %vm1656, %v1215, %v2845
    %v2895 = vsel %vm1657, %v1216, %v2846
    %v2896 = vsel %vm1658, %v1217, %v2847
    %v2897 = vsel %vm1659, %v1218, %v2848
    %v2898 = vsel %vm1660, %v1219, %v2849
    %v2899 = vsel %vm1661, %v1220, %v2850
    %v2900 = vsel %vm1662, %v1221, %v2851
    %v2901 = vsel %vm1663, %v1222, %v2852
    %v2902 = vsel %vm1664, %v1223, %v2853
    %v2903 = vsel %vm1567, %v881, %v2854
    %v2904 = vsel %vm1568, %v882, %v2855
    %v2905 = vsel %vm1569, %v883, %v2856
    %v2906 = vsel %vm1570, %v884, %v2857
    %v2907 = vsel %vm1571, %v885, %v2858
    %v2908 = vsel %vm1572, %v886, %v2859
    %v2909 = vsel %vm1573, %v887, %v2860
    %v2910 = vsel %vm1574, %v888, %v2861
    %v2911 = vsel %vm1575, %v889, %v2862
    %v2912 = vsel %vm1576, %v890, %v2863
    %v2913 = vsel %vm1577, %v891, %v2864
    %v2914 = vsel %vm1578, %v892, %v2865
    %v2915 = vsel %vm1579, %v893, %v2866
    %v2916 = vsel %vm1580, %v894, %v2867
    %v2917 = vsel %vm1581, %v895, %v2868
    %v2918 = vsel %vm1582, %v896, %v2869
    %v2919 = vsel %vm1583, %v897, %v2870
    %v2920 = vsel %vm1584, %v898, %v2871
    %v2921 = vsel %vm1585, %v899, %v2872
    %v2922 = vsel %vm1586, %v900, %v2873
    %v2923 = vsel %vm1587, %v901, %v2874
    %v2924 = vsel %vm1588, %v902, %v2875
    %v2925 = vsel %vm1589, %v903, %v2876
    %v2926 = vsel %vm1590, %v904, %v2877
    %v2927 = vsel %vm1591, %v905, %v2878
    %v2928 = vsel %vm1592, %v906, %v2879
    %v2929 = vsel %vm1593, %v907, %v2880
    %v2930 = vsel %vm1594, %v908, %v2881
    %v2931 = vsel %vm1595, %v909, %v2882
    %v2932 = vsel %vm1596, %v910, %v2883
    %v2933 = vsel %vm1597, %v911, %v2884
    %v2934 = vsel %vm1598, %v912, %v2885
    %v2935 = vsel %vm1599, %v913, %v2886
    %v2936 = vsel %vm1600, %v914, %v2887
    %v2937 = vsel %vm1601, %v915, %v2888
    %v2938 = vsel %vm1602, %v916, %v2889
    %v2939 = vsel %vm1603, %v917, %v2890
    %v2940 = vsel %vm1604, %v918, %v2891
    %v2941 = vsel %vm1605, %v919, %v2892
    %v2942 = vsel %vm1606, %v920, %v2893
    %v2943 = vsel %vm1607, %v921, %v2894
    %v2944 = vsel %vm1608, %v922, %v2895
    %v2945 = vsel %vm1609, %v923, %v2896
    %v2946 = vsel %vm1610, %v924, %v2897
    %v2947 = vsel %vm1611, %v925, %v2898
    %v2948 = vsel %vm1612, %v926, %v2899
    %v2949 = vsel %vm1613, %v927, %v2900
    %v2950 = vsel %vm1614, %v928, %v2901
    %v2951 = vsel %vm1615, %v929, %v2902
    %v2952 = vpack.c.bf16 %v2904, %v2903
    %v2953 = vpack.c.bf16 %v2906, %v2905
    %v2954 = vpack.c.bf16 %v2908, %v2907
    %v2955 = vpack.c.bf16 %v2910, %v2909
    %v2956 = vpack.c.bf16 %v2912, %v2911
    %v2957 = vpack.c.bf16 %v2914, %v2913
    %v2958 = vpack.c.bf16 %v2916, %v2915
    %v2959 = vpack.c.bf16 %v2918, %v2917
    %v2960 = vpack.c.bf16 %v2920, %v2919
    %v2961 = vpack.c.bf16 %v2922, %v2921
    %v2962 = vpack.c.bf16 %v2924, %v2923
    %v2963 = vpack.c.bf16 %v2926, %v2925
    %v2964 = vpack.c.bf16 %v2928, %v2927
    %v2965 = vpack.c.bf16 %v2930, %v2929
    %v2966 = vpack.c.bf16 %v2932, %v2931
    %v2967 = vpack.c.bf16 %v2934, %v2933
    %v2968 = vpack.c.bf16 %v2936, %v2935
    %v2969 = vpack.c.bf16 %v2938, %v2937
    %v2970 = vpack.c.bf16 %v2940, %v2939
    %v2971 = vpack.c.bf16 %v2942, %v2941
    %v2972 = vpack.c.bf16 %v2944, %v2943
    %v2973 = vpack.c.bf16 %v2946, %v2945
    %v2974 = vpack.c.bf16 %v2948, %v2947
    %v2975 = vpack.c.bf16 %v2950, %v2949
    %v2976 = vpack.c.bf16 %v2951, %v2951
    %v2977 = vld [vmem:[#allocation5 + $0x80] sm:$0xf]
    %v2978 = vld [vmem:[#allocation5 + $0x84] sm:$0xf]
    %v2979 = vld [vmem:[#allocation5 + $0x88] sm:$0xf]
    %v2980 = vld [vmem:[#allocation5 + $0x8c] sm:$0xf]
    %v2981 = vld [vmem:[#allocation5 + $0x90] sm:$0xf]
    %v2982 = vld [vmem:[#allocation5 + $0x94] sm:$0xf]
    %v2983 = vld [vmem:[#allocation5 + $0x98] sm:$0xf]
    %v2984 = vld [vmem:[#allocation5 + $0x9c] sm:$0xf]
    %v2985 = vld [vmem:[#allocation5 + $0xa0] sm:$0xf]
    %v2986 = vld [vmem:[#allocation5 + $0xa4] sm:$0xf]
    %v2987 = vld [vmem:[#allocation5 + $0xa8] sm:$0xf]
    %v2988 = vld [vmem:[#allocation5 + $0xac] sm:$0xf]
    %v2989 = vld [vmem:[#allocation5 + $0xb0] sm:$0xf]
    %v2990 = vld [vmem:[#allocation5 + $0xb4] sm:$0xf]
    %v2991 = vld [vmem:[#allocation5 + $0xb8] sm:$0xf]
    %v2992 = vld [vmem:[#allocation5 + $0xbc] sm:$0xf]
    %v3009 = vunpack.c.l.b16 %v2977
    %v3010 = vunpack.c.l.b16 %v2978
    %v3011 = vunpack.c.l.b16 %v2979
    %v3012 = vunpack.c.l.b16 %v2980
    %v3013 = vunpack.c.l.b16 %v2981
    %v3014 = vunpack.c.l.b16 %v2982
    %v3015 = vunpack.c.l.b16 %v2983
    %v3016 = vunpack.c.l.b16 %v2984
    %v3017 = vunpack.c.l.b16 %v2985
    %v3018 = vunpack.c.l.b16 %v2986
    %v3019 = vunpack.c.l.b16 %v2987
    %v3020 = vunpack.c.l.b16 %v2988
    %v3021 = vunpack.c.l.b16 %v2989
    %v3022 = vunpack.c.l.b16 %v2990
    %v3023 = vunpack.c.l.b16 %v2991
    %v3024 = vunpack.c.l.b16 %v2992
    %v3025 = vpack.c.b16 %v3010, %v3009
    %v3026 = vpack.c.b16 %v3012, %v3011
    %v3027 = vpack.c.b16 %v3014, %v3013
    %v3028 = vpack.c.b16 %v3016, %v3015
    %v3029 = vpack.c.b16 %v3018, %v3017
    %v3030 = vpack.c.b16 %v3020, %v3019
    %v3031 = vpack.c.b16 %v3022, %v3021
    %v3032 = vpack.c.b16 %v3024, %v3023
    %3041 = vmatprep.subr.bf16.mxu0 0
    %3042 = vmatpush1.bf16.msra.mxu0 %v3025
    %3043 = vmatprep.subr.bf16.mxu0 0
    %3044 = vmatpush1.bf16.msra.mxu0 %v3026
    %3045 = vmatprep.subr.bf16.mxu0 0
    %3046 = vmatpush1.bf16.msra.mxu0 %v3027
    %3047 = vmatprep.subr.bf16.mxu0 0
    %3048 = vmatpush1.bf16.msra.mxu0 %v3028
    %3049 = vmatprep.subr.bf16.mxu0 0
    %3050 = vmatpush1.bf16.msra.mxu0 %v3029
    %3051 = vmatprep.subr.bf16.mxu0 0
    %3052 = vmatpush1.bf16.msra.mxu0 %v3030
    %3053 = vmatprep.subr.bf16.mxu0 0
    %3054 = vmatpush1.bf16.msra.mxu0 %v3031
    %3055 = vmatprep.subr.bf16.mxu0 0
    %3056 = vmatpush1.bf16.msra.mxu0 %v3032
    %3057 = vmatprep.subr.bf16.mxu0 0
    %3058 = vmatpush1.bf16.msra.mxu0 0
    %3059 = vmatprep.subr.bf16.mxu0 0
    %3060 = vmatpush1.bf16.msra.mxu0 0
    %3061 = vmatprep.subr.bf16.mxu0 0
    %3062 = vmatpush1.bf16.msra.mxu0 0
    %3063 = vmatprep.subr.bf16.mxu0 0
    %3064 = vmatpush1.bf16.msra.mxu0 0
    %3065 = vmatprep.subr.bf16.mxu0 0
    %3066 = vmatpush1.bf16.msra.mxu0 0
    %3067 = vmatprep.subr.bf16.mxu0 0
    %3068 = vmatpush1.bf16.msra.mxu0 0
    %3069 = vmatprep.subr.bf16.mxu0 0
    %3070 = vmatpush1.bf16.msra.mxu0 0
    %3071 = vmatprep.subr.bf16.mxu0 0
    %3072 = vmatpush1.bf16.msra.mxu0 0
    %3073 = vmatprep.mubr.bf16.mxu0 0
    %3074 = vmatmul.mubr.bf16.gmra.mrb[0].mxu0 %v2952
    %v3075 = vpop.f32.mrb[0].mxu0
    %v3076 = vadd.f32 0.0, %v3075
    %v3077 = vpop.f32.mrb[0].mxu0
    %v3078 = vpop.f32.mrb[0].mxu0
    %v3079 = vadd.f32 0.0, %v3078
    %v3080 = vpop.f32.mrb[0].mxu0
    %3081 = vmatprep.mubr.bf16.mxu0 0
    %3082 = vmatmul.mubr.bf16.gmra.mrb[0].mxu0 %v2953
    %v3083 = vpop.f32.mrb[0].mxu0
    %v3084 = vadd.f32 0.0, %v3083
    %v3085 = vpop.f32.mrb[0].mxu0
    %v3086 = vpop.f32.mrb[0].mxu0
    %v3087 = vadd.f32 0.0, %v3086
    %v3088 = vpop.f32.mrb[0].mxu0
    %3089 = vmatprep.mubr.bf16.mxu0 0
    %3090 = vmatmul.mubr.bf16.gmra.mrb[0].mxu0 %v2954
    %v3091 = vpop.f32.mrb[0].mxu0
    %v3092 = vadd.f32 0.0, %v3091
    %v3093 = vpop.f32.mrb[0].mxu0
    %v3094 = vpop.f32.mrb[0].mxu0
    %v3095 = vadd.f32 0.0, %v3094
    %v3096 = vpop.f32.mrb[0].mxu0
    %3097 = vmatprep.mubr.bf16.mxu0 0
    %3098 = vmatmul.mubr.bf16.gmra.mrb[0].mxu0 %v2955
    %v3099 = vpop.f32.mrb[0].mxu0
    %v3100 = vadd.f32 0.0, %v3099
    %v3101 = vpop.f32.mrb[0].mxu0
    %v3102 = vpop.f32.mrb[0].mxu0
    %v3103 = vadd.f32 0.0, %v3102
    %v3104 = vpop.f32.mrb[0].mxu0
    %3105 = vmatprep.mubr.bf16.mxu0 0
    %3106 = vmatmul.mubr.bf16.gmra.mrb[0].mxu0 %v2956
    %v3107 = vpop.f32.mrb[0].mxu0
    %v3108 = vadd.f32 0.0, %v3107
    %v3109 = vpop.f32.mrb[0].mxu0
    %v3110 = vpop.f32.mrb[0].mxu0
    %v3111 = vadd.f32 0.0, %v3110
    %v3112 = vpop.f32.mrb[0].mxu0
    %3113 = vmatprep.mubr.bf16.mxu0 0
    %3114 = vmatmul.mubr.bf16.gmra.mrb[0].mxu0 %v2957
    %v3115 = vpop.f32.mrb[0].mxu0
    %v3116 = vadd.f32 0.0, %v3115
    %v3117 = vpop.f32.mrb[0].mxu0
    %v3118 = vpop.f32.mrb[0].mxu0
    %v3119 = vadd.f32 0.0, %v3118
    %v3120 = vpop.f32.mrb[0].mxu0
    %3121 = vmatprep.mubr.bf16.mxu0 0
    %3122 = vmatmul.mubr.bf16.gmra.mrb[0].mxu0 %v2958
    %v3123 = vpop.f32.mrb[0].mxu0
    %v3124 = vadd.f32 0.0, %v3123
    %v3125 = vpop.f32.mrb[0].mxu0
    %v3126 = vpop.f32.mrb[0].mxu0
    %v3127 = vadd.f32 0.0, %v3126
    %v3128 = vpop.f32.mrb[0].mxu0
    %3129 = vmatprep.mubr.bf16.mxu0 0
    %3130 = vmatmul.mubr.bf16.gmra.mrb[0].mxu0 %v2959
    %v3131 = vpop.f32.mrb[0].mxu0
    %v3132 = vadd.f32 0.0, %v3131
    %v3133 = vpop.f32.mrb[0].mxu0
    %v3134 = vpop.f32.mrb[0].mxu0
    %v3135 = vadd.f32 0.0, %v3134
    %v3136 = vpop.f32.mrb[0].mxu0
    %3137 = vmatprep.mubr.bf16.mxu0 0
    %3138 = vmatmul.mubr.bf16.gmra.mrb[0].mxu0 %v2960
    %v3139 = vpop.f32.mrb[0].mxu0
    %v3140 = vadd.f32 0.0, %v3139
    %v3141 = vpop.f32.mrb[0].mxu0
    %v3142 = vpop.f32.mrb[0].mxu0
    %v3143 = vadd.f32 0.0, %v3142
    %v3144 = vpop.f32.mrb[0].mxu0
    %3145 = vmatprep.mubr.bf16.mxu0 0
    %3146 = vmatmul.mubr.bf16.gmra.mrb[0].mxu0 %v2961
    %v3147 = vpop.f32.mrb[0].mxu0
    %v3148 = vadd.f32 0.0, %v3147
    %v3149 = vpop.f32.mrb[0].mxu0
    %v3150 = vpop.f32.mrb[0].mxu0
    %v3151 = vadd.f32 0.0, %v3150
    %v3152 = vpop.f32.mrb[0].mxu0
    %3153 = vmatprep.mubr.bf16.mxu0 0
    %3154 = vmatmul.mubr.bf16.gmra.mrb[0].mxu0 %v2962
    %v3155 = vpop.f32.mrb[0].mxu0
    %v3156 = vadd.f32 0.0, %v3155
    %v3157 = vpop.f32.mrb[0].mxu0
    %v3158 = vpop.f32.mrb[0].mxu0
    %v3159 = vadd.f32 0.0, %v3158
    %v3160 = vpop.f32.mrb[0].mxu0
    %3161 = vmatprep.mubr.bf16.mxu0 0
    %3162 = vmatmul.mubr.bf16.gmra.mrb[0].mxu0 %v2963
    %v3163 = vpop.f32.mrb[0].mxu0
    %v3164 = vadd.f32 0.0, %v3163
    %v3165 = vpop.f32.mrb[0].mxu0
    %v3166 = vpop.f32.mrb[0].mxu0
    %v3167 = vadd.f32 0.0, %v3166
    %v3168 = vpop.f32.mrb[0].mxu0
    %3169 = vmatprep.mubr.bf16.mxu0 0
    %3170 = vmatmul.mubr.bf16.gmra.mrb[0].mxu0 %v2964
    %v3171 = vpop.f32.mrb[0].mxu0
    %v3172 = vadd.f32 0.0, %v3171
    %v3173 = vpop.f32.mrb[0].mxu0
    %v3174 = vpop.f32.mrb[0].mxu0
    %v3175 = vadd.f32 0.0, %v3174
    %v3176 = vpop.f32.mrb[0].mxu0
    %3177 = vmatprep.mubr.bf16.mxu0 0
    %3178 = vmatmul.mubr.bf16.gmra.mrb[0].mxu0 %v2965
    %v3179 = vpop.f32.mrb[0].mxu0
    %v3180 = vadd.f32 0.0, %v3179
    %v3181 = vpop.f32.mrb[0].mxu0
    %v3182 = vpop.f32.mrb[0].mxu0
    %v3183 = vadd.f32 0.0, %v3182
    %v3184 = vpop.f32.mrb[0].mxu0
    %3185 = vmatprep.mubr.bf16.mxu0 0
    %3186 = vmatmul.mubr.bf16.gmra.mrb[0].mxu0 %v2966
    %v3187 = vpop.f32.mrb[0].mxu0
    %v3188 = vadd.f32 0.0, %v3187
    %v3189 = vpop.f32.mrb[0].mxu0
    %v3190 = vpop.f32.mrb[0].mxu0
    %v3191 = vadd.f32 0.0, %v3190
    %v3192 = vpop.f32.mrb[0].mxu0
    %3193 = vmatprep.mubr.bf16.mxu0 0
    %3194 = vmatmul.mubr.bf16.gmra.mrb[0].mxu0 %v2967
    %v3195 = vpop.f32.mrb[0].mxu0
    %v3196 = vadd.f32 0.0, %v3195
    %v3197 = vpop.f32.mrb[0].mxu0
    %v3198 = vpop.f32.mrb[0].mxu0
    %v3199 = vadd.f32 0.0, %v3198
    %v3200 = vpop.f32.mrb[0].mxu0
    %3201 = vmatprep.mubr.bf16.mxu0 0
    %3202 = vmatmul.mubr.bf16.gmra.mrb[0].mxu0 %v2968
    %v3203 = vpop.f32.mrb[0].mxu0
    %v3204 = vadd.f32 0.0, %v3203
    %v3205 = vpop.f32.mrb[0].mxu0
    %v3206 = vpop.f32.mrb[0].mxu0
    %v3207 = vadd.f32 0.0, %v3206
    %v3208 = vpop.f32.mrb[0].mxu0
    %3209 = vmatprep.mubr.bf16.mxu0 0
    %3210 = vmatmul.mubr.bf16.gmra.mrb[0].mxu0 %v2969
    %v3211 = vpop.f32.mrb[0].mxu0
    %v3212 = vadd.f32 0.0, %v3211
    %v3213 = vpop.f32.mrb[0].mxu0
    %v3214 = vpop.f32.mrb[0].mxu0
    %v3215 = vadd.f32 0.0, %v3214
    %v3216 = vpop.f32.mrb[0].mxu0
    %3217 = vmatprep.mubr.bf16.mxu0 0
    %3218 = vmatmul.mubr.bf16.gmra.mrb[0].mxu0 %v2970
    %v3219 = vpop.f32.mrb[0].mxu0
    %v3220 = vadd.f32 0.0, %v3219
    %v3221 = vpop.f32.mrb[0].mxu0
    %v3222 = vpop.f32.mrb[0].mxu0
    %v3223 = vadd.f32 0.0, %v3222
    %v3224 = vpop.f32.mrb[0].mxu0
    %3225 = vmatprep.mubr.bf16.mxu0 0
    %3226 = vmatmul.mubr.bf16.gmra.mrb[0].mxu0 %v2971
    %v3227 = vpop.f32.mrb[0].mxu0
    %v3228 = vadd.f32 0.0, %v3227
    %v3229 = vpop.f32.mrb[0].mxu0
    %v3230 = vpop.f32.mrb[0].mxu0
    %v3231 = vadd.f32 0.0, %v3230
    %v3232 = vpop.f32.mrb[0].mxu0
    %3233 = vmatprep.mubr.bf16.mxu0 0
    %3234 = vmatmul.mubr.bf16.gmra.mrb[0].mxu0 %v2972
    %v3235 = vpop.f32.mrb[0].mxu0
    %v3236 = vadd.f32 0.0, %v3235
    %v3237 = vpop.f32.mrb[0].mxu0
    %v3238 = vpop.f32.mrb[0].mxu0
    %v3239 = vadd.f32 0.0, %v3238
    %v3240 = vpop.f32.mrb[0].mxu0
    %3241 = vmatprep.mubr.bf16.mxu0 0
    %3242 = vmatmul.mubr.bf16.gmra.mrb[0].mxu0 %v2973
    %v3243 = vpop.f32.mrb[0].mxu0
    %v3244 = vadd.f32 0.0, %v3243
    %v3245 = vpop.f32.mrb[0].mxu0
    %v3246 = vpop.f32.mrb[0].mxu0
    %v3247 = vadd.f32 0.0, %v3246
    %v3248 = vpop.f32.mrb[0].mxu0
    %3249 = vmatprep.mubr.bf16.mxu0 0
    %3250 = vmatmul.mubr.bf16.gmra.mrb[0].mxu0 %v2974
    %v3251 = vpop.f32.mrb[0].mxu0
    %v3252 = vadd.f32 0.0, %v3251
    %v3253 = vpop.f32.mrb[0].mxu0
    %v3254 = vpop.f32.mrb[0].mxu0
    %v3255 = vadd.f32 0.0, %v3254
    %v3256 = vpop.f32.mrb[0].mxu0
    %3257 = vmatprep.mubr.bf16.mxu0 0
    %3258 = vmatmul.mubr.bf16.gmra.mrb[0].mxu0 %v2975
    %v3259 = vpop.f32.mrb[0].mxu0
    %v3260 = vadd.f32 0.0, %v3259
    %v3261 = vpop.f32.mrb[0].mxu0
    %v3262 = vpop.f32.mrb[0].mxu0
    %v3263 = vadd.f32 0.0, %v3262
    %v3264 = vpop.f32.mrb[0].mxu0
    %3265 = vmatprep.mubr.bf16.mxu0 0
    %3266 = vmatmul.mubr.bf16.gmra.mrb[0].mxu0 %v2976
    %v3267 = vpop.f32.mrb[0].mxu0
    %v3268 = vadd.f32 0.0, %v3267
    %v3269 = vpop.f32.mrb[0].mxu0
    %v3270 = vpop.f32.mrb[0].mxu0
    %v3271 = vpop.f32.mrb[0].mxu0
    %3272 = vdwg.mxu0
    %v3273 = vadd.f32 %v2559, %v3076
    %v3274 = vadd.f32 %v2562, %v3079
    %v3275 = vadd.f32 %v2567, %v3084
    %v3276 = vadd.f32 %v2570, %v3087
    %v3277 = vadd.f32 %v2575, %v3092
    %v3278 = vadd.f32 %v2578, %v3095
    %v3279 = vadd.f32 %v2583, %v3100
    %v3280 = vadd.f32 %v2586, %v3103
    %v3281 = vadd.f32 %v2591, %v3108
    %v3282 = vadd.f32 %v2594, %v3111
    %v3283 = vadd.f32 %v2599, %v3116
    %v3284 = vadd.f32 %v2602, %v3119
    %v3285 = vadd.f32 %v2607, %v3124
    %v3286 = vadd.f32 %v2610, %v3127
    %v3287 = vadd.f32 %v2615, %v3132
    %v3288 = vadd.f32 %v2618, %v3135
    %v3289 = vadd.f32 %v2623, %v3140
    %v3290 = vadd.f32 %v2626, %v3143
    %v3291 = vadd.f32 %v2631, %v3148
    %v3292 = vadd.f32 %v2634, %v3151
    %v3293 = vadd.f32 %v2639, %v3156
    %v3294 = vadd.f32 %v2642, %v3159
    %v3295 = vadd.f32 %v2647, %v3164
    %v3296 = vadd.f32 %v2650, %v3167
    %v3297 = vadd.f32 %v2655, %v3172
    %v3298 = vadd.f32 %v2658, %v3175
    %v3299 = vadd.f32 %v2663, %v3180
    %v3300 = vadd.f32 %v2666, %v3183
    %v3301 = vadd.f32 %v2671, %v3188
    %v3302 = vadd.f32 %v2674, %v3191
    %v3303 = vadd.f32 %v2679, %v3196
    %v3304 = vadd.f32 %v2682, %v3199
    %v3305 = vadd.f32 %v2687, %v3204
    %v3306 = vadd.f32 %v2690, %v3207
    %v3307 = vadd.f32 %v2695, %v3212
    %v3308 = vadd.f32 %v2698, %v3215
    %v3309 = vadd.f32 %v2703, %v3220
    %v3310 = vadd.f32 %v2706, %v3223
    %v3311 = vadd.f32 %v2711, %v3228
    %v3312 = vadd.f32 %v2714, %v3231
    %v3313 = vadd.f32 %v2719, %v3236
    %v3314 = vadd.f32 %v2722, %v3239
    %v3315 = vadd.f32 %v2727, %v3244
    %v3316 = vadd.f32 %v2730, %v3247
    %v3317 = vadd.f32 %v2735, %v3252
    %v3318 = vadd.f32 %v2738, %v3255
    %v3319 = vadd.f32 %v2743, %v3260
    %v3320 = vadd.f32 %v2746, %v3263
    %v3321 = vadd.f32 %v2751, %v3268
    %v3322 = vsel %vm1763, %v1322, 0.0
    %v3323 = vsel %vm1764, %v1323, 0.0
    %v3324 = vsel %vm1765, %v1324, 0.0
    %v3325 = vsel %vm1766, %v1325, 0.0
    %v3326 = vsel %vm1767, %v1326, 0.0
    %v3327 = vsel %vm1768, %v1327, 0.0
    %v3328 = vsel %vm1769, %v1328, 0.0
    %v3329 = vsel %vm1770, %v1329, 0.0
    %v3330 = vsel %vm1771, %v1330, 0.0
    %v3331 = vsel %vm1772, %v1331, 0.0
    %v3332 = vsel %vm1773, %v1332, 0.0
    %v3333 = vsel %vm1774, %v1333, 0.0
    %v3334 = vsel %vm1775, %v1334, 0.0
    %v3335 = vsel %vm1776, %v1335, 0.0
    %v3336 = vsel %vm1777, %v1336, 0.0
    %v3337 = vsel %vm1778, %v1337, 0.0
    %v3338 = vsel %vm1779, %v1338, 0.0
    %v3339 = vsel %vm1780, %v1339, 0.0
    %v3340 = vsel %vm1781, %v1340, 0.0
    %v3341 = vsel %vm1782, %v1341, 0.0
    %v3342 = vsel %vm1783, %v1342, 0.0
    %v3343 = vsel %vm1784, %v1343, 0.0
    %v3344 = vsel %vm1785, %v1344, 0.0
    %v3345 = vsel %vm1786, %v1345, 0.0
    %v3346 = vsel %vm1787, %v1346, 0.0
    %v3347 = vsel %vm1788, %v1347, 0.0
    %v3348 = vsel %vm1789, %v1348, 0.0
    %v3349 = vsel %vm1790, %v1349, 0.0
    %v3350 = vsel %vm1791, %v1350, 0.0
    %v3351 = vsel %vm1792, %v1351, 0.0
    %v3352 = vsel %vm1793, %v1352, 0.0
    %v3353 = vsel %vm1794, %v1353, 0.0
    %v3354 = vsel %vm1795, %v1354, 0.0
    %v3355 = vsel %vm1796, %v1355, 0.0
    %v3356 = vsel %vm1797, %v1356, 0.0
    %v3357 = vsel %vm1798, %v1357, 0.0
    %v3358 = vsel %vm1799, %v1358, 0.0
    %v3359 = vsel %vm1800, %v1359, 0.0
    %v3360 = vsel %vm1801, %v1360, 0.0
    %v3361 = vsel %vm1802, %v1361, 0.0
    %v3362 = vsel %vm1803, %v1362, 0.0
    %v3363 = vsel %vm1804, %v1363, 0.0
    %v3364 = vsel %vm1805, %v1364, 0.0
    %v3365 = vsel %vm1806, %v1365, 0.0
    %v3366 = vsel %vm1807, %v1366, 0.0
    %v3367 = vsel %vm1808, %v1367, 0.0
    %v3368 = vsel %vm1809, %v1368, 0.0
    %v3369 = vsel %vm1810, %v1369, 0.0
    %v3370 = vsel %vm1811, %v1370, 0.0
    %v3371 = vsel %vm1714, %v1469, %v3322
    %v3372 = vsel %vm1715, %v1470, %v3323
    %v3373 = vsel %vm1716, %v1471, %v3324
    %v3374 = vsel %vm1717, %v1472, %v3325
    %v3375 = vsel %vm1718, %v1473, %v3326
    %v3376 = vsel %vm1719, %v1474, %v3327
    %v3377 = vsel %vm1720, %v1475, %v3328
    %v3378 = vsel %vm1721, %v1476, %v3329
    %v3379 = vsel %vm1722, %v1477, %v3330
    %v3380 = vsel %vm1723, %v1478, %v3331
    %v3381 = vsel %vm1724, %v1479, %v3332
    %v3382 = vsel %vm1725, %v1480, %v3333
    %v3383 = vsel %vm1726, %v1481, %v3334
    %v3384 = vsel %vm1727, %v1482, %v3335
    %v3385 = vsel %vm1728, %v1483, %v3336
    %v3386 = vsel %vm1729, %v1484, %v3337
    %v3387 = vsel %vm1730, %v1485, %v3338
    %v3388 = vsel %vm1731, %v1486, %v3339
    %v3389 = vsel %vm1732, %v1487, %v3340
    %v3390 = vsel %vm1733, %v1488, %v3341
    %v3391 = vsel %vm1734, %v1489, %v3342
    %v3392 = vsel %vm1735, %v1490, %v3343
    %v3393 = vsel %vm1736, %v1491, %v3344
    %v3394 = vsel %vm1737, %v1492, %v3345
    %v3395 = vsel %vm1738, %v1493, %v3346
    %v3396 = vsel %vm1739, %v1494, %v3347
    %v3397 = vsel %vm1740, %v1495, %v3348
    %v3398 = vsel %vm1741, %v1496, %v3349
    %v3399 = vsel %vm1742, %v1497, %v3350
    %v3400 = vsel %vm1743, %v1498, %v3351
    %v3401 = vsel %vm1744, %v1499, %v3352
    %v3402 = vsel %vm1745, %v1500, %v3353
    %v3403 = vsel %vm1746, %v1501, %v3354
    %v3404 = vsel %vm1747, %v1502, %v3355
    %v3405 = vsel %vm1748, %v1503, %v3356
    %v3406 = vsel %vm1749, %v1504, %v3357
    %v3407 = vsel %vm1750, %v1505, %v3358
    %v3408 = vsel %vm1751, %v1506, %v3359
    %v3409 = vsel %vm1752, %v1507, %v3360
    %v3410 = vsel %vm1753, %v1508, %v3361
    %v3411 = vsel %vm1754, %v1509, %v3362
    %v3412 = vsel %vm1755, %v1510, %v3363
    %v3413 = vsel %vm1756, %v1511, %v3364
    %v3414 = vsel %vm1757, %v1512, %v3365
    %v3415 = vsel %vm1758, %v1513, %v3366
    %v3416 = vsel %vm1759, %v1514, %v3367
    %v3417 = vsel %vm1760, %v1515, %v3368
    %v3418 = vsel %vm1761, %v1516, %v3369
    %v3419 = vsel %vm1762, %v1517, %v3370
    %v3420 = vsel %vm1665, %v1175, %v3371
    %v3421 = vsel %vm1666, %v1176, %v3372
    %v3422 = vsel %vm1667, %v1177, %v3373
    %v3423 = vsel %vm1668, %v1178, %v3374
    %v3424 = vsel %vm1669, %v1179, %v3375
    %v3425 = vsel %vm1670, %v1180, %v3376
    %v3426 = vsel %vm1671, %v1181, %v3377
    %v3427 = vsel %vm1672, %v1182, %v3378
    %v3428 = vsel %vm1673, %v1183, %v3379
    %v3429 = vsel %vm1674, %v1184, %v3380
    %v3430 = vsel %vm1675, %v1185, %v3381
    %v3431 = vsel %vm1676, %v1186, %v3382
    %v3432 = vsel %vm1677, %v1187, %v3383
    %v3433 = vsel %vm1678, %v1188, %v3384
    %v3434 = vsel %vm1679, %v1189, %v3385
    %v3435 = vsel %vm1680, %v1190, %v3386
    %v3436 = vsel %vm1681, %v1191, %v3387
    %v3437 = vsel %vm1682, %v1192, %v3388
    %v3438 = vsel %vm1683, %v1193, %v3389
    %v3439 = vsel %vm1684, %v1194, %v3390
    %v3440 = vsel %vm1685, %v1195, %v3391
    %v3441 = vsel %vm1686, %v1196, %v3392
    %v3442 = vsel %vm1687, %v1197, %v3393
    %v3443 = vsel %vm1688, %v1198, %v3394
    %v3444 = vsel %vm1689, %v1199, %v3395
    %v3445 = vsel %vm1690, %v1200, %v3396
    %v3446 = vsel %vm1691, %v1201, %v3397
    %v3447 = vsel %vm1692, %v1202, %v3398
    %v3448 = vsel %vm1693, %v1203, %v3399
    %v3449 = vsel %vm1694, %v1204, %v3400
    %v3450 = vsel %vm1695, %v1205, %v3401
    %v3451 = vsel %vm1696, %v1206, %v3402
    %v3452 = vsel %vm1697, %v1207, %v3403
    %v3453 = vsel %vm1698, %v1208, %v3404
    %v3454 = vsel %vm1699, %v1209, %v3405
    %v3455 = vsel %vm1700, %v1210, %v3406
    %v3456 = vsel %vm1701, %v1211, %v3407
    %v3457 = vsel %vm1702, %v1212, %v3408
    %v3458 = vsel %vm1703, %v1213, %v3409
    %v3459 = vsel %vm1704, %v1214, %v3410
    %v3460 = vsel %vm1705, %v1215, %v3411
    %v3461 = vsel %vm1706, %v1216, %v3412
    %v3462 = vsel %vm1707, %v1217, %v3413
    %v3463 = vsel %vm1708, %v1218, %v3414
    %v3464 = vsel %vm1709, %v1219, %v3415
    %v3465 = vsel %vm1710, %v1220, %v3416
    %v3466 = vsel %vm1711, %v1221, %v3417
    %v3467 = vsel %vm1712, %v1222, %v3418
    %v3468 = vsel %vm1713, %v1223, %v3419
    %v3469 = vsel %vm1616, %v881, %v3420
    %v3470 = vsel %vm1617, %v882, %v3421
    %v3471 = vsel %vm1618, %v883, %v3422
    %v3472 = vsel %vm1619, %v884, %v3423
    %v3473 = vsel %vm1620, %v885, %v3424
    %v3474 = vsel %vm1621, %v886, %v3425
    %v3475 = vsel %vm1622, %v887, %v3426
    %v3476 = vsel %vm1623, %v888, %v3427
    %v3477 = vsel %vm1624, %v889, %v3428
    %v3478 = vsel %vm1625, %v890, %v3429
    %v3479 = vsel %vm1626, %v891, %v3430
    %v3480 = vsel %vm1627, %v892, %v3431
    %v3481 = vsel %vm1628, %v893, %v3432
    %v3482 = vsel %vm1629, %v894, %v3433
    %v3483 = vsel %vm1630, %v895, %v3434
    %v3484 = vsel %vm1631, %v896, %v3435
    %v3485 = vsel %vm1632, %v897, %v3436
    %v3486 = vsel %vm1633, %v898, %v3437
    %v3487 = vsel %vm1634, %v899, %v3438
    %v3488 = vsel %vm1635, %v900, %v3439
    %v3489 = vsel %vm1636, %v901, %v3440
    %v3490 = vsel %vm1637, %v902, %v3441
    %v3491 = vsel %vm1638, %v903, %v3442
    %v3492 = vsel %vm1639, %v904, %v3443
    %v3493 = vsel %vm1640, %v905, %v3444
    %v3494 = vsel %vm1641, %v906, %v3445
    %v3495 = vsel %vm1642, %v907, %v3446
    %v3496 = vsel %vm1643, %v908, %v3447
    %v3497 = vsel %vm1644, %v909, %v3448
    %v3498 = vsel %vm1645, %v910, %v3449
    %v3499 = vsel %vm1646, %v911, %v3450
    %v3500 = vsel %vm1647, %v912, %v3451
    %v3501 = vsel %vm1648, %v913, %v3452
    %v3502 = vsel %vm1649, %v914, %v3453
    %v3503 = vsel %vm1650, %v915, %v3454
    %v3504 = vsel %vm1651, %v916, %v3455
    %v3505 = vsel %vm1652, %v917, %v3456
    %v3506 = vsel %vm1653, %v918, %v3457
    %v3507 = vsel %vm1654, %v919, %v3458
    %v3508 = vsel %vm1655, %v920, %v3459
    %v3509 = vsel %vm1656, %v921, %v3460
    %v3510 = vsel %vm1657, %v922, %v3461
    %v3511 = vsel %vm1658, %v923, %v3462
    %v3512 = vsel %vm1659, %v924, %v3463
    %v3513 = vsel %vm1660, %v925, %v3464
    %v3514 = vsel %vm1661, %v926, %v3465
    %v3515 = vsel %vm1662, %v927, %v3466
    %v3516 = vsel %vm1663, %v928, %v3467
    %v3517 = vsel %vm1664, %v929, %v3468
    %v3518 = vpack.c.bf16 %v3470, %v3469
    %v3519 = vpack.c.bf16 %v3472, %v3471
    %v3520 = vpack.c.bf16 %v3474, %v3473
    %v3521 = vpack.c.bf16 %v3476, %v3475
    %v3522 = vpack.c.bf16 %v3478, %v3477
    %v3523 = vpack.c.bf16 %v3480, %v3479
    %v3524 = vpack.c.bf16 %v3482, %v3481
    %v3525 = vpack.c.bf16 %v3484, %v3483
    %v3526 = vpack.c.bf16 %v3486, %v3485
    %v3527 = vpack.c.bf16 %v3488, %v3487
    %v3528 = vpack.c.bf16 %v3490, %v3489
    %v3529 = vpack.c.bf16 %v3492, %v3491
    %v3530 = vpack.c.bf16 %v3494, %v3493
    %v3531 = vpack.c.bf16 %v3496, %v3495
    %v3532 = vpack.c.bf16 %v3498, %v3497
    %v3533 = vpack.c.bf16 %v3500, %v3499
    %v3534 = vpack.c.bf16 %v3502, %v3501
    %v3535 = vpack.c.bf16 %v3504, %v3503
    %v3536 = vpack.c.bf16 %v3506, %v3505
    %v3537 = vpack.c.bf16 %v3508, %v3507
    %v3538 = vpack.c.bf16 %v3510, %v3509
    %v3539 = vpack.c.bf16 %v3512, %v3511
    %v3540 = vpack.c.bf16 %v3514, %v3513
    %v3541 = vpack.c.bf16 %v3516, %v3515
    %v3542 = vpack.c.bf16 %v3517, %v3517
    %v3543 = vld [vmem:[#allocation5 + $0xc0] sm:$0xf]
    %v3544 = vld [vmem:[#allocation5 + $0xc4] sm:$0xf]
    %v3545 = vld [vmem:[#allocation5 + $0xc8] sm:$0xf]
    %v3546 = vld [vmem:[#allocation5 + $0xcc] sm:$0xf]
    %v3547 = vld [vmem:[#allocation5 + $0xd0] sm:$0xf]
    %v3548 = vld [vmem:[#allocation5 + $0xd4] sm:$0xf]
    %v3549 = vld [vmem:[#allocation5 + $0xd8] sm:$0xf]
    %v3550 = vld [vmem:[#allocation5 + $0xdc] sm:$0xf]
    %v3551 = vld [vmem:[#allocation5 + $0xe0] sm:$0xf]
    %v3552 = vld [vmem:[#allocation5 + $0xe4] sm:$0xf]
    %v3553 = vld [vmem:[#allocation5 + $0xe8] sm:$0xf]
    %v3554 = vld [vmem:[#allocation5 + $0xec] sm:$0xf]
    %v3555 = vld [vmem:[#allocation5 + $0xf0] sm:$0xf]
    %v3556 = vld [vmem:[#allocation5 + $0xf4] sm:$0xf]
    %v3557 = vld [vmem:[#allocation5 + $0xf8] sm:$0xf]
    %v3558 = vld [vmem:[#allocation5 + $0xfc] sm:$0xf]
    %v3575 = vunpack.c.l.b16 %v3543
    %v3576 = vunpack.c.l.b16 %v3544
    %v3577 = vunpack.c.l.b16 %v3545
    %v3578 = vunpack.c.l.b16 %v3546
    %v3579 = vunpack.c.l.b16 %v3547
    %v3580 = vunpack.c.l.b16 %v3548
    %v3581 = vunpack.c.l.b16 %v3549
    %v3582 = vunpack.c.l.b16 %v3550
    %v3583 = vunpack.c.l.b16 %v3551
    %v3584 = vunpack.c.l.b16 %v3552
    %v3585 = vunpack.c.l.b16 %v3553
    %v3586 = vunpack.c.l.b16 %v3554
    %v3587 = vunpack.c.l.b16 %v3555
    %v3588 = vunpack.c.l.b16 %v3556
    %v3589 = vunpack.c.l.b16 %v3557
    %v3590 = vunpack.c.l.b16 %v3558
    %v3591 = vpack.c.b16 %v3576, %v3575
    %v3592 = vpack.c.b16 %v3578, %v3577
    %v3593 = vpack.c.b16 %v3580, %v3579
    %v3594 = vpack.c.b16 %v3582, %v3581
    %v3595 = vpack.c.b16 %v3584, %v3583
    %v3596 = vpack.c.b16 %v3586, %v3585
    %v3597 = vpack.c.b16 %v3588, %v3587
    %v3598 = vpack.c.b16 %v3590, %v3589
    %3607 = vmatprep.subr.bf16.mxu0 0
    %3608 = vmatpush1.bf16.msra.mxu0 %v3591
    %3609 = vmatprep.subr.bf16.mxu0 0
    %3610 = vmatpush1.bf16.msra.mxu0 %v3592
    %3611 = vmatprep.subr.bf16.mxu0 0
    %3612 = vmatpush1.bf16.msra.mxu0 %v3593
    %3613 = vmatprep.subr.bf16.mxu0 0
    %3614 = vmatpush1.bf16.msra.mxu0 %v3594
    %3615 = vmatprep.subr.bf16.mxu0 0
    %3616 = vmatpush1.bf16.msra.mxu0 %v3595
    %3617 = vmatprep.subr.bf16.mxu0 0
    %3618 = vmatpush1.bf16.msra.mxu0 %v3596
    %3619 = vmatprep.subr.bf16.mxu0 0
    %3620 = vmatpush1.bf16.msra.mxu0 %v3597
    %3621 = vmatprep.subr.bf16.mxu0 0
    %3622 = vmatpush1.bf16.msra.mxu0 %v3598
    %3623 = vmatprep.subr.bf16.mxu0 0
    %3624 = vmatpush1.bf16.msra.mxu0 0
    %3625 = vmatprep.subr.bf16.mxu0 0
    %3626 = vmatpush1.bf16.msra.mxu0 0
    %3627 = vmatprep.subr.bf16.mxu0 0
    %3628 = vmatpush1.bf16.msra.mxu0 0
    %3629 = vmatprep.subr.bf16.mxu0 0
    %3630 = vmatpush1.bf16.msra.mxu0 0
    %3631 = vmatprep.subr.bf16.mxu0 0
    %3632 = vmatpush1.bf16.msra.mxu0 0
    %3633 = vmatprep.subr.bf16.mxu0 0
    %3634 = vmatpush1.bf16.msra.mxu0 0
    %3635 = vmatprep.subr.bf16.mxu0 0
    %3636 = vmatpush1.bf16.msra.mxu0 0
    %3637 = vmatprep.subr.bf16.mxu0 0
    %3638 = vmatpush1.bf16.msra.mxu0 0
    %3639 = vmatprep.mubr.bf16.mxu0 0
    %3640 = vmatmul.mubr.bf16.gmra.mrb[0].mxu0 %v3518
    %v3641 = vpop.f32.mrb[0].mxu0
    %v3642 = vadd.f32 0.0, %v3641
    %v3643 = vpop.f32.mrb[0].mxu0
    %v3644 = vpop.f32.mrb[0].mxu0
    %v3645 = vadd.f32 0.0, %v3644
    %v3646 = vpop.f32.mrb[0].mxu0
    %3647 = vmatprep.mubr.bf16.mxu0 0
    %3648 = vmatmul.mubr.bf16.gmra.mrb[0].mxu0 %v3519
    %v3649 = vpop.f32.mrb[0].mxu0
    %v3650 = vadd.f32 0.0, %v3649
    %v3651 = vpop.f32.mrb[0].mxu0
    %v3652 = vpop.f32.mrb[0].mxu0
    %v3653 = vadd.f32 0.0, %v3652
    %v3654 = vpop.f32.mrb[0].mxu0
    %3655 = vmatprep.mubr.bf16.mxu0 0
    %3656 = vmatmul.mubr.bf16.gmra.mrb[0].mxu0 %v3520
    %v3657 = vpop.f32.mrb[0].mxu0
    %v3658 = vadd.f32 0.0, %v3657
    %v3659 = vpop.f32.mrb[0].mxu0
    %v3660 = vpop.f32.mrb[0].mxu0
    %v3661 = vadd.f32 0.0, %v3660
    %v3662 = vpop.f32.mrb[0].mxu0
    %3663 = vmatprep.mubr.bf16.mxu0 0
    %3664 = vmatmul.mubr.bf16.gmra.mrb[0].mxu0 %v3521
    %v3665 = vpop.f32.mrb[0].mxu0
    %v3666 = vadd.f32 0.0, %v3665
    %v3667 = vpop.f32.mrb[0].mxu0
    %v3668 = vpop.f32.mrb[0].mxu0
    %v3669 = vadd.f32 0.0, %v3668
    %v3670 = vpop.f32.mrb[0].mxu0
    %3671 = vmatprep.mubr.bf16.mxu0 0
    %3672 = vmatmul.mubr.bf16.gmra.mrb[0].mxu0 %v3522
    %v3673 = vpop.f32.mrb[0].mxu0
    %v3674 = vadd.f32 0.0, %v3673
    %v3675 = vpop.f32.mrb[0].mxu0
    %v3676 = vpop.f32.mrb[0].mxu0
    %v3677 = vadd.f32 0.0, %v3676
    %v3678 = vpop.f32.mrb[0].mxu0
    %3679 = vmatprep.mubr.bf16.mxu0 0
    %3680 = vmatmul.mubr.bf16.gmra.mrb[0].mxu0 %v3523
    %v3681 = vpop.f32.mrb[0].mxu0
    %v3682 = vadd.f32 0.0, %v3681
    %v3683 = vpop.f32.mrb[0].mxu0
    %v3684 = vpop.f32.mrb[0].mxu0
    %v3685 = vadd.f32 0.0, %v3684
    %v3686 = vpop.f32.mrb[0].mxu0
    %3687 = vmatprep.mubr.bf16.mxu0 0
    %3688 = vmatmul.mubr.bf16.gmra.mrb[0].mxu0 %v3524
    %v3689 = vpop.f32.mrb[0].mxu0
    %v3690 = vadd.f32 0.0, %v3689
    %v3691 = vpop.f32.mrb[0].mxu0
    %v3692 = vpop.f32.mrb[0].mxu0
    %v3693 = vadd.f32 0.0, %v3692
    %v3694 = vpop.f32.mrb[0].mxu0
    %3695 = vmatprep.mubr.bf16.mxu0 0
    %3696 = vmatmul.mubr.bf16.gmra.mrb[0].mxu0 %v3525
    %v3697 = vpop.f32.mrb[0].mxu0
    %v3698 = vadd.f32 0.0, %v3697
    %v3699 = vpop.f32.mrb[0].mxu0
    %v3700 = vpop.f32.mrb[0].mxu0
    %v3701 = vadd.f32 0.0, %v3700
    %v3702 = vpop.f32.mrb[0].mxu0
    %3703 = vmatprep.mubr.bf16.mxu0 0
    %3704 = vmatmul.mubr.bf16.gmra.mrb[0].mxu0 %v3526
    %v3705 = vpop.f32.mrb[0].mxu0
    %v3706 = vadd.f32 0.0, %v3705
    %v3707 = vpop.f32.mrb[0].mxu0
    %v3708 = vpop.f32.mrb[0].mxu0
    %v3709 = vadd.f32 0.0, %v3708
    %v3710 = vpop.f32.mrb[0].mxu0
    %3711 = vmatprep.mubr.bf16.mxu0 0
    %3712 = vmatmul.mubr.bf16.gmra.mrb[0].mxu0 %v3527
    %v3713 = vpop.f32.mrb[0].mxu0
    %v3714 = vadd.f32 0.0, %v3713
    %v3715 = vpop.f32.mrb[0].mxu0
    %v3716 = vpop.f32.mrb[0].mxu0
    %v3717 = vadd.f32 0.0, %v3716
    %v3718 = vpop.f32.mrb[0].mxu0
    %3719 = vmatprep.mubr.bf16.mxu0 0
    %3720 = vmatmul.mubr.bf16.gmra.mrb[0].mxu0 %v3528
    %v3721 = vpop.f32.mrb[0].mxu0
    %v3722 = vadd.f32 0.0, %v3721
    %v3723 = vpop.f32.mrb[0].mxu0
    %v3724 = vpop.f32.mrb[0].mxu0
    %v3725 = vadd.f32 0.0, %v3724
    %v3726 = vpop.f32.mrb[0].mxu0
    %3727 = vmatprep.mubr.bf16.mxu0 0
    %3728 = vmatmul.mubr.bf16.gmra.mrb[0].mxu0 %v3529
    %v3729 = vpop.f32.mrb[0].mxu0
    %v3730 = vadd.f32 0.0, %v3729
    %v3731 = vpop.f32.mrb[0].mxu0
    %v3732 = vpop.f32.mrb[0].mxu0
    %v3733 = vadd.f32 0.0, %v3732
    %v3734 = vpop.f32.mrb[0].mxu0
    %3735 = vmatprep.mubr.bf16.mxu0 0
    %3736 = vmatmul.mubr.bf16.gmra.mrb[0].mxu0 %v3530
    %v3737 = vpop.f32.mrb[0].mxu0
    %v3738 = vadd.f32 0.0, %v3737
    %v3739 = vpop.f32.mrb[0].mxu0
    %v3740 = vpop.f32.mrb[0].mxu0
    %v3741 = vadd.f32 0.0, %v3740
    %v3742 = vpop.f32.mrb[0].mxu0
    %3743 = vmatprep.mubr.bf16.mxu0 0
    %3744 = vmatmul.mubr.bf16.gmra.mrb[0].mxu0 %v3531
    %v3745 = vpop.f32.mrb[0].mxu0
    %v3746 = vadd.f32 0.0, %v3745
    %v3747 = vpop.f32.mrb[0].mxu0
    %v3748 = vpop.f32.mrb[0].mxu0
    %v3749 = vadd.f32 0.0, %v3748
    %v3750 = vpop.f32.mrb[0].mxu0
    %3751 = vmatprep.mubr.bf16.mxu0 0
    %3752 = vmatmul.mubr.bf16.gmra.mrb[0].mxu0 %v3532
    %v3753 = vpop.f32.mrb[0].mxu0
    %v3754 = vadd.f32 0.0, %v3753
    %v3755 = vpop.f32.mrb[0].mxu0
    %v3756 = vpop.f32.mrb[0].mxu0
    %v3757 = vadd.f32 0.0, %v3756
    %v3758 = vpop.f32.mrb[0].mxu0
    %3759 = vmatprep.mubr.bf16.mxu0 0
    %3760 = vmatmul.mubr.bf16.gmra.mrb[0].mxu0 %v3533
    %v3761 = vpop.f32.mrb[0].mxu0
    %v3762 = vadd.f32 0.0, %v3761
    %v3763 = vpop.f32.mrb[0].mxu0
    %v3764 = vpop.f32.mrb[0].mxu0
    %v3765 = vadd.f32 0.0, %v3764
    %v3766 = vpop.f32.mrb[0].mxu0
    %3767 = vmatprep.mubr.bf16.mxu0 0
    %3768 = vmatmul.mubr.bf16.gmra.mrb[0].mxu0 %v3534
    %v3769 = vpop.f32.mrb[0].mxu0
    %v3770 = vadd.f32 0.0, %v3769
    %v3771 = vpop.f32.mrb[0].mxu0
    %v3772 = vpop.f32.mrb[0].mxu0
    %v3773 = vadd.f32 0.0, %v3772
    %v3774 = vpop.f32.mrb[0].mxu0
    %3775 = vmatprep.mubr.bf16.mxu0 0
    %3776 = vmatmul.mubr.bf16.gmra.mrb[0].mxu0 %v3535
    %v3777 = vpop.f32.mrb[0].mxu0
    %v3778 = vadd.f32 0.0, %v3777
    %v3779 = vpop.f32.mrb[0].mxu0
    %v3780 = vpop.f32.mrb[0].mxu0
    %v3781 = vadd.f32 0.0, %v3780
    %v3782 = vpop.f32.mrb[0].mxu0
    %3783 = vmatprep.mubr.bf16.mxu0 0
    %3784 = vmatmul.mubr.bf16.gmra.mrb[0].mxu0 %v3536
    %v3785 = vpop.f32.mrb[0].mxu0
    %v3786 = vadd.f32 0.0, %v3785
    %v3787 = vpop.f32.mrb[0].mxu0
    %v3788 = vpop.f32.mrb[0].mxu0
    %v3789 = vadd.f32 0.0, %v3788
    %v3790 = vpop.f32.mrb[0].mxu0
    %3791 = vmatprep.mubr.bf16.mxu0 0
    %3792 = vmatmul.mubr.bf16.gmra.mrb[0].mxu0 %v3537
    %v3793 = vpop.f32.mrb[0].mxu0
    %v3794 = vadd.f32 0.0, %v3793
    %v3795 = vpop.f32.mrb[0].mxu0
    %v3796 = vpop.f32.mrb[0].mxu0
    %v3797 = vadd.f32 0.0, %v3796
    %v3798 = vpop.f32.mrb[0].mxu0
    %3799 = vmatprep.mubr.bf16.mxu0 0
    %3800 = vmatmul.mubr.bf16.gmra.mrb[0].mxu0 %v3538
    %v3801 = vpop.f32.mrb[0].mxu0
    %v3802 = vadd.f32 0.0, %v3801
    %v3803 = vpop.f32.mrb[0].mxu0
    %v3804 = vpop.f32.mrb[0].mxu0
    %v3805 = vadd.f32 0.0, %v3804
    %v3806 = vpop.f32.mrb[0].mxu0
    %3807 = vmatprep.mubr.bf16.mxu0 0
    %3808 = vmatmul.mubr.bf16.gmra.mrb[0].mxu0 %v3539
    %v3809 = vpop.f32.mrb[0].mxu0
    %v3810 = vadd.f32 0.0, %v3809
    %v3811 = vpop.f32.mrb[0].mxu0
    %v3812 = vpop.f32.mrb[0].mxu0
    %v3813 = vadd.f32 0.0, %v3812
    %v3814 = vpop.f32.mrb[0].mxu0
    %3815 = vmatprep.mubr.bf16.mxu0 0
    %3816 = vmatmul.mubr.bf16.gmra.mrb[0].mxu0 %v3540
    %v3817 = vpop.f32.mrb[0].mxu0
    %v3818 = vadd.f32 0.0, %v3817
    %v3819 = vpop.f32.mrb[0].mxu0
    %v3820 = vpop.f32.mrb[0].mxu0
    %v3821 = vadd.f32 0.0, %v3820
    %v3822 = vpop.f32.mrb[0].mxu0
    %3823 = vmatprep.mubr.bf16.mxu0 0
    %3824 = vmatmul.mubr.bf16.gmra.mrb[0].mxu0 %v3541
    %v3825 = vpop.f32.mrb[0].mxu0
    %v3826 = vadd.f32 0.0, %v3825
    %v3827 = vpop.f32.mrb[0].mxu0
    %v3828 = vpop.f32.mrb[0].mxu0
    %v3829 = vadd.f32 0.0, %v3828
    %v3830 = vpop.f32.mrb[0].mxu0
    %3831 = vmatprep.mubr.bf16.mxu0 0
    %3832 = vmatmul.mubr.bf16.gmra.mrb[0].mxu0 %v3542
    %v3833 = vpop.f32.mrb[0].mxu0
    %v3834 = vadd.f32 0.0, %v3833
    %v3835 = vpop.f32.mrb[0].mxu0
    %v3836 = vpop.f32.mrb[0].mxu0
    %v3837 = vpop.f32.mrb[0].mxu0
    %3838 = vdwg.mxu0
    %v3839 = vadd.f32 %v3273, %v3642
    %v3840 = vadd.f32 %v3274, %v3645
    %v3841 = vadd.f32 %v3275, %v3650
    %v3842 = vadd.f32 %v3276, %v3653
    %v3843 = vadd.f32 %v3277, %v3658
    %v3844 = vadd.f32 %v3278, %v3661
    %v3845 = vadd.f32 %v3279, %v3666
    %v3846 = vadd.f32 %v3280, %v3669
    %v3847 = vadd.f32 %v3281, %v3674
    %v3848 = vadd.f32 %v3282, %v3677
    %v3849 = vadd.f32 %v3283, %v3682
    %v3850 = vadd.f32 %v3284, %v3685
    %v3851 = vadd.f32 %v3285, %v3690
    %v3852 = vadd.f32 %v3286, %v3693
    %v3853 = vadd.f32 %v3287, %v3698
    %v3854 = vadd.f32 %v3288, %v3701
    %v3855 = vadd.f32 %v3289, %v3706
    %v3856 = vadd.f32 %v3290, %v3709
    %v3857 = vadd.f32 %v3291, %v3714
    %v3858 = vadd.f32 %v3292, %v3717
    %v3859 = vadd.f32 %v3293, %v3722
    %v3860 = vadd.f32 %v3294, %v3725
    %v3861 = vadd.f32 %v3295, %v3730
    %v3862 = vadd.f32 %v3296, %v3733
    %v3863 = vadd.f32 %v3297, %v3738
    %v3864 = vadd.f32 %v3298, %v3741
    %v3865 = vadd.f32 %v3299, %v3746
    %v3866 = vadd.f32 %v3300, %v3749
    %v3867 = vadd.f32 %v3301, %v3754
    %v3868 = vadd.f32 %v3302, %v3757
    %v3869 = vadd.f32 %v3303, %v3762
    %v3870 = vadd.f32 %v3304, %v3765
    %v3871 = vadd.f32 %v3305, %v3770
    %v3872 = vadd.f32 %v3306, %v3773
    %v3873 = vadd.f32 %v3307, %v3778
    %v3874 = vadd.f32 %v3308, %v3781
    %v3875 = vadd.f32 %v3309, %v3786
    %v3876 = vadd.f32 %v3310, %v3789
    %v3877 = vadd.f32 %v3311, %v3794
    %v3878 = vadd.f32 %v3312, %v3797
    %v3879 = vadd.f32 %v3313, %v3802
    %v3880 = vadd.f32 %v3314, %v3805
    %v3881 = vadd.f32 %v3315, %v3810
    %v3882 = vadd.f32 %v3316, %v3813
    %v3883 = vadd.f32 %v3317, %v3818
    %v3884 = vadd.f32 %v3318, %v3821
    %v3885 = vadd.f32 %v3319, %v3826
    %v3886 = vadd.f32 %v3320, %v3829
    %v3887 = vadd.f32 %v3321, %v3834
    %v3888 = vsel %vm1812, %v1322, 0.0
    %v3889 = vsel %vm1813, %v1323, 0.0
    %v3890 = vsel %vm1814, %v1324, 0.0
    %v3891 = vsel %vm1815, %v1325, 0.0
    %v3892 = vsel %vm1816, %v1326, 0.0
    %v3893 = vsel %vm1817, %v1327, 0.0
    %v3894 = vsel %vm1818, %v1328, 0.0
    %v3895 = vsel %vm1819, %v1329, 0.0
    %v3896 = vsel %vm1820, %v1330, 0.0
    %v3897 = vsel %vm1821, %v1331, 0.0
    %v3898 = vsel %vm1822, %v1332, 0.0
    %v3899 = vsel %vm1823, %v1333, 0.0
    %v3900 = vsel %vm1824, %v1334, 0.0
    %v3901 = vsel %vm1825, %v1335, 0.0
    %v3902 = vsel %vm1826, %v1336, 0.0
    %v3903 = vsel %vm1827, %v1337, 0.0
    %v3904 = vsel %vm1828, %v1338, 0.0
    %v3905 = vsel %vm1829, %v1339, 0.0
    %v3906 = vsel %vm1830, %v1340, 0.0
    %v3907 = vsel %vm1831, %v1341, 0.0
    %v3908 = vsel %vm1832, %v1342, 0.0
    %v3909 = vsel %vm1833, %v1343, 0.0
    %v3910 = vsel %vm1834, %v1344, 0.0
    %v3911 = vsel %vm1835, %v1345, 0.0
    %v3912 = vsel %vm1836, %v1346, 0.0
    %v3913 = vsel %vm1837, %v1347, 0.0
    %v3914 = vsel %vm1838, %v1348, 0.0
    %v3915 = vsel %vm1839, %v1349, 0.0
    %v3916 = vsel %vm1840, %v1350, 0.0
    %v3917 = vsel %vm1841, %v1351, 0.0
    %v3918 = vsel %vm1842, %v1352, 0.0
    %v3919 = vsel %vm1843, %v1353, 0.0
    %v3920 = vsel %vm1844, %v1354, 0.0
    %v3921 = vsel %vm1845, %v1355, 0.0
    %v3922 = vsel %vm1846, %v1356, 0.0
    %v3923 = vsel %vm1847, %v1357, 0.0
    %v3924 = vsel %vm1848, %v1358, 0.0
    %v3925 = vsel %vm1849, %v1359, 0.0
    %v3926 = vsel %vm1850, %v1360, 0.0
    %v3927 = vsel %vm1851, %v1361, 0.0
    %v3928 = vsel %vm1852, %v1362, 0.0
    %v3929 = vsel %vm1853, %v1363, 0.0
    %v3930 = vsel %vm1854, %v1364, 0.0
    %v3931 = vsel %vm1855, %v1365, 0.0
    %v3932 = vsel %vm1856, %v1366, 0.0
    %v3933 = vsel %vm1857, %v1367, 0.0
    %v3934 = vsel %vm1858, %v1368, 0.0
    %v3935 = vsel %vm1859, %v1369, 0.0
    %v3936 = vsel %vm1860, %v1370, 0.0
    %v3937 = vsel %vm1763, %v1469, %v3888
    %v3938 = vsel %vm1764, %v1470, %v3889
    %v3939 = vsel %vm1765, %v1471, %v3890
    %v3940 = vsel %vm1766, %v1472, %v3891
    %v3941 = vsel %vm1767, %v1473, %v3892
    %v3942 = vsel %vm1768, %v1474, %v3893
    %v3943 = vsel %vm1769, %v1475, %v3894
    %v3944 = vsel %vm1770, %v1476, %v3895
    %v3945 = vsel %vm1771, %v1477, %v3896
    %v3946 = vsel %vm1772, %v1478, %v3897
    %v3947 = vsel %vm1773, %v1479, %v3898
    %v3948 = vsel %vm1774, %v1480, %v3899
    %v3949 = vsel %vm1775, %v1481, %v3900
    %v3950 = vsel %vm1776, %v1482, %v3901
    %v3951 = vsel %vm1777, %v1483, %v3902
    %v3952 = vsel %vm1778, %v1484, %v3903
    %v3953 = vsel %vm1779, %v1485, %v3904
    %v3954 = vsel %vm1780, %v1486, %v3905
    %v3955 = vsel %vm1781, %v1487, %v3906
    %v3956 = vsel %vm1782, %v1488, %v3907
    %v3957 = vsel %vm1783, %v1489, %v3908
    %v3958 = vsel %vm1784, %v1490, %v3909
    %v3959 = vsel %vm1785, %v1491, %v3910
    %v3960 = vsel %vm1786, %v1492, %v3911
    %v3961 = vsel %vm1787, %v1493, %v3912
    %v3962 = vsel %vm1788, %v1494, %v3913
    %v3963 = vsel %vm1789, %v1495, %v3914
    %v3964 = vsel %vm1790, %v1496, %v3915
    %v3965 = vsel %vm1791, %v1497, %v3916
    %v3966 = vsel %vm1792, %v1498, %v3917
    %v3967 = vsel %vm1793, %v1499, %v3918
    %v3968 = vsel %vm1794, %v1500, %v3919
    %v3969 = vsel %vm1795, %v1501, %v3920
    %v3970 = vsel %vm1796, %v1502, %v3921
    %v3971 = vsel %vm1797, %v1503, %v3922
    %v3972 = vsel %vm1798, %v1504, %v3923
    %v3973 = vsel %vm1799, %v1505, %v3924
    %v3974 = vsel %vm1800, %v1506, %v3925
    %v3975 = vsel %vm1801, %v1507, %v3926
    %v3976 = vsel %vm1802, %v1508, %v3927
    %v3977 = vsel %vm1803, %v1509, %v3928
    %v3978 = vsel %vm1804, %v1510, %v3929
    %v3979 = vsel %vm1805, %v1511, %v3930
    %v3980 = vsel %vm1806, %v1512, %v3931
    %v3981 = vsel %vm1807, %v1513, %v3932
    %v3982 = vsel %vm1808, %v1514, %v3933
    %v3983 = vsel %vm1809, %v1515, %v3934
    %v3984 = vsel %vm1810, %v1516, %v3935
    %v3985 = vsel %vm1811, %v1517, %v3936
    %v3986 = vsel %vm1714, %v1175, %v3937
    %v3987 = vsel %vm1715, %v1176, %v3938
    %v3988 = vsel %vm1716, %v1177, %v3939
    %v3989 = vsel %vm1717, %v1178, %v3940
    %v3990 = vsel %vm1718, %v1179, %v3941
    %v3991 = vsel %vm1719, %v1180, %v3942
    %v3992 = vsel %vm1720, %v1181, %v3943
    %v3993 = vsel %vm1721, %v1182, %v3944
    %v3994 = vsel %vm1722, %v1183, %v3945
    %v3995 = vsel %vm1723, %v1184, %v3946
    %v3996 = vsel %vm1724, %v1185, %v3947
    %v3997 = vsel %vm1725, %v1186, %v3948
    %v3998 = vsel %vm1726, %v1187, %v3949
    %v3999 = vsel %vm1727, %v1188, %v3950
    %v4000 = vsel %vm1728, %v1189, %v3951
    %v4001 = vsel %vm1729, %v1190, %v3952
    %v4002 = vsel %vm1730, %v1191, %v3953
    %v4003 = vsel %vm1731, %v1192, %v3954
    %v4004 = vsel %vm1732, %v1193, %v3955
    %v4005 = vsel %vm1733, %v1194, %v3956
    %v4006 = vsel %vm1734, %v1195, %v3957
    %v4007 = vsel %vm1735, %v1196, %v3958
    %v4008 = vsel %vm1736, %v1197, %v3959
    %v4009 = vsel %vm1737, %v1198, %v3960
    %v4010 = vsel %vm1738, %v1199, %v3961
    %v4011 = vsel %vm1739, %v1200, %v3962
    %v4012 = vsel %vm1740, %v1201, %v3963
    %v4013 = vsel %vm1741, %v1202, %v3964
    %v4014 = vsel %vm1742, %v1203, %v3965
    %v4015 = vsel %vm1743, %v1204, %v3966
    %v4016 = vsel %vm1744, %v1205, %v3967
    %v4017 = vsel %vm1745, %v1206, %v3968
    %v4018 = vsel %vm1746, %v1207, %v3969
    %v4019 = vsel %vm1747, %v1208, %v3970
    %v4020 = vsel %vm1748, %v1209, %v3971
    %v4021 = vsel %vm1749, %v1210, %v3972
    %v4022 = vsel %vm1750, %v1211, %v3973
    %v4023 = vsel %vm1751, %v1212, %v3974
    %v4024 = vsel %vm1752, %v1213, %v3975
    %v4025 = vsel %vm1753, %v1214, %v3976
    %v4026 = vsel %vm1754, %v1215, %v3977
    %v4027 = vsel %vm1755, %v1216, %v3978
    %v4028 = vsel %vm1756, %v1217, %v3979
    %v4029 = vsel %vm1757, %v1218, %v3980
    %v4030 = vsel %vm1758, %v1219, %v3981
    %v4031 = vsel %vm1759, %v1220, %v3982
    %v4032 = vsel %vm1760, %v1221, %v3983
    %v4033 = vsel %vm1761, %v1222, %v3984
    %v4034 = vsel %vm1762, %v1223, %v3985
    %v4035 = vsel %vm1665, %v881, %v3986
    %v4036 = vsel %vm1666, %v882, %v3987
    %v4037 = vsel %vm1667, %v883, %v3988
    %v4038 = vsel %vm1668, %v884, %v3989
    %v4039 = vsel %vm1669, %v885, %v3990
    %v4040 = vsel %vm1670, %v886, %v3991
    %v4041 = vsel %vm1671, %v887, %v3992
    %v4042 = vsel %vm1672, %v888, %v3993
    %v4043 = vsel %vm1673, %v889, %v3994
    %v4044 = vsel %vm1674, %v890, %v3995
    %v4045 = vsel %vm1675, %v891, %v3996
    %v4046 = vsel %vm1676, %v892, %v3997
    %v4047 = vsel %vm1677, %v893, %v3998
    %v4048 = vsel %vm1678, %v894, %v3999
    %v4049 = vsel %vm1679, %v895, %v4000
    %v4050 = vsel %vm1680, %v896, %v4001
    %v4051 = vsel %vm1681, %v897, %v4002
    %v4052 = vsel %vm1682, %v898, %v4003
    %v4053 = vsel %vm1683, %v899, %v4004
    %v4054 = vsel %vm1684, %v900, %v4005
    %v4055 = vsel %vm1685, %v901, %v4006
    %v4056 = vsel %vm1686, %v902, %v4007
    %v4057 = vsel %vm1687, %v903, %v4008
    %v4058 = vsel %vm1688, %v904, %v4009
    %v4059 = vsel %vm1689, %v905, %v4010
    %v4060 = vsel %vm1690, %v906, %v4011
    %v4061 = vsel %vm1691, %v907, %v4012
    %v4062 = vsel %vm1692, %v908, %v4013
    %v4063 = vsel %vm1693, %v909, %v4014
    %v4064 = vsel %vm1694, %v910, %v4015
    %v4065 = vsel %vm1695, %v911, %v4016
    %v4066 = vsel %vm1696, %v912, %v4017
    %v4067 = vsel %vm1697, %v913, %v4018
    %v4068 = vsel %vm1698, %v914, %v4019
    %v4069 = vsel %vm1699, %v915, %v4020
    %v4070 = vsel %vm1700, %v916, %v4021
    %v4071 = vsel %vm1701, %v917, %v4022
    %v4072 = vsel %vm1702, %v918, %v4023
    %v4073 = vsel %vm1703, %v919, %v4024
    %v4074 = vsel %vm1704, %v920, %v4025
    %v4075 = vsel %vm1705, %v921, %v4026
    %v4076 = vsel %vm1706, %v922, %v4027
    %v4077 = vsel %vm1707, %v923, %v4028
    %v4078 = vsel %vm1708, %v924, %v4029
    %v4079 = vsel %vm1709, %v925, %v4030
    %v4080 = vsel %vm1710, %v926, %v4031
    %v4081 = vsel %vm1711, %v927, %v4032
    %v4082 = vsel %vm1712, %v928, %v4033
    %v4083 = vsel %vm1713, %v929, %v4034
    %v4084 = vpack.c.bf16 %v4036, %v4035
    %v4085 = vpack.c.bf16 %v4038, %v4037
    %v4086 = vpack.c.bf16 %v4040, %v4039
    %v4087 = vpack.c.bf16 %v4042, %v4041
    %v4088 = vpack.c.bf16 %v4044, %v4043
    %v4089 = vpack.c.bf16 %v4046, %v4045
    %v4090 = vpack.c.bf16 %v4048, %v4047
    %v4091 = vpack.c.bf16 %v4050, %v4049
    %v4092 = vpack.c.bf16 %v4052, %v4051
    %v4093 = vpack.c.bf16 %v4054, %v4053
    %v4094 = vpack.c.bf16 %v4056, %v4055
    %v4095 = vpack.c.bf16 %v4058, %v4057
    %v4096 = vpack.c.bf16 %v4060, %v4059
    %v4097 = vpack.c.bf16 %v4062, %v4061
    %v4098 = vpack.c.bf16 %v4064, %v4063
    %v4099 = vpack.c.bf16 %v4066, %v4065
    %v4100 = vpack.c.bf16 %v4068, %v4067
    %v4101 = vpack.c.bf16 %v4070, %v4069
    %v4102 = vpack.c.bf16 %v4072, %v4071
    %v4103 = vpack.c.bf16 %v4074, %v4073
    %v4104 = vpack.c.bf16 %v4076, %v4075
    %v4105 = vpack.c.bf16 %v4078, %v4077
    %v4106 = vpack.c.bf16 %v4080, %v4079
    %v4107 = vpack.c.bf16 %v4082, %v4081
    %v4108 = vpack.c.bf16 %v4083, %v4083
    %v4109 = vld [vmem:[#allocation5 + $0x100] sm:$0xf]
    %v4110 = vld [vmem:[#allocation5 + $0x104] sm:$0xf]
    %v4111 = vld [vmem:[#allocation5 + $0x108] sm:$0xf]
    %v4112 = vld [vmem:[#allocation5 + $0x10c] sm:$0xf]
    %v4113 = vld [vmem:[#allocation5 + $0x110] sm:$0xf]
    %v4114 = vld [vmem:[#allocation5 + $0x114] sm:$0xf]
    %v4115 = vld [vmem:[#allocation5 + $0x118] sm:$0xf]
    %v4116 = vld [vmem:[#allocation5 + $0x11c] sm:$0xf]
    %v4117 = vld [vmem:[#allocation5 + $0x120] sm:$0xf]
    %v4118 = vld [vmem:[#allocation5 + $0x124] sm:$0xf]
    %v4119 = vld [vmem:[#allocation5 + $0x128] sm:$0xf]
    %v4120 = vld [vmem:[#allocation5 + $0x12c] sm:$0xf]
    %v4121 = vld [vmem:[#allocation5 + $0x130] sm:$0xf]
    %v4122 = vld [vmem:[#allocation5 + $0x134] sm:$0xf]
    %v4123 = vld [vmem:[#allocation5 + $0x138] sm:$0xf]
    %v4124 = vld [vmem:[#allocation5 + $0x13c] sm:$0xf]
    %v4141 = vunpack.c.l.b16 %v4109
    %v4142 = vunpack.c.l.b16 %v4110
    %v4143 = vunpack.c.l.b16 %v4111
    %v4144 = vunpack.c.l.b16 %v4112
    %v4145 = vunpack.c.l.b16 %v4113
    %v4146 = vunpack.c.l.b16 %v4114
    %v4147 = vunpack.c.l.b16 %v4115
    %v4148 = vunpack.c.l.b16 %v4116
    %v4149 = vunpack.c.l.b16 %v4117
    %v4150 = vunpack.c.l.b16 %v4118
    %v4151 = vunpack.c.l.b16 %v4119
    %v4152 = vunpack.c.l.b16 %v4120
    %v4153 = vunpack.c.l.b16 %v4121
    %v4154 = vunpack.c.l.b16 %v4122
    %v4155 = vunpack.c.l.b16 %v4123
    %v4156 = vunpack.c.l.b16 %v4124
    %v4157 = vpack.c.b16 %v4142, %v4141
    %v4158 = vpack.c.b16 %v4144, %v4143
    %v4159 = vpack.c.b16 %v4146, %v4145
    %v4160 = vpack.c.b16 %v4148, %v4147
    %v4161 = vpack.c.b16 %v4150, %v4149
    %v4162 = vpack.c.b16 %v4152, %v4151
    %v4163 = vpack.c.b16 %v4154, %v4153
    %v4164 = vpack.c.b16 %v4156, %v4155
    %4173 = vmatprep.subr.bf16.mxu0 0
    %4174 = vmatpush1.bf16.msra.mxu0 %v4157
    %4175 = vmatprep.subr.bf16.mxu0 0
    %4176 = vmatpush1.bf16.msra.mxu0 %v4158
    %4177 = vmatprep.subr.bf16.mxu0 0
    %4178 = vmatpush1.bf16.msra.mxu0 %v4159
    %4179 = vmatprep.subr.bf16.mxu0 0
    %4180 = vmatpush1.bf16.msra.mxu0 %v4160
    %4181 = vmatprep.subr.bf16.mxu0 0
    %4182 = vmatpush1.bf16.msra.mxu0 %v4161
    %4183 = vmatprep.subr.bf16.mxu0 0
    %4184 = vmatpush1.bf16.msra.mxu0 %v4162
    %4185 = vmatprep.subr.bf16.mxu0 0
    %4186 = vmatpush1.bf16.msra.mxu0 %v4163
    %4187 = vmatprep.subr.bf16.mxu0 0
    %4188 = vmatpush1.bf16.msra.mxu0 %v4164
    %4189 = vmatprep.subr.bf16.mxu0 0
    %4190 = vmatpush1.bf16.msra.mxu0 0
    %4191 = vmatprep.subr.bf16.mxu0 0
    %4192 = vmatpush1.bf16.msra.mxu0 0
    %4193 = vmatprep.subr.bf16.mxu0 0
    %4194 = vmatpush1.bf16.msra.mxu0 0
    %4195 = vmatprep.subr.bf16.mxu0 0
    %4196 = vmatpush1.bf16.msra.mxu0 0
    %4197 = vmatprep.subr.bf16.mxu0 0
    %4198 = vmatpush1.bf16.msra.mxu0 0
    %4199 = vmatprep.subr.bf16.mxu0 0
    %4200 = vmatpush1.bf16.msra.mxu0 0
    %4201 = vmatprep.subr.bf16.mxu0 0
    %4202 = vmatpush1.bf16.msra.mxu0 0
    %4203 = vmatprep.subr.bf16.mxu0 0
    %4204 = vmatpush1.bf16.msra.mxu0 0
    %4205 = vmatprep.mubr.bf16.mxu0 0
    %4206 = vmatmul.mubr.bf16.gmra.mrb[0].mxu0 %v4084
    %v4207 = vpop.f32.mrb[0].mxu0
    %v4208 = vadd.f32 0.0, %v4207
    %v4209 = vpop.f32.mrb[0].mxu0
    %v4210 = vpop.f32.mrb[0].mxu0
    %v4211 = vadd.f32 0.0, %v4210
    %v4212 = vpop.f32.mrb[0].mxu0
    %4213 = vmatprep.mubr.bf16.mxu0 0
    %4214 = vmatmul.mubr.bf16.gmra.mrb[0].mxu0 %v4085
    %v4215 = vpop.f32.mrb[0].mxu0
    %v4216 = vadd.f32 0.0, %v4215
    %v4217 = vpop.f32.mrb[0].mxu0
    %v4218 = vpop.f32.mrb[0].mxu0
    %v4219 = vadd.f32 0.0, %v4218
    %v4220 = vpop.f32.mrb[0].mxu0
    %4221 = vmatprep.mubr.bf16.mxu0 0
    %4222 = vmatmul.mubr.bf16.gmra.mrb[0].mxu0 %v4086
    %v4223 = vpop.f32.mrb[0].mxu0
    %v4224 = vadd.f32 0.0, %v4223
    %v4225 = vpop.f32.mrb[0].mxu0
    %v4226 = vpop.f32.mrb[0].mxu0
    %v4227 = vadd.f32 0.0, %v4226
    %v4228 = vpop.f32.mrb[0].mxu0
    %4229 = vmatprep.mubr.bf16.mxu0 0
    %4230 = vmatmul.mubr.bf16.gmra.mrb[0].mxu0 %v4087
    %v4231 = vpop.f32.mrb[0].mxu0
    %v4232 = vadd.f32 0.0, %v4231
    %v4233 = vpop.f32.mrb[0].mxu0
    %v4234 = vpop.f32.mrb[0].mxu0
    %v4235 = vadd.f32 0.0, %v4234
    %v4236 = vpop.f32.mrb[0].mxu0
    %4237 = vmatprep.mubr.bf16.mxu0 0
    %4238 = vmatmul.mubr.bf16.gmra.mrb[0].mxu0 %v4088
    %v4239 = vpop.f32.mrb[0].mxu0
    %v4240 = vadd.f32 0.0, %v4239
    %v4241 = vpop.f32.mrb[0].mxu0
    %v4242 = vpop.f32.mrb[0].mxu0
    %v4243 = vadd.f32 0.0, %v4242
    %v4244 = vpop.f32.mrb[0].mxu0
    %4245 = vmatprep.mubr.bf16.mxu0 0
    %4246 = vmatmul.mubr.bf16.gmra.mrb[0].mxu0 %v4089
    %v4247 = vpop.f32.mrb[0].mxu0
    %v4248 = vadd.f32 0.0, %v4247
    %v4249 = vpop.f32.mrb[0].mxu0
    %v4250 = vpop.f32.mrb[0].mxu0
    %v4251 = vadd.f32 0.0, %v4250
    %v4252 = vpop.f32.mrb[0].mxu0
    %4253 = vmatprep.mubr.bf16.mxu0 0
    %4254 = vmatmul.mubr.bf16.gmra.mrb[0].mxu0 %v4090
    %v4255 = vpop.f32.mrb[0].mxu0
    %v4256 = vadd.f32 0.0, %v4255
    %v4257 = vpop.f32.mrb[0].mxu0
    %v4258 = vpop.f32.mrb[0].mxu0
    %v4259 = vadd.f32 0.0, %v4258
    %v4260 = vpop.f32.mrb[0].mxu0
    %4261 = vmatprep.mubr.bf16.mxu0 0
    %4262 = vmatmul.mubr.bf16.gmra.mrb[0].mxu0 %v4091
    %v4263 = vpop.f32.mrb[0].mxu0
    %v4264 = vadd.f32 0.0, %v4263
    %v4265 = vpop.f32.mrb[0].mxu0
    %v4266 = vpop.f32.mrb[0].mxu0
    %v4267 = vadd.f32 0.0, %v4266
    %v4268 = vpop.f32.mrb[0].mxu0
    %4269 = vmatprep.mubr.bf16.mxu0 0
    %4270 = vmatmul.mubr.bf16.gmra.mrb[0].mxu0 %v4092
    %v4271 = vpop.f32.mrb[0].mxu0
    %v4272 = vadd.f32 0.0, %v4271
    %v4273 = vpop.f32.mrb[0].mxu0
    %v4274 = vpop.f32.mrb[0].mxu0
    %v4275 = vadd.f32 0.0, %v4274
    %v4276 = vpop.f32.mrb[0].mxu0
    %4277 = vmatprep.mubr.bf16.mxu0 0
    %4278 = vmatmul.mubr.bf16.gmra.mrb[0].mxu0 %v4093
    %v4279 = vpop.f32.mrb[0].mxu0
    %v4280 = vadd.f32 0.0, %v4279
    %v4281 = vpop.f32.mrb[0].mxu0
    %v4282 = vpop.f32.mrb[0].mxu0
    %v4283 = vadd.f32 0.0, %v4282
    %v4284 = vpop.f32.mrb[0].mxu0
    %4285 = vmatprep.mubr.bf16.mxu0 0
    %4286 = vmatmul.mubr.bf16.gmra.mrb[0].mxu0 %v4094
    %v4287 = vpop.f32.mrb[0].mxu0
    %v4288 = vadd.f32 0.0, %v4287
    %v4289 = vpop.f32.mrb[0].mxu0
    %v4290 = vpop.f32.mrb[0].mxu0
    %v4291 = vadd.f32 0.0, %v4290
    %v4292 = vpop.f32.mrb[0].mxu0
    %4293 = vmatprep.mubr.bf16.mxu0 0
    %4294 = vmatmul.mubr.bf16.gmra.mrb[0].mxu0 %v4095
    %v4295 = vpop.f32.mrb[0].mxu0
    %v4296 = vadd.f32 0.0, %v4295
    %v4297 = vpop.f32.mrb[0].mxu0
    %v4298 = vpop.f32.mrb[0].mxu0
    %v4299 = vadd.f32 0.0, %v4298
    %v4300 = vpop.f32.mrb[0].mxu0
    %4301 = vmatprep.mubr.bf16.mxu0 0
    %4302 = vmatmul.mubr.bf16.gmra.mrb[0].mxu0 %v4096
    %v4303 = vpop.f32.mrb[0].mxu0
    %v4304 = vadd.f32 0.0, %v4303
    %v4305 = vpop.f32.mrb[0].mxu0
    %v4306 = vpop.f32.mrb[0].mxu0
    %v4307 = vadd.f32 0.0, %v4306
    %v4308 = vpop.f32.mrb[0].mxu0
    %4309 = vmatprep.mubr.bf16.mxu0 0
    %4310 = vmatmul.mubr.bf16.gmra.mrb[0].mxu0 %v4097
    %v4311 = vpop.f32.mrb[0].mxu0
    %v4312 = vadd.f32 0.0, %v4311
    %v4313 = vpop.f32.mrb[0].mxu0
    %v4314 = vpop.f32.mrb[0].mxu0
    %v4315 = vadd.f32 0.0, %v4314
    %v4316 = vpop.f32.mrb[0].mxu0
    %4317 = vmatprep.mubr.bf16.mxu0 0
    %4318 = vmatmul.mubr.bf16.gmra.mrb[0].mxu0 %v4098
    %v4319 = vpop.f32.mrb[0].mxu0
    %v4320 = vadd.f32 0.0, %v4319
    %v4321 = vpop.f32.mrb[0].mxu0
    %v4322 = vpop.f32.mrb[0].mxu0
    %v4323 = vadd.f32 0.0, %v4322
    %v4324 = vpop.f32.mrb[0].mxu0
    %4325 = vmatprep.mubr.bf16.mxu0 0
    %4326 = vmatmul.mubr.bf16.gmra.mrb[0].mxu0 %v4099
    %v4327 = vpop.f32.mrb[0].mxu0
    %v4328 = vadd.f32 0.0, %v4327
    %v4329 = vpop.f32.mrb[0].mxu0
    %v4330 = vpop.f32.mrb[0].mxu0
    %v4331 = vadd.f32 0.0, %v4330
    %v4332 = vpop.f32.mrb[0].mxu0
    %4333 = vmatprep.mubr.bf16.mxu0 0
    %4334 = vmatmul.mubr.bf16.gmra.mrb[0].mxu0 %v4100
    %v4335 = vpop.f32.mrb[0].mxu0
    %v4336 = vadd.f32 0.0, %v4335
    %v4337 = vpop.f32.mrb[0].mxu0
    %v4338 = vpop.f32.mrb[0].mxu0
    %v4339 = vadd.f32 0.0, %v4338
    %v4340 = vpop.f32.mrb[0].mxu0
    %4341 = vmatprep.mubr.bf16.mxu0 0
    %4342 = vmatmul.mubr.bf16.gmra.mrb[0].mxu0 %v4101
    %v4343 = vpop.f32.mrb[0].mxu0
    %v4344 = vadd.f32 0.0, %v4343
    %v4345 = vpop.f32.mrb[0].mxu0
    %v4346 = vpop.f32.mrb[0].mxu0
    %v4347 = vadd.f32 0.0, %v4346
    %v4348 = vpop.f32.mrb[0].mxu0
    %4349 = vmatprep.mubr.bf16.mxu0 0
    %4350 = vmatmul.mubr.bf16.gmra.mrb[0].mxu0 %v4102
    %v4351 = vpop.f32.mrb[0].mxu0
    %v4352 = vadd.f32 0.0, %v4351
    %v4353 = vpop.f32.mrb[0].mxu0
    %v4354 = vpop.f32.mrb[0].mxu0
    %v4355 = vadd.f32 0.0, %v4354
    %v4356 = vpop.f32.mrb[0].mxu0
    %4357 = vmatprep.mubr.bf16.mxu0 0
    %4358 = vmatmul.mubr.bf16.gmra.mrb[0].mxu0 %v4103
    %v4359 = vpop.f32.mrb[0].mxu0
    %v4360 = vadd.f32 0.0, %v4359
    %v4361 = vpop.f32.mrb[0].mxu0
    %v4362 = vpop.f32.mrb[0].mxu0
    %v4363 = vadd.f32 0.0, %v4362
    %v4364 = vpop.f32.mrb[0].mxu0
    %4365 = vmatprep.mubr.bf16.mxu0 0
    %4366 = vmatmul.mubr.bf16.gmra.mrb[0].mxu0 %v4104
    %v4367 = vpop.f32.mrb[0].mxu0
    %v4368 = vadd.f32 0.0, %v4367
    %v4369 = vpop.f32.mrb[0].mxu0
    %v4370 = vpop.f32.mrb[0].mxu0
    %v4371 = vadd.f32 0.0, %v4370
    %v4372 = vpop.f32.mrb[0].mxu0
    %4373 = vmatprep.mubr.bf16.mxu0 0
    %4374 = vmatmul.mubr.bf16.gmra.mrb[0].mxu0 %v4105
    %v4375 = vpop.f32.mrb[0].mxu0
    %v4376 = vadd.f32 0.0, %v4375
    %v4377 = vpop.f32.mrb[0].mxu0
    %v4378 = vpop.f32.mrb[0].mxu0
    %v4379 = vadd.f32 0.0, %v4378
    %v4380 = vpop.f32.mrb[0].mxu0
    %4381 = vmatprep.mubr.bf16.mxu0 0
    %4382 = vmatmul.mubr.bf16.gmra.mrb[0].mxu0 %v4106
    %v4383 = vpop.f32.mrb[0].mxu0
    %v4384 = vadd.f32 0.0, %v4383
    %v4385 = vpop.f32.mrb[0].mxu0
    %v4386 = vpop.f32.mrb[0].mxu0
    %v4387 = vadd.f32 0.0, %v4386
    %v4388 = vpop.f32.mrb[0].mxu0
    %4389 = vmatprep.mubr.bf16.mxu0 0
    %4390 = vmatmul.mubr.bf16.gmra.mrb[0].mxu0 %v4107
    %v4391 = vpop.f32.mrb[0].mxu0
    %v4392 = vadd.f32 0.0, %v4391
    %v4393 = vpop.f32.mrb[0].mxu0
    %v4394 = vpop.f32.mrb[0].mxu0
    %v4395 = vadd.f32 0.0, %v4394
    %v4396 = vpop.f32.mrb[0].mxu0
    %4397 = vmatprep.mubr.bf16.mxu0 0
    %4398 = vmatmul.mubr.bf16.gmra.mrb[0].mxu0 %v4108
    %v4399 = vpop.f32.mrb[0].mxu0
    %v4400 = vadd.f32 0.0, %v4399
    %v4401 = vpop.f32.mrb[0].mxu0
    %v4402 = vpop.f32.mrb[0].mxu0
    %v4403 = vpop.f32.mrb[0].mxu0
    %4404 = vdwg.mxu0
    %v4405 = vadd.f32 %v3839, %v4208
    %v4406 = vadd.f32 %v3840, %v4211
    %v4407 = vadd.f32 %v3841, %v4216
    %v4408 = vadd.f32 %v3842, %v4219
    %v4409 = vadd.f32 %v3843, %v4224
    %v4410 = vadd.f32 %v3844, %v4227
    %v4411 = vadd.f32 %v3845, %v4232
    %v4412 = vadd.f32 %v3846, %v4235
    %v4413 = vadd.f32 %v3847, %v4240
    %v4414 = vadd.f32 %v3848, %v4243
    %v4415 = vadd.f32 %v3849, %v4248
    %v4416 = vadd.f32 %v3850, %v4251
    %v4417 = vadd.f32 %v3851, %v4256
    %v4418 = vadd.f32 %v3852, %v4259
    %v4419 = vadd.f32 %v3853, %v4264
    %v4420 = vadd.f32 %v3854, %v4267
    %v4421 = vadd.f32 %v3855, %v4272
    %v4422 = vadd.f32 %v3856, %v4275
    %v4423 = vadd.f32 %v3857, %v4280
    %v4424 = vadd.f32 %v3858, %v4283
    %v4425 = vadd.f32 %v3859, %v4288
    %v4426 = vadd.f32 %v3860, %v4291
    %v4427 = vadd.f32 %v3861, %v4296
    %v4428 = vadd.f32 %v3862, %v4299
    %v4429 = vadd.f32 %v3863, %v4304
    %v4430 = vadd.f32 %v3864, %v4307
    %v4431 = vadd.f32 %v3865, %v4312
    %v4432 = vadd.f32 %v3866, %v4315
    %v4433 = vadd.f32 %v3867, %v4320
    %v4434 = vadd.f32 %v3868, %v4323
    %v4435 = vadd.f32 %v3869, %v4328
    %v4436 = vadd.f32 %v3870, %v4331
    %v4437 = vadd.f32 %v3871, %v4336
    %v4438 = vadd.f32 %v3872, %v4339
    %v4439 = vadd.f32 %v3873, %v4344
    %v4440 = vadd.f32 %v3874, %v4347
    %v4441 = vadd.f32 %v3875, %v4352
    %v4442 = vadd.f32 %v3876, %v4355
    %v4443 = vadd.f32 %v3877, %v4360
    %v4444 = vadd.f32 %v3878, %v4363
    %v4445 = vadd.f32 %v3879, %v4368
    %v4446 = vadd.f32 %v3880, %v4371
    %v4447 = vadd.f32 %v3881, %v4376
    %v4448 = vadd.f32 %v3882, %v4379
    %v4449 = vadd.f32 %v3883, %v4384
    %v4450 = vadd.f32 %v3884, %v4387
    %v4451 = vadd.f32 %v3885, %v4392
    %v4452 = vadd.f32 %v3886, %v4395
    %v4453 = vadd.f32 %v3887, %v4400
    %v4454 = vsel %vm1861, %v1322, 0.0
    %v4455 = vsel %vm1862, %v1323, 0.0
    %v4456 = vsel %vm1863, %v1324, 0.0
    %v4457 = vsel %vm1864, %v1325, 0.0
    %v4458 = vsel %vm1865, %v1326, 0.0
    %v4459 = vsel %vm1866, %v1327, 0.0
    %v4460 = vsel %vm1867, %v1328, 0.0
    %v4461 = vsel %vm1868, %v1329, 0.0
    %v4462 = vsel %vm1869, %v1330, 0.0
    %v4463 = vsel %vm1870, %v1331, 0.0
    %v4464 = vsel %vm1871, %v1332, 0.0
    %v4465 = vsel %vm1872, %v1333, 0.0
    %v4466 = vsel %vm1873, %v1334, 0.0
    %v4467 = vsel %vm1874, %v1335, 0.0
    %v4468 = vsel %vm1875, %v1336, 0.0
    %v4469 = vsel %vm1876, %v1337, 0.0
    %v4470 = vsel %vm1877, %v1338, 0.0
    %v4471 = vsel %vm1878, %v1339, 0.0
    %v4472 = vsel %vm1879, %v1340, 0.0
    %v4473 = vsel %vm1880, %v1341, 0.0
    %v4474 = vsel %vm1881, %v1342, 0.0
    %v4475 = vsel %vm1882, %v1343, 0.0
    %v4476 = vsel %vm1883, %v1344, 0.0
    %v4477 = vsel %vm1884, %v1345, 0.0
    %v4478 = vsel %vm1885, %v1346, 0.0
    %v4479 = vsel %vm1886, %v1347, 0.0
    %v4480 = vsel %vm1887, %v1348, 0.0
    %v4481 = vsel %vm1888, %v1349, 0.0
    %v4482 = vsel %vm1889, %v1350, 0.0
    %v4483 = vsel %vm1890, %v1351, 0.0
    %v4484 = vsel %vm1891, %v1352, 0.0
    %v4485 = vsel %vm1892, %v1353, 0.0
    %v4486 = vsel %vm1893, %v1354, 0.0
    %v4487 = vsel %vm1894, %v1355, 0.0
    %v4488 = vsel %vm1895, %v1356, 0.0
    %v4489 = vsel %vm1896, %v1357, 0.0
    %v4490 = vsel %vm1897, %v1358, 0.0
    %v4491 = vsel %vm1898, %v1359, 0.0
    %v4492 = vsel %vm1899, %v1360, 0.0
    %v4493 = vsel %vm1900, %v1361, 0.0
    %v4494 = vsel %vm1901, %v1362, 0.0
    %v4495 = vsel %vm1902, %v1363, 0.0
    %v4496 = vsel %vm1903, %v1364, 0.0
    %v4497 = vsel %vm1904, %v1365, 0.0
    %v4498 = vsel %vm1905, %v1366, 0.0
    %v4499 = vsel %vm1906, %v1367, 0.0
    %v4500 = vsel %vm1907, %v1368, 0.0
    %v4501 = vsel %vm1908, %v1369, 0.0
    %v4502 = vsel %vm1909, %v1370, 0.0
    %v4503 = vsel %vm1812, %v1469, %v4454
    %v4504 = vsel %vm1813, %v1470, %v4455
    %v4505 = vsel %vm1814, %v1471, %v4456
    %v4506 = vsel %vm1815, %v1472, %v4457
    %v4507 = vsel %vm1816, %v1473, %v4458
    %v4508 = vsel %vm1817, %v1474, %v4459
    %v4509 = vsel %vm1818, %v1475, %v4460
    %v4510 = vsel %vm1819, %v1476, %v4461
    %v4511 = vsel %vm1820, %v1477, %v4462
    %v4512 = vsel %vm1821, %v1478, %v4463
    %v4513 = vsel %vm1822, %v1479, %v4464
    %v4514 = vsel %vm1823, %v1480, %v4465
    %v4515 = vsel %vm1824, %v1481, %v4466
    %v4516 = vsel %vm1825, %v1482, %v4467
    %v4517 = vsel %vm1826, %v1483, %v4468
    %v4518 = vsel %vm1827, %v1484, %v4469
    %v4519 = vsel %vm1828, %v1485, %v4470
    %v4520 = vsel %vm1829, %v1486, %v4471
    %v4521 = vsel %vm1830, %v1487, %v4472
    %v4522 = vsel %vm1831, %v1488, %v4473
    %v4523 = vsel %vm1832, %v1489, %v4474
    %v4524 = vsel %vm1833, %v1490, %v4475
    %v4525 = vsel %vm1834, %v1491, %v4476
    %v4526 = vsel %vm1835, %v1492, %v4477
    %v4527 = vsel %vm1836, %v1493, %v4478
    %v4528 = vsel %vm1837, %v1494, %v4479
    %v4529 = vsel %vm1838, %v1495, %v4480
    %v4530 = vsel %vm1839, %v1496, %v4481
    %v4531 = vsel %vm1840, %v1497, %v4482
    %v4532 = vsel %vm1841, %v1498, %v4483
    %v4533 = vsel %vm1842, %v1499, %v4484
    %v4534 = vsel %vm1843, %v1500, %v4485
    %v4535 = vsel %vm1844, %v1501, %v4486
    %v4536 = vsel %vm1845, %v1502, %v4487
    %v4537 = vsel %vm1846, %v1503, %v4488
    %v4538 = vsel %vm1847, %v1504, %v4489
    %v4539 = vsel %vm1848, %v1505, %v4490
    %v4540 = vsel %vm1849, %v1506, %v4491
    %v4541 = vsel %vm1850, %v1507, %v4492
    %v4542 = vsel %vm1851, %v1508, %v4493
    %v4543 = vsel %vm1852, %v1509, %v4494
    %v4544 = vsel %vm1853, %v1510, %v4495
    %v4545 = vsel %vm1854, %v1511, %v4496
    %v4546 = vsel %vm1855, %v1512, %v4497
    %v4547 = vsel %vm1856, %v1513, %v4498
    %v4548 = vsel %vm1857, %v1514, %v4499
    %v4549 = vsel %vm1858, %v1515, %v4500
    %v4550 = vsel %vm1859, %v1516, %v4501
    %v4551 = vsel %vm1860, %v1517, %v4502
    %v4552 = vsel %vm1763, %v1175, %v4503
    %v4553 = vsel %vm1764, %v1176, %v4504
    %v4554 = vsel %vm1765, %v1177, %v4505
    %v4555 = vsel %vm1766, %v1178, %v4506
    %v4556 = vsel %vm1767, %v1179, %v4507
    %v4557 = vsel %vm1768, %v1180, %v4508
    %v4558 = vsel %vm1769, %v1181, %v4509
    %v4559 = vsel %vm1770, %v1182, %v4510
    %v4560 = vsel %vm1771, %v1183, %v4511
    %v4561 = vsel %vm1772, %v1184, %v4512
    %v4562 = vsel %vm1773, %v1185, %v4513
    %v4563 = vsel %vm1774, %v1186, %v4514
    %v4564 = vsel %vm1775, %v1187, %v4515
    %v4565 = vsel %vm1776, %v1188, %v4516
    %v4566 = vsel %vm1777, %v1189, %v4517
    %v4567 = vsel %vm1778, %v1190, %v4518
    %v4568 = vsel %vm1779, %v1191, %v4519
    %v4569 = vsel %vm1780, %v1192, %v4520
    %v4570 = vsel %vm1781, %v1193, %v4521
    %v4571 = vsel %vm1782, %v1194, %v4522
    %v4572 = vsel %vm1783, %v1195, %v4523
    %v4573 = vsel %vm1784, %v1196, %v4524
    %v4574 = vsel %vm1785, %v1197, %v4525
    %v4575 = vsel %vm1786, %v1198, %v4526
    %v4576 = vsel %vm1787, %v1199, %v4527
    %v4577 = vsel %vm1788, %v1200, %v4528
    %v4578 = vsel %vm1789, %v1201, %v4529
    %v4579 = vsel %vm1790, %v1202, %v4530
    %v4580 = vsel %vm1791, %v1203, %v4531
    %v4581 = vsel %vm1792, %v1204, %v4532
    %v4582 = vsel %vm1793, %v1205, %v4533
    %v4583 = vsel %vm1794, %v1206, %v4534
    %v4584 = vsel %vm1795, %v1207, %v4535
    %v4585 = vsel %vm1796, %v1208, %v4536
    %v4586 = vsel %vm1797, %v1209, %v4537
    %v4587 = vsel %vm1798, %v1210, %v4538
    %v4588 = vsel %vm1799, %v1211, %v4539
    %v4589 = vsel %vm1800, %v1212, %v4540
    %v4590 = vsel %vm1801, %v1213, %v4541
    %v4591 = vsel %vm1802, %v1214, %v4542
    %v4592 = vsel %vm1803, %v1215, %v4543
    %v4593 = vsel %vm1804, %v1216, %v4544
    %v4594 = vsel %vm1805, %v1217, %v4545
    %v4595 = vsel %vm1806, %v1218, %v4546
    %v4596 = vsel %vm1807, %v1219, %v4547
    %v4597 = vsel %vm1808, %v1220, %v4548
    %v4598 = vsel %vm1809, %v1221, %v4549
    %v4599 = vsel %vm1810, %v1222, %v4550
    %v4600 = vsel %vm1811, %v1223, %v4551
    %v4601 = vsel %vm1714, %v881, %v4552
    %v4602 = vsel %vm1715, %v882, %v4553
    %v4603 = vsel %vm1716, %v883, %v4554
    %v4604 = vsel %vm1717, %v884, %v4555
    %v4605 = vsel %vm1718, %v885, %v4556
    %v4606 = vsel %vm1719, %v886, %v4557
    %v4607 = vsel %vm1720, %v887, %v4558
    %v4608 = vsel %vm1721, %v888, %v4559
    %v4609 = vsel %vm1722, %v889, %v4560
    %v4610 = vsel %vm1723, %v890, %v4561
    %v4611 = vsel %vm1724, %v891, %v4562
    %v4612 = vsel %vm1725, %v892, %v4563
    %v4613 = vsel %vm1726, %v893, %v4564
    %v4614 = vsel %vm1727, %v894, %v4565
    %v4615 = vsel %vm1728, %v895, %v4566
    %v4616 = vsel %vm1729, %v896, %v4567
    %v4617 = vsel %vm1730, %v897, %v4568
    %v4618 = vsel %vm1731, %v898, %v4569
    %v4619 = vsel %vm1732, %v899, %v4570
    %v4620 = vsel %vm1733, %v900, %v4571
    %v4621 = vsel %vm1734, %v901, %v4572
    %v4622 = vsel %vm1735, %v902, %v4573
    %v4623 = vsel %vm1736, %v903, %v4574
    %v4624 = vsel %vm1737, %v904, %v4575
    %v4625 = vsel %vm1738, %v905, %v4576
    %v4626 = vsel %vm1739, %v906, %v4577
    %v4627 = vsel %vm1740, %v907, %v4578
    %v4628 = vsel %vm1741, %v908, %v4579
    %v4629 = vsel %vm1742, %v909, %v4580
    %v4630 = vsel %vm1743, %v910, %v4581
    %v4631 = vsel %vm1744, %v911, %v4582
    %v4632 = vsel %vm1745, %v912, %v4583
    %v4633 = vsel %vm1746, %v913, %v4584
    %v4634 = vsel %vm1747, %v914, %v4585
    %v4635 = vsel %vm1748, %v915, %v4586
    %v4636 = vsel %vm1749, %v916, %v4587
    %v4637 = vsel %vm1750, %v917, %v4588
    %v4638 = vsel %vm1751, %v918, %v4589
    %v4639 = vsel %vm1752, %v919, %v4590
    %v4640 = vsel %vm1753, %v920, %v4591
    %v4641 = vsel %vm1754, %v921, %v4592
    %v4642 = vsel %vm1755, %v922, %v4593
    %v4643 = vsel %vm1756, %v923, %v4594
    %v4644 = vsel %vm1757, %v924, %v4595
    %v4645 = vsel %vm1758, %v925, %v4596
    %v4646 = vsel %vm1759, %v926, %v4597
    %v4647 = vsel %vm1760, %v927, %v4598
    %v4648 = vsel %vm1761, %v928, %v4599
    %v4649 = vsel %vm1762, %v929, %v4600
    %v4650 = vpack.c.bf16 %v4602, %v4601
    %v4651 = vpack.c.bf16 %v4604, %v4603
    %v4652 = vpack.c.bf16 %v4606, %v4605
    %v4653 = vpack.c.bf16 %v4608, %v4607
    %v4654 = vpack.c.bf16 %v4610, %v4609
    %v4655 = vpack.c.bf16 %v4612, %v4611
    %v4656 = vpack.c.bf16 %v4614, %v4613
    %v4657 = vpack.c.bf16 %v4616, %v4615
    %v4658 = vpack.c.bf16 %v4618, %v4617
    %v4659 = vpack.c.bf16 %v4620, %v4619
    %v4660 = vpack.c.bf16 %v4622, %v4621
    %v4661 = vpack.c.bf16 %v4624, %v4623
    %v4662 = vpack.c.bf16 %v4626, %v4625
    %v4663 = vpack.c.bf16 %v4628, %v4627
    %v4664 = vpack.c.bf16 %v4630, %v4629
    %v4665 = vpack.c.bf16 %v4632, %v4631
    %v4666 = vpack.c.bf16 %v4634, %v4633
    %v4667 = vpack.c.bf16 %v4636, %v4635
    %v4668 = vpack.c.bf16 %v4638, %v4637
    %v4669 = vpack.c.bf16 %v4640, %v4639
    %v4670 = vpack.c.bf16 %v4642, %v4641
    %v4671 = vpack.c.bf16 %v4644, %v4643
    %v4672 = vpack.c.bf16 %v4646, %v4645
    %v4673 = vpack.c.bf16 %v4648, %v4647
    %v4674 = vpack.c.bf16 %v4649, %v4649
    %v4675 = vld [vmem:[#allocation5 + $0x140] sm:$0xf]
    %v4676 = vld [vmem:[#allocation5 + $0x144] sm:$0xf]
    %v4677 = vld [vmem:[#allocation5 + $0x148] sm:$0xf]
    %v4678 = vld [vmem:[#allocation5 + $0x14c] sm:$0xf]
    %v4679 = vld [vmem:[#allocation5 + $0x150] sm:$0xf]
    %v4680 = vld [vmem:[#allocation5 + $0x154] sm:$0xf]
    %v4681 = vld [vmem:[#allocation5 + $0x158] sm:$0xf]
    %v4682 = vld [vmem:[#allocation5 + $0x15c] sm:$0xf]
    %v4683 = vld [vmem:[#allocation5 + $0x160] sm:$0xf]
    %v4684 = vld [vmem:[#allocation5 + $0x164] sm:$0xf]
    %v4685 = vld [vmem:[#allocation5 + $0x168] sm:$0xf]
    %v4686 = vld [vmem:[#allocation5 + $0x16c] sm:$0xf]
    %v4687 = vld [vmem:[#allocation5 + $0x170] sm:$0xf]
    %v4688 = vld [vmem:[#allocation5 + $0x174] sm:$0xf]
    %v4689 = vld [vmem:[#allocation5 + $0x178] sm:$0xf]
    %v4690 = vld [vmem:[#allocation5 + $0x17c] sm:$0xf]
    %v4707 = vunpack.c.l.b16 %v4675
    %v4708 = vunpack.c.l.b16 %v4676
    %v4709 = vunpack.c.l.b16 %v4677
    %v4710 = vunpack.c.l.b16 %v4678
    %v4711 = vunpack.c.l.b16 %v4679
    %v4712 = vunpack.c.l.b16 %v4680
    %v4713 = vunpack.c.l.b16 %v4681
    %v4714 = vunpack.c.l.b16 %v4682
    %v4715 = vunpack.c.l.b16 %v4683
    %v4716 = vunpack.c.l.b16 %v4684
    %v4717 = vunpack.c.l.b16 %v4685
    %v4718 = vunpack.c.l.b16 %v4686
    %v4719 = vunpack.c.l.b16 %v4687
    %v4720 = vunpack.c.l.b16 %v4688
    %v4721 = vunpack.c.l.b16 %v4689
    %v4722 = vunpack.c.l.b16 %v4690
    %v4723 = vpack.c.b16 %v4708, %v4707
    %v4724 = vpack.c.b16 %v4710, %v4709
    %v4725 = vpack.c.b16 %v4712, %v4711
    %v4726 = vpack.c.b16 %v4714, %v4713
    %v4727 = vpack.c.b16 %v4716, %v4715
    %v4728 = vpack.c.b16 %v4718, %v4717
    %v4729 = vpack.c.b16 %v4720, %v4719
    %v4730 = vpack.c.b16 %v4722, %v4721
    %4739 = vmatprep.subr.bf16.mxu0 0
    %4740 = vmatpush1.bf16.msra.mxu0 %v4723
    %4741 = vmatprep.subr.bf16.mxu0 0
    %4742 = vmatpush1.bf16.msra.mxu0 %v4724
    %4743 = vmatprep.subr.bf16.mxu0 0
    %4744 = vmatpush1.bf16.msra.mxu0 %v4725
    %4745 = vmatprep.subr.bf16.mxu0 0
    %4746 = vmatpush1.bf16.msra.mxu0 %v4726
    %4747 = vmatprep.subr.bf16.mxu0 0
    %4748 = vmatpush1.bf16.msra.mxu0 %v4727
    %4749 = vmatprep.subr.bf16.mxu0 0
    %4750 = vmatpush1.bf16.msra.mxu0 %v4728
    %4751 = vmatprep.subr.bf16.mxu0 0
    %4752 = vmatpush1.bf16.msra.mxu0 %v4729
    %4753 = vmatprep.subr.bf16.mxu0 0
    %4754 = vmatpush1.bf16.msra.mxu0 %v4730
    %4755 = vmatprep.subr.bf16.mxu0 0
    %4756 = vmatpush1.bf16.msra.mxu0 0
    %4757 = vmatprep.subr.bf16.mxu0 0
    %4758 = vmatpush1.bf16.msra.mxu0 0
    %4759 = vmatprep.subr.bf16.mxu0 0
    %4760 = vmatpush1.bf16.msra.mxu0 0
    %4761 = vmatprep.subr.bf16.mxu0 0
    %4762 = vmatpush1.bf16.msra.mxu0 0
    %4763 = vmatprep.subr.bf16.mxu0 0
    %4764 = vmatpush1.bf16.msra.mxu0 0
    %4765 = vmatprep.subr.bf16.mxu0 0
    %4766 = vmatpush1.bf16.msra.mxu0 0
    %4767 = vmatprep.subr.bf16.mxu0 0
    %4768 = vmatpush1.bf16.msra.mxu0 0
    %4769 = vmatprep.subr.bf16.mxu0 0
    %4770 = vmatpush1.bf16.msra.mxu0 0
    %4771 = vmatprep.mubr.bf16.mxu0 0
    %4772 = vmatmul.mubr.bf16.gmra.mrb[0].mxu0 %v4650
    %v4773 = vpop.f32.mrb[0].mxu0
    %v4774 = vadd.f32 0.0, %v4773
    %v4775 = vpop.f32.mrb[0].mxu0
    %v4776 = vpop.f32.mrb[0].mxu0
    %v4777 = vadd.f32 0.0, %v4776
    %v4778 = vpop.f32.mrb[0].mxu0
    %4779 = vmatprep.mubr.bf16.mxu0 0
    %4780 = vmatmul.mubr.bf16.gmra.mrb[0].mxu0 %v4651
    %v4781 = vpop.f32.mrb[0].mxu0
    %v4782 = vadd.f32 0.0, %v4781
    %v4783 = vpop.f32.mrb[0].mxu0
    %v4784 = vpop.f32.mrb[0].mxu0
    %v4785 = vadd.f32 0.0, %v4784
    %v4786 = vpop.f32.mrb[0].mxu0
    %4787 = vmatprep.mubr.bf16.mxu0 0
    %4788 = vmatmul.mubr.bf16.gmra.mrb[0].mxu0 %v4652
    %v4789 = vpop.f32.mrb[0].mxu0
    %v4790 = vadd.f32 0.0, %v4789
    %v4791 = vpop.f32.mrb[0].mxu0
    %v4792 = vpop.f32.mrb[0].mxu0
    %v4793 = vadd.f32 0.0, %v4792
    %v4794 = vpop.f32.mrb[0].mxu0
    %4795 = vmatprep.mubr.bf16.mxu0 0
    %4796 = vmatmul.mubr.bf16.gmra.mrb[0].mxu0 %v4653
    %v4797 = vpop.f32.mrb[0].mxu0
    %v4798 = vadd.f32 0.0, %v4797
    %v4799 = vpop.f32.mrb[0].mxu0
    %v4800 = vpop.f32.mrb[0].mxu0
    %v4801 = vadd.f32 0.0, %v4800
    %v4802 = vpop.f32.mrb[0].mxu0
    %4803 = vmatprep.mubr.bf16.mxu0 0
    %4804 = vmatmul.mubr.bf16.gmra.mrb[0].mxu0 %v4654
    %v4805 = vpop.f32.mrb[0].mxu0
    %v4806 = vadd.f32 0.0, %v4805
    %v4807 = vpop.f32.mrb[0].mxu0
    %v4808 = vpop.f32.mrb[0].mxu0
    %v4809 = vadd.f32 0.0, %v4808
    %v4810 = vpop.f32.mrb[0].mxu0
    %4811 = vmatprep.mubr.bf16.mxu0 0
    %4812 = vmatmul.mubr.bf16.gmra.mrb[0].mxu0 %v4655
    %v4813 = vpop.f32.mrb[0].mxu0
    %v4814 = vadd.f32 0.0, %v4813
    %v4815 = vpop.f32.mrb[0].mxu0
    %v4816 = vpop.f32.mrb[0].mxu0
    %v4817 = vadd.f32 0.0, %v4816
    %v4818 = vpop.f32.mrb[0].mxu0
    %4819 = vmatprep.mubr.bf16.mxu0 0
    %4820 = vmatmul.mubr.bf16.gmra.mrb[0].mxu0 %v4656
    %v4821 = vpop.f32.mrb[0].mxu0
    %v4822 = vadd.f32 0.0, %v4821
    %v4823 = vpop.f32.mrb[0].mxu0
    %v4824 = vpop.f32.mrb[0].mxu0
    %v4825 = vadd.f32 0.0, %v4824
    %v4826 = vpop.f32.mrb[0].mxu0
    %4827 = vmatprep.mubr.bf16.mxu0 0
    %4828 = vmatmul.mubr.bf16.gmra.mrb[0].mxu0 %v4657
    %v4829 = vpop.f32.mrb[0].mxu0
    %v4830 = vadd.f32 0.0, %v4829
    %v4831 = vpop.f32.mrb[0].mxu0
    %v4832 = vpop.f32.mrb[0].mxu0
    %v4833 = vadd.f32 0.0, %v4832
    %v4834 = vpop.f32.mrb[0].mxu0
    %4835 = vmatprep.mubr.bf16.mxu0 0
    %4836 = vmatmul.mubr.bf16.gmra.mrb[0].mxu0 %v4658
    %v4837 = vpop.f32.mrb[0].mxu0
    %v4838 = vadd.f32 0.0, %v4837
    %v4839 = vpop.f32.mrb[0].mxu0
    %v4840 = vpop.f32.mrb[0].mxu0
    %v4841 = vadd.f32 0.0, %v4840
    %v4842 = vpop.f32.mrb[0].mxu0
    %4843 = vmatprep.mubr.bf16.mxu0 0
    %4844 = vmatmul.mubr.bf16.gmra.mrb[0].mxu0 %v4659
    %v4845 = vpop.f32.mrb[0].mxu0
    %v4846 = vadd.f32 0.0, %v4845
    %v4847 = vpop.f32.mrb[0].mxu0
    %v4848 = vpop.f32.mrb[0].mxu0
    %v4849 = vadd.f32 0.0, %v4848
    %v4850 = vpop.f32.mrb[0].mxu0
    %4851 = vmatprep.mubr.bf16.mxu0 0
    %4852 = vmatmul.mubr.bf16.gmra.mrb[0].mxu0 %v4660
    %v4853 = vpop.f32.mrb[0].mxu0
    %v4854 = vadd.f32 0.0, %v4853
    %v4855 = vpop.f32.mrb[0].mxu0
    %v4856 = vpop.f32.mrb[0].mxu0
    %v4857 = vadd.f32 0.0, %v4856
    %v4858 = vpop.f32.mrb[0].mxu0
    %4859 = vmatprep.mubr.bf16.mxu0 0
    %4860 = vmatmul.mubr.bf16.gmra.mrb[0].mxu0 %v4661
    %v4861 = vpop.f32.mrb[0].mxu0
    %v4862 = vadd.f32 0.0, %v4861
    %v4863 = vpop.f32.mrb[0].mxu0
    %v4864 = vpop.f32.mrb[0].mxu0
    %v4865 = vadd.f32 0.0, %v4864
    %v4866 = vpop.f32.mrb[0].mxu0
    %4867 = vmatprep.mubr.bf16.mxu0 0
    %4868 = vmatmul.mubr.bf16.gmra.mrb[0].mxu0 %v4662
    %v4869 = vpop.f32.mrb[0].mxu0
    %v4870 = vadd.f32 0.0, %v4869
    %v4871 = vpop.f32.mrb[0].mxu0
    %v4872 = vpop.f32.mrb[0].mxu0
    %v4873 = vadd.f32 0.0, %v4872
    %v4874 = vpop.f32.mrb[0].mxu0
    %4875 = vmatprep.mubr.bf16.mxu0 0
    %4876 = vmatmul.mubr.bf16.gmra.mrb[0].mxu0 %v4663
    %v4877 = vpop.f32.mrb[0].mxu0
    %v4878 = vadd.f32 0.0, %v4877
    %v4879 = vpop.f32.mrb[0].mxu0
    %v4880 = vpop.f32.mrb[0].mxu0
    %v4881 = vadd.f32 0.0, %v4880
    %v4882 = vpop.f32.mrb[0].mxu0
    %4883 = vmatprep.mubr.bf16.mxu0 0
    %4884 = vmatmul.mubr.bf16.gmra.mrb[0].mxu0 %v4664
    %v4885 = vpop.f32.mrb[0].mxu0
    %v4886 = vadd.f32 0.0, %v4885
    %v4887 = vpop.f32.mrb[0].mxu0
    %v4888 = vpop.f32.mrb[0].mxu0
    %v4889 = vadd.f32 0.0, %v4888
    %v4890 = vpop.f32.mrb[0].mxu0
    %4891 = vmatprep.mubr.bf16.mxu0 0
    %4892 = vmatmul.mubr.bf16.gmra.mrb[0].mxu0 %v4665
    %v4893 = vpop.f32.mrb[0].mxu0
    %v4894 = vadd.f32 0.0, %v4893
    %v4895 = vpop.f32.mrb[0].mxu0
    %v4896 = vpop.f32.mrb[0].mxu0
    %v4897 = vadd.f32 0.0, %v4896
    %v4898 = vpop.f32.mrb[0].mxu0
    %4899 = vmatprep.mubr.bf16.mxu0 0
    %4900 = vmatmul.mubr.bf16.gmra.mrb[0].mxu0 %v4666
    %v4901 = vpop.f32.mrb[0].mxu0
    %v4902 = vadd.f32 0.0, %v4901
    %v4903 = vpop.f32.mrb[0].mxu0
    %v4904 = vpop.f32.mrb[0].mxu0
    %v4905 = vadd.f32 0.0, %v4904
    %v4906 = vpop.f32.mrb[0].mxu0
    %4907 = vmatprep.mubr.bf16.mxu0 0
    %4908 = vmatmul.mubr.bf16.gmra.mrb[0].mxu0 %v4667
    %v4909 = vpop.f32.mrb[0].mxu0
    %v4910 = vadd.f32 0.0, %v4909
    %v4911 = vpop.f32.mrb[0].mxu0
    %v4912 = vpop.f32.mrb[0].mxu0
    %v4913 = vadd.f32 0.0, %v4912
    %v4914 = vpop.f32.mrb[0].mxu0
    %4915 = vmatprep.mubr.bf16.mxu0 0
    %4916 = vmatmul.mubr.bf16.gmra.mrb[0].mxu0 %v4668
    %v4917 = vpop.f32.mrb[0].mxu0
    %v4918 = vadd.f32 0.0, %v4917
    %v4919 = vpop.f32.mrb[0].mxu0
    %v4920 = vpop.f32.mrb[0].mxu0
    %v4921 = vadd.f32 0.0, %v4920
    %v4922 = vpop.f32.mrb[0].mxu0
    %4923 = vmatprep.mubr.bf16.mxu0 0
    %4924 = vmatmul.mubr.bf16.gmra.mrb[0].mxu0 %v4669
    %v4925 = vpop.f32.mrb[0].mxu0
    %v4926 = vadd.f32 0.0, %v4925
    %v4927 = vpop.f32.mrb[0].mxu0
    %v4928 = vpop.f32.mrb[0].mxu0
    %v4929 = vadd.f32 0.0, %v4928
    %v4930 = vpop.f32.mrb[0].mxu0
    %4931 = vmatprep.mubr.bf16.mxu0 0
    %4932 = vmatmul.mubr.bf16.gmra.mrb[0].mxu0 %v4670
    %v4933 = vpop.f32.mrb[0].mxu0
    %v4934 = vadd.f32 0.0, %v4933
    %v4935 = vpop.f32.mrb[0].mxu0
    %v4936 = vpop.f32.mrb[0].mxu0
    %v4937 = vadd.f32 0.0, %v4936
    %v4938 = vpop.f32.mrb[0].mxu0
    %4939 = vmatprep.mubr.bf16.mxu0 0
    %4940 = vmatmul.mubr.bf16.gmra.mrb[0].mxu0 %v4671
    %v4941 = vpop.f32.mrb[0].mxu0
    %v4942 = vadd.f32 0.0, %v4941
    %v4943 = vpop.f32.mrb[0].mxu0
    %v4944 = vpop.f32.mrb[0].mxu0
    %v4945 = vadd.f32 0.0, %v4944
    %v4946 = vpop.f32.mrb[0].mxu0
    %4947 = vmatprep.mubr.bf16.mxu0 0
    %4948 = vmatmul.mubr.bf16.gmra.mrb[0].mxu0 %v4672
    %v4949 = vpop.f32.mrb[0].mxu0
    %v4950 = vadd.f32 0.0, %v4949
    %v4951 = vpop.f32.mrb[0].mxu0
    %v4952 = vpop.f32.mrb[0].mxu0
    %v4953 = vadd.f32 0.0, %v4952
    %v4954 = vpop.f32.mrb[0].mxu0
    %4955 = vmatprep.mubr.bf16.mxu0 0
    %4956 = vmatmul.mubr.bf16.gmra.mrb[0].mxu0 %v4673
    %v4957 = vpop.f32.mrb[0].mxu0
    %v4958 = vadd.f32 0.0, %v4957
    %v4959 = vpop.f32.mrb[0].mxu0
    %v4960 = vpop.f32.mrb[0].mxu0
    %v4961 = vadd.f32 0.0, %v4960
    %v4962 = vpop.f32.mrb[0].mxu0
    %4963 = vmatprep.mubr.bf16.mxu0 0
    %4964 = vmatmul.mubr.bf16.gmra.mrb[0].mxu0 %v4674
    %v4965 = vpop.f32.mrb[0].mxu0
    %v4966 = vadd.f32 0.0, %v4965
    %v4967 = vpop.f32.mrb[0].mxu0
    %v4968 = vpop.f32.mrb[0].mxu0
    %v4969 = vpop.f32.mrb[0].mxu0
    %4970 = vdwg.mxu0
    %v4971 = vadd.f32 %v4405, %v4774
    %v4972 = vadd.f32 %v4406, %v4777
    %v4973 = vadd.f32 %v4407, %v4782
    %v4974 = vadd.f32 %v4408, %v4785
    %v4975 = vadd.f32 %v4409, %v4790
    %v4976 = vadd.f32 %v4410, %v4793
    %v4977 = vadd.f32 %v4411, %v4798
    %v4978 = vadd.f32 %v4412, %v4801
    %v4979 = vadd.f32 %v4413, %v4806
    %v4980 = vadd.f32 %v4414, %v4809
    %v4981 = vadd.f32 %v4415, %v4814
    %v4982 = vadd.f32 %v4416, %v4817
    %v4983 = vadd.f32 %v4417, %v4822
    %v4984 = vadd.f32 %v4418, %v4825
    %v4985 = vadd.f32 %v4419, %v4830
    %v4986 = vadd.f32 %v4420, %v4833
    %v4987 = vadd.f32 %v4421, %v4838
    %v4988 = vadd.f32 %v4422, %v4841
    %v4989 = vadd.f32 %v4423, %v4846
    %v4990 = vadd.f32 %v4424, %v4849
    %v4991 = vadd.f32 %v4425, %v4854
    %v4992 = vadd.f32 %v4426, %v4857
    %v4993 = vadd.f32 %v4427, %v4862
    %v4994 = vadd.f32 %v4428, %v4865
    %v4995 = vadd.f32 %v4429, %v4870
    %v4996 = vadd.f32 %v4430, %v4873
    %v4997 = vadd.f32 %v4431, %v4878
    %v4998 = vadd.f32 %v4432, %v4881
    %v4999 = vadd.f32 %v4433, %v4886
    %v5000 = vadd.f32 %v4434, %v4889
    %v5001 = vadd.f32 %v4435, %v4894
    %v5002 = vadd.f32 %v4436, %v4897
    %v5003 = vadd.f32 %v4437, %v4902
    %v5004 = vadd.f32 %v4438, %v4905
    %v5005 = vadd.f32 %v4439, %v4910
    %v5006 = vadd.f32 %v4440, %v4913
    %v5007 = vadd.f32 %v4441, %v4918
    %v5008 = vadd.f32 %v4442, %v4921
    %v5009 = vadd.f32 %v4443, %v4926
    %v5010 = vadd.f32 %v4444, %v4929
    %v5011 = vadd.f32 %v4445, %v4934
    %v5012 = vadd.f32 %v4446, %v4937
    %v5013 = vadd.f32 %v4447, %v4942
    %v5014 = vadd.f32 %v4448, %v4945
    %v5015 = vadd.f32 %v4449, %v4950
    %v5016 = vadd.f32 %v4450, %v4953
    %v5017 = vadd.f32 %v4451, %v4958
    %v5018 = vadd.f32 %v4452, %v4961
    %v5019 = vadd.f32 %v4453, %v4966
    %v5020 = vsel %vm1910, %v1322, 0.0
    %v5021 = vsel %vm1911, %v1323, 0.0
    %v5022 = vsel %vm1912, %v1324, 0.0
    %v5023 = vsel %vm1913, %v1325, 0.0
    %v5024 = vsel %vm1914, %v1326, 0.0
    %v5025 = vsel %vm1915, %v1327, 0.0
    %v5026 = vsel %vm1916, %v1328, 0.0
    %v5027 = vsel %vm1917, %v1329, 0.0
    %v5028 = vsel %vm1918, %v1330, 0.0
    %v5029 = vsel %vm1919, %v1331, 0.0
    %v5030 = vsel %vm1920, %v1332, 0.0
    %v5031 = vsel %vm1921, %v1333, 0.0
    %v5032 = vsel %vm1922, %v1334, 0.0
    %v5033 = vsel %vm1923, %v1335, 0.0
    %v5034 = vsel %vm1924, %v1336, 0.0
    %v5035 = vsel %vm1925, %v1337, 0.0
    %v5036 = vsel %vm1926, %v1338, 0.0
    %v5037 = vsel %vm1927, %v1339, 0.0
    %v5038 = vsel %vm1928, %v1340, 0.0
    %v5039 = vsel %vm1929, %v1341, 0.0
    %v5040 = vsel %vm1930, %v1342, 0.0
    %v5041 = vsel %vm1931, %v1343, 0.0
    %v5042 = vsel %vm1932, %v1344, 0.0
    %v5043 = vsel %vm1933, %v1345, 0.0
    %v5044 = vsel %vm1934, %v1346, 0.0
    %v5045 = vsel %vm1935, %v1347, 0.0
    %v5046 = vsel %vm1936, %v1348, 0.0
    %v5047 = vsel %vm1937, %v1349, 0.0
    %v5048 = vsel %vm1938, %v1350, 0.0
    %v5049 = vsel %vm1939, %v1351, 0.0
    %v5050 = vsel %vm1940, %v1352, 0.0
    %v5051 = vsel %vm1941, %v1353, 0.0
    %v5052 = vsel %vm1942, %v1354, 0.0
    %v5053 = vsel %vm1943, %v1355, 0.0
    %v5054 = vsel %vm1944, %v1356, 0.0
    %v5055 = vsel %vm1945, %v1357, 0.0
    %v5056 = vsel %vm1946, %v1358, 0.0
    %v5057 = vsel %vm1947, %v1359, 0.0
    %v5058 = vsel %vm1948, %v1360, 0.0
    %v5059 = vsel %vm1949, %v1361, 0.0
    %v5060 = vsel %vm1950, %v1362, 0.0
    %v5061 = vsel %vm1951, %v1363, 0.0
    %v5062 = vsel %vm1952, %v1364, 0.0
    %v5063 = vsel %vm1953, %v1365, 0.0
    %v5064 = vsel %vm1954, %v1366, 0.0
    %v5065 = vsel %vm1955, %v1367, 0.0
    %v5066 = vsel %vm1956, %v1368, 0.0
    %v5067 = vsel %vm1957, %v1369, 0.0
    %v5068 = vsel %vm1958, %v1370, 0.0
    %v5069 = vsel %vm1861, %v1469, %v5020
    %v5070 = vsel %vm1862, %v1470, %v5021
    %v5071 = vsel %vm1863, %v1471, %v5022
    %v5072 = vsel %vm1864, %v1472, %v5023
    %v5073 = vsel %vm1865, %v1473, %v5024
    %v5074 = vsel %vm1866, %v1474, %v5025
    %v5075 = vsel %vm1867, %v1475, %v5026
    %v5076 = vsel %vm1868, %v1476, %v5027
    %v5077 = vsel %vm1869, %v1477, %v5028
    %v5078 = vsel %vm1870, %v1478, %v5029
    %v5079 = vsel %vm1871, %v1479, %v5030
    %v5080 = vsel %vm1872, %v1480, %v5031
    %v5081 = vsel %vm1873, %v1481, %v5032
    %v5082 = vsel %vm1874, %v1482, %v5033
    %v5083 = vsel %vm1875, %v1483, %v5034
    %v5084 = vsel %vm1876, %v1484, %v5035
    %v5085 = vsel %vm1877, %v1485, %v5036
    %v5086 = vsel %vm1878, %v1486, %v5037
    %v5087 = vsel %vm1879, %v1487, %v5038
    %v5088 = vsel %vm1880, %v1488, %v5039
    %v5089 = vsel %vm1881, %v1489, %v5040
    %v5090 = vsel %vm1882, %v1490, %v5041
    %v5091 = vsel %vm1883, %v1491, %v5042
    %v5092 = vsel %vm1884, %v1492, %v5043
    %v5093 = vsel %vm1885, %v1493, %v5044
    %v5094 = vsel %vm1886, %v1494, %v5045
    %v5095 = vsel %vm1887, %v1495, %v5046
    %v5096 = vsel %vm1888, %v1496, %v5047
    %v5097 = vsel %vm1889, %v1497, %v5048
    %v5098 = vsel %vm1890, %v1498, %v5049
    %v5099 = vsel %vm1891, %v1499, %v5050
    %v5100 = vsel %vm1892, %v1500, %v5051
    %v5101 = vsel %vm1893, %v1501, %v5052
    %v5102 = vsel %vm1894, %v1502, %v5053
    %v5103 = vsel %vm1895, %v1503, %v5054
    %v5104 = vsel %vm1896, %v1504, %v5055
    %v5105 = vsel %vm1897, %v1505, %v5056
    %v5106 = vsel %vm1898, %v1506, %v5057
    %v5107 = vsel %vm1899, %v1507, %v5058
    %v5108 = vsel %vm1900, %v1508, %v5059
    %v5109 = vsel %vm1901, %v1509, %v5060
    %v5110 = vsel %vm1902, %v1510, %v5061
    %v5111 = vsel %vm1903, %v1511, %v5062
    %v5112 = vsel %vm1904, %v1512, %v5063
    %v5113 = vsel %vm1905, %v1513, %v5064
    %v5114 = vsel %vm1906, %v1514, %v5065
    %v5115 = vsel %vm1907, %v1515, %v5066
    %v5116 = vsel %vm1908, %v1516, %v5067
    %v5117 = vsel %vm1909, %v1517, %v5068
    %v5118 = vsel %vm1812, %v1175, %v5069
    %v5119 = vsel %vm1813, %v1176, %v5070
    %v5120 = vsel %vm1814, %v1177, %v5071
    %v5121 = vsel %vm1815, %v1178, %v5072
    %v5122 = vsel %vm1816, %v1179, %v5073
    %v5123 = vsel %vm1817, %v1180, %v5074
    %v5124 = vsel %vm1818, %v1181, %v5075
    %v5125 = vsel %vm1819, %v1182, %v5076
    %v5126 = vsel %vm1820, %v1183, %v5077
    %v5127 = vsel %vm1821, %v1184, %v5078
    %v5128 = vsel %vm1822, %v1185, %v5079
    %v5129 = vsel %vm1823, %v1186, %v5080
    %v5130 = vsel %vm1824, %v1187, %v5081
    %v5131 = vsel %vm1825, %v1188, %v5082
    %v5132 = vsel %vm1826, %v1189, %v5083
    %v5133 = vsel %vm1827, %v1190, %v5084
    %v5134 = vsel %vm1828, %v1191, %v5085
    %v5135 = vsel %vm1829, %v1192, %v5086
    %v5136 = vsel %vm1830, %v1193, %v5087
    %v5137 = vsel %vm1831, %v1194, %v5088
    %v5138 = vsel %vm1832, %v1195, %v5089
    %v5139 = vsel %vm1833, %v1196, %v5090
    %v5140 = vsel %vm1834, %v1197, %v5091
    %v5141 = vsel %vm1835, %v1198, %v5092
    %v5142 = vsel %vm1836, %v1199, %v5093
    %v5143 = vsel %vm1837, %v1200, %v5094
    %v5144 = vsel %vm1838, %v1201, %v5095
    %v5145 = vsel %vm1839, %v1202, %v5096
    %v5146 = vsel %vm1840, %v1203, %v5097
    %v5147 = vsel %vm1841, %v1204, %v5098
    %v5148 = vsel %vm1842, %v1205, %v5099
    %v5149 = vsel %vm1843, %v1206, %v5100
    %v5150 = vsel %vm1844, %v1207, %v5101
    %v5151 = vsel %vm1845, %v1208, %v5102
    %v5152 = vsel %vm1846, %v1209, %v5103
    %v5153 = vsel %vm1847, %v1210, %v5104
    %v5154 = vsel %vm1848, %v1211, %v5105
    %v5155 = vsel %vm1849, %v1212, %v5106
    %v5156 = vsel %vm1850, %v1213, %v5107
    %v5157 = vsel %vm1851, %v1214, %v5108
    %v5158 = vsel %vm1852, %v1215, %v5109
    %v5159 = vsel %vm1853, %v1216, %v5110
    %v5160 = vsel %vm1854, %v1217, %v5111
    %v5161 = vsel %vm1855, %v1218, %v5112
    %v5162 = vsel %vm1856, %v1219, %v5113
    %v5163 = vsel %vm1857, %v1220, %v5114
    %v5164 = vsel %vm1858, %v1221, %v5115
    %v5165 = vsel %vm1859, %v1222, %v5116
    %v5166 = vsel %vm1860, %v1223, %v5117
    %v5167 = vsel %vm1763, %v881, %v5118
    %v5168 = vsel %vm1764, %v882, %v5119
    %v5169 = vsel %vm1765, %v883, %v5120
    %v5170 = vsel %vm1766, %v884, %v5121
    %v5171 = vsel %vm1767, %v885, %v5122
    %v5172 = vsel %vm1768, %v886, %v5123
    %v5173 = vsel %vm1769, %v887, %v5124
    %v5174 = vsel %vm1770, %v888, %v5125
    %v5175 = vsel %vm1771, %v889, %v5126
    %v5176 = vsel %vm1772, %v890, %v5127
    %v5177 = vsel %vm1773, %v891, %v5128
    %v5178 = vsel %vm1774, %v892, %v5129
    %v5179 = vsel %vm1775, %v893, %v5130
    %v5180 = vsel %vm1776, %v894, %v5131
    %v5181 = vsel %vm1777, %v895, %v5132
    %v5182 = vsel %vm1778, %v896, %v5133
    %v5183 = vsel %vm1779, %v897, %v5134
    %v5184 = vsel %vm1780, %v898, %v5135
    %v5185 = vsel %vm1781, %v899, %v5136
    %v5186 = vsel %vm1782, %v900, %v5137
    %v5187 = vsel %vm1783, %v901, %v5138
    %v5188 = vsel %vm1784, %v902, %v5139
    %v5189 = vsel %vm1785, %v903, %v5140
    %v5190 = vsel %vm1786, %v904, %v5141
    %v5191 = vsel %vm1787, %v905, %v5142
    %v5192 = vsel %vm1788, %v906, %v5143
    %v5193 = vsel %vm1789, %v907, %v5144
    %v5194 = vsel %vm1790, %v908, %v5145
    %v5195 = vsel %vm1791, %v909, %v5146
    %v5196 = vsel %vm1792, %v910, %v5147
    %v5197 = vsel %vm1793, %v911, %v5148
    %v5198 = vsel %vm1794, %v912, %v5149
    %v5199 = vsel %vm1795, %v913, %v5150
    %v5200 = vsel %vm1796, %v914, %v5151
    %v5201 = vsel %vm1797, %v915, %v5152
    %v5202 = vsel %vm1798, %v916, %v5153
    %v5203 = vsel %vm1799, %v917, %v5154
    %v5204 = vsel %vm1800, %v918, %v5155
    %v5205 = vsel %vm1801, %v919, %v5156
    %v5206 = vsel %vm1802, %v920, %v5157
    %v5207 = vsel %vm1803, %v921, %v5158
    %v5208 = vsel %vm1804, %v922, %v5159
    %v5209 = vsel %vm1805, %v923, %v5160
    %v5210 = vsel %vm1806, %v924, %v5161
    %v5211 = vsel %vm1807, %v925, %v5162
    %v5212 = vsel %vm1808, %v926, %v5163
    %v5213 = vsel %vm1809, %v927, %v5164
    %v5214 = vsel %vm1810, %v928, %v5165
    %v5215 = vsel %vm1811, %v929, %v5166
    %v5216 = vpack.c.bf16 %v5168, %v5167
    %v5217 = vpack.c.bf16 %v5170, %v5169
    %v5218 = vpack.c.bf16 %v5172, %v5171
    %v5219 = vpack.c.bf16 %v5174, %v5173
    %v5220 = vpack.c.bf16 %v5176, %v5175
    %v5221 = vpack.c.bf16 %v5178, %v5177
    %v5222 = vpack.c.bf16 %v5180, %v5179
    %v5223 = vpack.c.bf16 %v5182, %v5181
    %v5224 = vpack.c.bf16 %v5184, %v5183
    %v5225 = vpack.c.bf16 %v5186, %v5185
    %v5226 = vpack.c.bf16 %v5188, %v5187
    %v5227 = vpack.c.bf16 %v5190, %v5189
    %v5228 = vpack.c.bf16 %v5192, %v5191
    %v5229 = vpack.c.bf16 %v5194, %v5193
    %v5230 = vpack.c.bf16 %v5196, %v5195
    %v5231 = vpack.c.bf16 %v5198, %v5197
    %v5232 = vpack.c.bf16 %v5200, %v5199
    %v5233 = vpack.c.bf16 %v5202, %v5201
    %v5234 = vpack.c.bf16 %v5204, %v5203
    %v5235 = vpack.c.bf16 %v5206, %v5205
    %v5236 = vpack.c.bf16 %v5208, %v5207
    %v5237 = vpack.c.bf16 %v5210, %v5209
    %v5238 = vpack.c.bf16 %v5212, %v5211
    %v5239 = vpack.c.bf16 %v5214, %v5213
    %v5240 = vpack.c.bf16 %v5215, %v5215
    %v5241 = vld [vmem:[#allocation5 + $0x180] sm:$0xf]
    %v5242 = vld [vmem:[#allocation5 + $0x184] sm:$0xf]
    %v5243 = vld [vmem:[#allocation5 + $0x188] sm:$0xf]
    %v5244 = vld [vmem:[#allocation5 + $0x18c] sm:$0xf]
    %v5245 = vld [vmem:[#allocation5 + $0x190] sm:$0xf]
    %v5246 = vld [vmem:[#allocation5 + $0x194] sm:$0xf]
    %v5247 = vld [vmem:[#allocation5 + $0x198] sm:$0xf]
    %v5248 = vld [vmem:[#allocation5 + $0x19c] sm:$0xf]
    %v5249 = vld [vmem:[#allocation5 + $0x1a0] sm:$0xf]
    %v5250 = vld [vmem:[#allocation5 + $0x1a4] sm:$0xf]
    %v5251 = vld [vmem:[#allocation5 + $0x1a8] sm:$0xf]
    %v5252 = vld [vmem:[#allocation5 + $0x1ac] sm:$0xf]
    %v5253 = vld [vmem:[#allocation5 + $0x1b0] sm:$0xf]
    %v5254 = vld [vmem:[#allocation5 + $0x1b4] sm:$0xf]
    %v5255 = vld [vmem:[#allocation5 + $0x1b8] sm:$0xf]
    %v5256 = vld [vmem:[#allocation5 + $0x1bc] sm:$0xf]
    %v5273 = vunpack.c.l.b16 %v5241
    %v5274 = vunpack.c.l.b16 %v5242
    %v5275 = vunpack.c.l.b16 %v5243
    %v5276 = vunpack.c.l.b16 %v5244
    %v5277 = vunpack.c.l.b16 %v5245
    %v5278 = vunpack.c.l.b16 %v5246
    %v5279 = vunpack.c.l.b16 %v5247
    %v5280 = vunpack.c.l.b16 %v5248
    %v5281 = vunpack.c.l.b16 %v5249
    %v5282 = vunpack.c.l.b16 %v5250
    %v5283 = vunpack.c.l.b16 %v5251
    %v5284 = vunpack.c.l.b16 %v5252
    %v5285 = vunpack.c.l.b16 %v5253
    %v5286 = vunpack.c.l.b16 %v5254
    %v5287 = vunpack.c.l.b16 %v5255
    %v5288 = vunpack.c.l.b16 %v5256
    %v5289 = vpack.c.b16 %v5274, %v5273
    %v5290 = vpack.c.b16 %v5276, %v5275
    %v5291 = vpack.c.b16 %v5278, %v5277
    %v5292 = vpack.c.b16 %v5280, %v5279
    %v5293 = vpack.c.b16 %v5282, %v5281
    %v5294 = vpack.c.b16 %v5284, %v5283
    %v5295 = vpack.c.b16 %v5286, %v5285
    %v5296 = vpack.c.b16 %v5288, %v5287
    %5305 = vmatprep.subr.bf16.mxu0 0
    %5306 = vmatpush1.bf16.msra.mxu0 %v5289
    %5307 = vmatprep.subr.bf16.mxu0 0
    %5308 = vmatpush1.bf16.msra.mxu0 %v5290
    %5309 = vmatprep.subr.bf16.mxu0 0
    %5310 = vmatpush1.bf16.msra.mxu0 %v5291
    %5311 = vmatprep.subr.bf16.mxu0 0
    %5312 = vmatpush1.bf16.msra.mxu0 %v5292
    %5313 = vmatprep.subr.bf16.mxu0 0
    %5314 = vmatpush1.bf16.msra.mxu0 %v5293
    %5315 = vmatprep.subr.bf16.mxu0 0
    %5316 = vmatpush1.bf16.msra.mxu0 %v5294
    %5317 = vmatprep.subr.bf16.mxu0 0
    %5318 = vmatpush1.bf16.msra.mxu0 %v5295
    %5319 = vmatprep.subr.bf16.mxu0 0
    %5320 = vmatpush1.bf16.msra.mxu0 %v5296
    %5321 = vmatprep.subr.bf16.mxu0 0
    %5322 = vmatpush1.bf16.msra.mxu0 0
    %5323 = vmatprep.subr.bf16.mxu0 0
    %5324 = vmatpush1.bf16.msra.mxu0 0
    %5325 = vmatprep.subr.bf16.mxu0 0
    %5326 = vmatpush1.bf16.msra.mxu0 0
    %5327 = vmatprep.subr.bf16.mxu0 0
    %5328 = vmatpush1.bf16.msra.mxu0 0
    %5329 = vmatprep.subr.bf16.mxu0 0
    %5330 = vmatpush1.bf16.msra.mxu0 0
    %5331 = vmatprep.subr.bf16.mxu0 0
    %5332 = vmatpush1.bf16.msra.mxu0 0
    %5333 = vmatprep.subr.bf16.mxu0 0
    %5334 = vmatpush1.bf16.msra.mxu0 0
    %5335 = vmatprep.subr.bf16.mxu0 0
    %5336 = vmatpush1.bf16.msra.mxu0 0
    %5337 = vmatprep.mubr.bf16.mxu0 0
    %5338 = vmatmul.mubr.bf16.gmra.mrb[0].mxu0 %v5216
    %v5339 = vpop.f32.mrb[0].mxu0
    %v5340 = vadd.f32 0.0, %v5339
    %v5341 = vpop.f32.mrb[0].mxu0
    %v5342 = vpop.f32.mrb[0].mxu0
    %v5343 = vadd.f32 0.0, %v5342
    %v5344 = vpop.f32.mrb[0].mxu0
    %5345 = vmatprep.mubr.bf16.mxu0 0
    %5346 = vmatmul.mubr.bf16.gmra.mrb[0].mxu0 %v5217
    %v5347 = vpop.f32.mrb[0].mxu0
    %v5348 = vadd.f32 0.0, %v5347
    %v5349 = vpop.f32.mrb[0].mxu0
    %v5350 = vpop.f32.mrb[0].mxu0
    %v5351 = vadd.f32 0.0, %v5350
    %v5352 = vpop.f32.mrb[0].mxu0
    %5353 = vmatprep.mubr.bf16.mxu0 0
    %5354 = vmatmul.mubr.bf16.gmra.mrb[0].mxu0 %v5218
    %v5355 = vpop.f32.mrb[0].mxu0
    %v5356 = vadd.f32 0.0, %v5355
    %v5357 = vpop.f32.mrb[0].mxu0
    %v5358 = vpop.f32.mrb[0].mxu0
    %v5359 = vadd.f32 0.0, %v5358
    %v5360 = vpop.f32.mrb[0].mxu0
    %5361 = vmatprep.mubr.bf16.mxu0 0
    %5362 = vmatmul.mubr.bf16.gmra.mrb[0].mxu0 %v5219
    %v5363 = vpop.f32.mrb[0].mxu0
    %v5364 = vadd.f32 0.0, %v5363
    %v5365 = vpop.f32.mrb[0].mxu0
    %v5366 = vpop.f32.mrb[0].mxu0
    %v5367 = vadd.f32 0.0, %v5366
    %v5368 = vpop.f32.mrb[0].mxu0
    %5369 = vmatprep.mubr.bf16.mxu0 0
    %5370 = vmatmul.mubr.bf16.gmra.mrb[0].mxu0 %v5220
    %v5371 = vpop.f32.mrb[0].mxu0
    %v5372 = vadd.f32 0.0, %v5371
    %v5373 = vpop.f32.mrb[0].mxu0
    %v5374 = vpop.f32.mrb[0].mxu0
    %v5375 = vadd.f32 0.0, %v5374
    %v5376 = vpop.f32.mrb[0].mxu0
    %5377 = vmatprep.mubr.bf16.mxu0 0
    %5378 = vmatmul.mubr.bf16.gmra.mrb[0].mxu0 %v5221
    %v5379 = vpop.f32.mrb[0].mxu0
    %v5380 = vadd.f32 0.0, %v5379
    %v5381 = vpop.f32.mrb[0].mxu0
    %v5382 = vpop.f32.mrb[0].mxu0
    %v5383 = vadd.f32 0.0, %v5382
    %v5384 = vpop.f32.mrb[0].mxu0
    %5385 = vmatprep.mubr.bf16.mxu0 0
    %5386 = vmatmul.mubr.bf16.gmra.mrb[0].mxu0 %v5222
    %v5387 = vpop.f32.mrb[0].mxu0
    %v5388 = vadd.f32 0.0, %v5387
    %v5389 = vpop.f32.mrb[0].mxu0
    %v5390 = vpop.f32.mrb[0].mxu0
    %v5391 = vadd.f32 0.0, %v5390
    %v5392 = vpop.f32.mrb[0].mxu0
    %5393 = vmatprep.mubr.bf16.mxu0 0
    %5394 = vmatmul.mubr.bf16.gmra.mrb[0].mxu0 %v5223
    %v5395 = vpop.f32.mrb[0].mxu0
    %v5396 = vadd.f32 0.0, %v5395
    %v5397 = vpop.f32.mrb[0].mxu0
    %v5398 = vpop.f32.mrb[0].mxu0
    %v5399 = vadd.f32 0.0, %v5398
    %v5400 = vpop.f32.mrb[0].mxu0
    %5401 = vmatprep.mubr.bf16.mxu0 0
    %5402 = vmatmul.mubr.bf16.gmra.mrb[0].mxu0 %v5224
    %v5403 = vpop.f32.mrb[0].mxu0
    %v5404 = vadd.f32 0.0, %v5403
    %v5405 = vpop.f32.mrb[0].mxu0
    %v5406 = vpop.f32.mrb[0].mxu0
    %v5407 = vadd.f32 0.0, %v5406
    %v5408 = vpop.f32.mrb[0].mxu0
    %5409 = vmatprep.mubr.bf16.mxu0 0
    %5410 = vmatmul.mubr.bf16.gmra.mrb[0].mxu0 %v5225
    %v5411 = vpop.f32.mrb[0].mxu0
    %v5412 = vadd.f32 0.0, %v5411
    %v5413 = vpop.f32.mrb[0].mxu0
    %v5414 = vpop.f32.mrb[0].mxu0
    %v5415 = vadd.f32 0.0, %v5414
    %v5416 = vpop.f32.mrb[0].mxu0
    %5417 = vmatprep.mubr.bf16.mxu0 0
    %5418 = vmatmul.mubr.bf16.gmra.mrb[0].mxu0 %v5226
    %v5419 = vpop.f32.mrb[0].mxu0
    %v5420 = vadd.f32 0.0, %v5419
    %v5421 = vpop.f32.mrb[0].mxu0
    %v5422 = vpop.f32.mrb[0].mxu0
    %v5423 = vadd.f32 0.0, %v5422
    %v5424 = vpop.f32.mrb[0].mxu0
    %5425 = vmatprep.mubr.bf16.mxu0 0
    %5426 = vmatmul.mubr.bf16.gmra.mrb[0].mxu0 %v5227
    %v5427 = vpop.f32.mrb[0].mxu0
    %v5428 = vadd.f32 0.0, %v5427
    %v5429 = vpop.f32.mrb[0].mxu0
    %v5430 = vpop.f32.mrb[0].mxu0
    %v5431 = vadd.f32 0.0, %v5430
    %v5432 = vpop.f32.mrb[0].mxu0
    %5433 = vmatprep.mubr.bf16.mxu0 0
    %5434 = vmatmul.mubr.bf16.gmra.mrb[0].mxu0 %v5228
    %v5435 = vpop.f32.mrb[0].mxu0
    %v5436 = vadd.f32 0.0, %v5435
    %v5437 = vpop.f32.mrb[0].mxu0
    %v5438 = vpop.f32.mrb[0].mxu0
    %v5439 = vadd.f32 0.0, %v5438
    %v5440 = vpop.f32.mrb[0].mxu0
    %5441 = vmatprep.mubr.bf16.mxu0 0
    %5442 = vmatmul.mubr.bf16.gmra.mrb[0].mxu0 %v5229
    %v5443 = vpop.f32.mrb[0].mxu0
    %v5444 = vadd.f32 0.0, %v5443
    %v5445 = vpop.f32.mrb[0].mxu0
    %v5446 = vpop.f32.mrb[0].mxu0
    %v5447 = vadd.f32 0.0, %v5446
    %v5448 = vpop.f32.mrb[0].mxu0
    %5449 = vmatprep.mubr.bf16.mxu0 0
    %5450 = vmatmul.mubr.bf16.gmra.mrb[0].mxu0 %v5230
    %v5451 = vpop.f32.mrb[0].mxu0
    %v5452 = vadd.f32 0.0, %v5451
    %v5453 = vpop.f32.mrb[0].mxu0
    %v5454 = vpop.f32.mrb[0].mxu0
    %v5455 = vadd.f32 0.0, %v5454
    %v5456 = vpop.f32.mrb[0].mxu0
    %5457 = vmatprep.mubr.bf16.mxu0 0
    %5458 = vmatmul.mubr.bf16.gmra.mrb[0].mxu0 %v5231
    %v5459 = vpop.f32.mrb[0].mxu0
    %v5460 = vadd.f32 0.0, %v5459
    %v5461 = vpop.f32.mrb[0].mxu0
    %v5462 = vpop.f32.mrb[0].mxu0
    %v5463 = vadd.f32 0.0, %v5462
    %v5464 = vpop.f32.mrb[0].mxu0
    %5465 = vmatprep.mubr.bf16.mxu0 0
    %5466 = vmatmul.mubr.bf16.gmra.mrb[0].mxu0 %v5232
    %v5467 = vpop.f32.mrb[0].mxu0
    %v5468 = vadd.f32 0.0, %v5467
    %v5469 = vpop.f32.mrb[0].mxu0
    %v5470 = vpop.f32.mrb[0].mxu0
    %v5471 = vadd.f32 0.0, %v5470
    %v5472 = vpop.f32.mrb[0].mxu0
    %5473 = vmatprep.mubr.bf16.mxu0 0
    %5474 = vmatmul.mubr.bf16.gmra.mrb[0].mxu0 %v5233
    %v5475 = vpop.f32.mrb[0].mxu0
    %v5476 = vadd.f32 0.0, %v5475
    %v5477 = vpop.f32.mrb[0].mxu0
    %v5478 = vpop.f32.mrb[0].mxu0
    %v5479 = vadd.f32 0.0, %v5478
    %v5480 = vpop.f32.mrb[0].mxu0
    %5481 = vmatprep.mubr.bf16.mxu0 0
    %5482 = vmatmul.mubr.bf16.gmra.mrb[0].mxu0 %v5234
    %v5483 = vpop.f32.mrb[0].mxu0
    %v5484 = vadd.f32 0.0, %v5483
    %v5485 = vpop.f32.mrb[0].mxu0
    %v5486 = vpop.f32.mrb[0].mxu0
    %v5487 = vadd.f32 0.0, %v5486
    %v5488 = vpop.f32.mrb[0].mxu0
    %5489 = vmatprep.mubr.bf16.mxu0 0
    %5490 = vmatmul.mubr.bf16.gmra.mrb[0].mxu0 %v5235
    %v5491 = vpop.f32.mrb[0].mxu0
    %v5492 = vadd.f32 0.0, %v5491
    %v5493 = vpop.f32.mrb[0].mxu0
    %v5494 = vpop.f32.mrb[0].mxu0
    %v5495 = vadd.f32 0.0, %v5494
    %v5496 = vpop.f32.mrb[0].mxu0
    %5497 = vmatprep.mubr.bf16.mxu0 0
    %5498 = vmatmul.mubr.bf16.gmra.mrb[0].mxu0 %v5236
    %v5499 = vpop.f32.mrb[0].mxu0
    %v5500 = vadd.f32 0.0, %v5499
    %v5501 = vpop.f32.mrb[0].mxu0
    %v5502 = vpop.f32.mrb[0].mxu0
    %v5503 = vadd.f32 0.0, %v5502
    %v5504 = vpop.f32.mrb[0].mxu0
    %5505 = vmatprep.mubr.bf16.mxu0 0
    %5506 = vmatmul.mubr.bf16.gmra.mrb[0].mxu0 %v5237
    %v5507 = vpop.f32.mrb[0].mxu0
    %v5508 = vadd.f32 0.0, %v5507
    %v5509 = vpop.f32.mrb[0].mxu0
    %v5510 = vpop.f32.mrb[0].mxu0
    %v5511 = vadd.f32 0.0, %v5510
    %v5512 = vpop.f32.mrb[0].mxu0
    %5513 = vmatprep.mubr.bf16.mxu0 0
    %5514 = vmatmul.mubr.bf16.gmra.mrb[0].mxu0 %v5238
    %v5515 = vpop.f32.mrb[0].mxu0
    %v5516 = vadd.f32 0.0, %v5515
    %v5517 = vpop.f32.mrb[0].mxu0
    %v5518 = vpop.f32.mrb[0].mxu0
    %v5519 = vadd.f32 0.0, %v5518
    %v5520 = vpop.f32.mrb[0].mxu0
    %5521 = vmatprep.mubr.bf16.mxu0 0
    %5522 = vmatmul.mubr.bf16.gmra.mrb[0].mxu0 %v5239
    %v5523 = vpop.f32.mrb[0].mxu0
    %v5524 = vadd.f32 0.0, %v5523
    %v5525 = vpop.f32.mrb[0].mxu0
    %v5526 = vpop.f32.mrb[0].mxu0
    %v5527 = vadd.f32 0.0, %v5526
    %v5528 = vpop.f32.mrb[0].mxu0
    %5529 = vmatprep.mubr.bf16.mxu0 0
    %5530 = vmatmul.mubr.bf16.gmra.mrb[0].mxu0 %v5240
    %v5531 = vpop.f32.mrb[0].mxu0
    %v5532 = vadd.f32 0.0, %v5531
    %v5533 = vpop.f32.mrb[0].mxu0
    %v5534 = vpop.f32.mrb[0].mxu0
    %v5535 = vpop.f32.mrb[0].mxu0
    %5536 = vdwg.mxu0
    %v5537 = vadd.f32 %v4971, %v5340
    %v5538 = vadd.f32 %v4972, %v5343
    %v5539 = vadd.f32 %v4973, %v5348
    %v5540 = vadd.f32 %v4974, %v5351
    %v5541 = vadd.f32 %v4975, %v5356
    %v5542 = vadd.f32 %v4976, %v5359
    %v5543 = vadd.f32 %v4977, %v5364
    %v5544 = vadd.f32 %v4978, %v5367
    %v5545 = vadd.f32 %v4979, %v5372
    %v5546 = vadd.f32 %v4980, %v5375
    %v5547 = vadd.f32 %v4981, %v5380
    %v5548 = vadd.f32 %v4982, %v5383
    %v5549 = vadd.f32 %v4983, %v5388
    %v5550 = vadd.f32 %v4984, %v5391
    %v5551 = vadd.f32 %v4985, %v5396
    %v5552 = vadd.f32 %v4986, %v5399
    %v5553 = vadd.f32 %v4987, %v5404
    %v5554 = vadd.f32 %v4988, %v5407
    %v5555 = vadd.f32 %v4989, %v5412
    %v5556 = vadd.f32 %v4990, %v5415
    %v5557 = vadd.f32 %v4991, %v5420
    %v5558 = vadd.f32 %v4992, %v5423
    %v5559 = vadd.f32 %v4993, %v5428
    %v5560 = vadd.f32 %v4994, %v5431
    %v5561 = vadd.f32 %v4995, %v5436
    %v5562 = vadd.f32 %v4996, %v5439
    %v5563 = vadd.f32 %v4997, %v5444
    %v5564 = vadd.f32 %v4998, %v5447
    %v5565 = vadd.f32 %v4999, %v5452
    %v5566 = vadd.f32 %v5000, %v5455
    %v5567 = vadd.f32 %v5001, %v5460
    %v5568 = vadd.f32 %v5002, %v5463
    %v5569 = vadd.f32 %v5003, %v5468
    %v5570 = vadd.f32 %v5004, %v5471
    %v5571 = vadd.f32 %v5005, %v5476
    %v5572 = vadd.f32 %v5006, %v5479
    %v5573 = vadd.f32 %v5007, %v5484
    %v5574 = vadd.f32 %v5008, %v5487
    %v5575 = vadd.f32 %v5009, %v5492
    %v5576 = vadd.f32 %v5010, %v5495
    %v5577 = vadd.f32 %v5011, %v5500
    %v5578 = vadd.f32 %v5012, %v5503
    %v5579 = vadd.f32 %v5013, %v5508
    %v5580 = vadd.f32 %v5014, %v5511
    %v5581 = vadd.f32 %v5015, %v5516
    %v5582 = vadd.f32 %v5016, %v5519
    %v5583 = vadd.f32 %v5017, %v5524
    %v5584 = vadd.f32 %v5018, %v5527
    %v5585 = vadd.f32 %v5019, %v5532
    %v5586 = vld [vmem:[#allocation7] sm:$0x1]
    %v5588 = vlaneseq
    %v5589 = vshrl.u32 %v5588, 7
    %v5590 = vsub.s32 0, %v5589
    %v5591 = vrot.slane %v5586, %v5590
    %v5593 = vadd.f32 %v5537, %v5591
    %v5594 = vadd.f32 %v5538, %v5591
    %v5595 = vadd.f32 %v5539, %v5591
    %v5596 = vadd.f32 %v5540, %v5591
    %v5597 = vadd.f32 %v5541, %v5591
    %v5598 = vadd.f32 %v5542, %v5591
    %v5599 = vadd.f32 %v5543, %v5591
    %v5600 = vadd.f32 %v5544, %v5591
    %v5601 = vadd.f32 %v5545, %v5591
    %v5602 = vadd.f32 %v5546, %v5591
    %v5603 = vadd.f32 %v5547, %v5591
    %v5604 = vadd.f32 %v5548, %v5591
    %v5605 = vadd.f32 %v5549, %v5591
    %v5606 = vadd.f32 %v5550, %v5591
    %v5607 = vadd.f32 %v5551, %v5591
    %v5608 = vadd.f32 %v5552, %v5591
    %v5609 = vadd.f32 %v5553, %v5591
    %v5610 = vadd.f32 %v5554, %v5591
    %v5611 = vadd.f32 %v5555, %v5591
    %v5612 = vadd.f32 %v5556, %v5591
    %v5613 = vadd.f32 %v5557, %v5591
    %v5614 = vadd.f32 %v5558, %v5591
    %v5615 = vadd.f32 %v5559, %v5591
    %v5616 = vadd.f32 %v5560, %v5591
    %v5617 = vadd.f32 %v5561, %v5591
    %v5618 = vadd.f32 %v5562, %v5591
    %v5619 = vadd.f32 %v5563, %v5591
    %v5620 = vadd.f32 %v5564, %v5591
    %v5621 = vadd.f32 %v5565, %v5591
    %v5622 = vadd.f32 %v5566, %v5591
    %v5623 = vadd.f32 %v5567, %v5591
    %v5624 = vadd.f32 %v5568, %v5591
    %v5625 = vadd.f32 %v5569, %v5591
    %v5626 = vadd.f32 %v5570, %v5591
    %v5627 = vadd.f32 %v5571, %v5591
    %v5628 = vadd.f32 %v5572, %v5591
    %v5629 = vadd.f32 %v5573, %v5591
    %v5630 = vadd.f32 %v5574, %v5591
    %v5631 = vadd.f32 %v5575, %v5591
    %v5632 = vadd.f32 %v5576, %v5591
    %v5633 = vadd.f32 %v5577, %v5591
    %v5634 = vadd.f32 %v5578, %v5591
    %v5635 = vadd.f32 %v5579, %v5591
    %v5636 = vadd.f32 %v5580, %v5591
    %v5637 = vadd.f32 %v5581, %v5591
    %v5638 = vadd.f32 %v5582, %v5591
    %v5639 = vadd.f32 %v5583, %v5591
    %v5640 = vadd.f32 %v5584, %v5591
    %v5641 = vadd.f32 %v5585, %v5591
    %5642 = vst [vmem:[#allocation8] sm:$0xff] %v5593
    %5643 = vst [vmem:[#allocation8 + $0x8] sm:$0xff] %v5594
    %5644 = vst [vmem:[#allocation8 + $0x10] sm:$0xff] %v5595
    %5645 = vst [vmem:[#allocation8 + $0x18] sm:$0xff] %v5596
    %5646 = vst [vmem:[#allocation8 + $0x20] sm:$0xff] %v5597
    %5647 = vst [vmem:[#allocation8 + $0x28] sm:$0xff] %v5598
    %5648 = vst [vmem:[#allocation8 + $0x30] sm:$0xff] %v5599
    %5649 = vst [vmem:[#allocation8 + $0x38] sm:$0xff] %v5600
    %5650 = vst [vmem:[#allocation8 + $0x40] sm:$0xff] %v5601
    %5651 = vst [vmem:[#allocation8 + $0x48] sm:$0xff] %v5602
    %5652 = vst [vmem:[#allocation8 + $0x50] sm:$0xff] %v5603
    %5653 = vst [vmem:[#allocation8 + $0x58] sm:$0xff] %v5604
    %5654 = vst [vmem:[#allocation8 + $0x60] sm:$0xff] %v5605
    %5655 = vst [vmem:[#allocation8 + $0x68] sm:$0xff] %v5606
    %5656 = vst [vmem:[#allocation8 + $0x70] sm:$0xff] %v5607
    %5657 = vst [vmem:[#allocation8 + $0x78] sm:$0xff] %v5608
    %5658 = vst [vmem:[#allocation8 + $0x80] sm:$0xff] %v5609
    %5659 = vst [vmem:[#allocation8 + $0x88] sm:$0xff] %v5610
    %5660 = vst [vmem:[#allocation8 + $0x90] sm:$0xff] %v5611
    %5661 = vst [vmem:[#allocation8 + $0x98] sm:$0xff] %v5612
    %5662 = vst [vmem:[#allocation8 + $0xa0] sm:$0xff] %v5613
    %5663 = vst [vmem:[#allocation8 + $0xa8] sm:$0xff] %v5614
    %5664 = vst [vmem:[#allocation8 + $0xb0] sm:$0xff] %v5615
    %5665 = vst [vmem:[#allocation8 + $0xb8] sm:$0xff] %v5616
    %5666 = vst [vmem:[#allocation8 + $0xc0] sm:$0xff] %v5617
    %5667 = vst [vmem:[#allocation8 + $0xc8] sm:$0xff] %v5618
    %5668 = vst [vmem:[#allocation8 + $0xd0] sm:$0xff] %v5619
    %5669 = vst [vmem:[#allocation8 + $0xd8] sm:$0xff] %v5620
    %5670 = vst [vmem:[#allocation8 + $0xe0] sm:$0xff] %v5621
    %5671 = vst [vmem:[#allocation8 + $0xe8] sm:$0xff] %v5622
    %5672 = vst [vmem:[#allocation8 + $0xf0] sm:$0xff] %v5623
    %5673 = vst [vmem:[#allocation8 + $0xf8] sm:$0xff] %v5624
    %5674 = vst [vmem:[#allocation8 + $0x100] sm:$0xff] %v5625
    %5675 = vst [vmem:[#allocation8 + $0x108] sm:$0xff] %v5626
    %5676 = vst [vmem:[#allocation8 + $0x110] sm:$0xff] %v5627
    %5677 = vst [vmem:[#allocation8 + $0x118] sm:$0xff] %v5628
    %5678 = vst [vmem:[#allocation8 + $0x120] sm:$0xff] %v5629
    %5679 = vst [vmem:[#allocation8 + $0x128] sm:$0xff] %v5630
    %5680 = vst [vmem:[#allocation8 + $0x130] sm:$0xff] %v5631
    %5681 = vst [vmem:[#allocation8 + $0x138] sm:$0xff] %v5632
    %5682 = vst [vmem:[#allocation8 + $0x140] sm:$0xff] %v5633
    %5683 = vst [vmem:[#allocation8 + $0x148] sm:$0xff] %v5634
    %5684 = vst [vmem:[#allocation8 + $0x150] sm:$0xff] %v5635
    %5685 = vst [vmem:[#allocation8 + $0x158] sm:$0xff] %v5636
    %5686 = vst [vmem:[#allocation8 + $0x160] sm:$0xff] %v5637
    %5687 = vst [vmem:[#allocation8 + $0x168] sm:$0xff] %v5638
    %5688 = vst [vmem:[#allocation8 + $0x170] sm:$0xff] %v5639
    %5689 = vst [vmem:[#allocation8 + $0x178] sm:$0xff] %v5640
    %5690 = vst [vmem:[#allocation8 + $0x180] sm:$0xff] %v5641
    // Predicated region
    $region26: #{kan_conv2d.1} parent=1 // pred_check
      _
    $region27: #{kan_conv2d.1} parent=1 // pred_check_branch
      %5692 = sbr.rel (0) target = $region29
    $region28: #{kan_conv2d.1} parent=1 // pred_region
      %s5694 = ssub.s32 6272, 6272
      %5695 = vsyncadd [#allocation4], %s5694
      %s5696 = sshll.u32 [#allocation8], 4
      %s5697 = int_to_ptr.vmem [resolvable:$true] %s5696
      %5702 = dma.vmem_to_hbm [thread:$0]  %s5697, 6272, %s3, [#allocation4], 128, 128, 8
    $region29: #{kan_conv2d.1} parent=1 // pred_fallthru
      _
    // Predicated region
    $region30: #{kan_conv2d.1} parent=1 // pred_check
      _
    $region31: #{kan_conv2d.1} parent=1 // pred_check_branch
      %5704 = sbr.rel (0) target = $region33
    $region32: #{kan_conv2d.1} parent=1 // pred_region
      %5705 = dma.done [#allocation4], 6272
    $region33: #{kan_conv2d.1} parent=1 // pred_fallthru
      _
    %5706 = vsyncpa [#allocation3], 1
    %5707 = vsyncpa [#allocation6], 1
    %5708 = vsyncpa [#allocation4], 1

</llo_original>
